<compile_context>
chip_gen: v5e
topology: v5e:2x2
jax: 0.10.0
libtpu: 0.0.40
codegen_flags: <defaults>
</compile_context>

<pallas_src>
import jax
import jax.numpy as jnp
from jax.experimental import pallas as pl
from jax.experimental.pallas import tpu as pltpu

EPS = 1e-6                       # LayerNorm2d eps (NAFNet default)
_TCOL_TARGET = 2048              # pixel-axis tile (lane axis); sweep 512-2048 per chip gen
_VMEM_LIMIT = 64 * 1024 * 1024   # explicit scoped-VMEM cap (blocks here are far smaller)


# ----------------------------- helpers --------------------------------------

def _choose_tcol(m, target=_TCOL_TARGET):
    """Pixel-axis tile: full extent if small, else a multiple of 128 (lane-dense)."""
    if m <= target:
        return m
    return max((target // 128) * 128, 128)


def _const_spec(shape):
    """BlockSpec for a small parameter that is identical for every grid step."""
    n = len(shape)
    return pl.BlockSpec(shape, lambda *_, n=n: (0,) * n)


def _cparams():
    return pltpu.CompilerParams(
        dimension_semantics=("parallel", "parallel"),
        vmem_limit_bytes=_VMEM_LIMIT)


# ----------------------------- Pallas kernels --------------------------------

def _ln_conv_kernel(x_ref, gw_ref, gb_ref, w_ref, b_ref, o_ref):
    """Per-pixel LayerNorm over channels + affine, then 1x1 conv (channel-major)."""
    x = x_ref[0].astype(jnp.float32)                     # (C, tcol)
    mu = jnp.mean(x, axis=0, keepdims=True)
    xc = x - mu
    var = jnp.mean(xc * xc, axis=0, keepdims=True)
    y = xc * jax.lax.rsqrt(var + EPS)
    y = y * gw_ref[...].astype(jnp.float32) + gb_ref[...].astype(jnp.float32)
    o_ref[0] = (jnp.dot(w_ref[...].astype(jnp.float32), y,
                        preferred_element_type=jnp.float32)
                + b_ref[...].astype(jnp.float32)).astype(o_ref.dtype)


def _sfb_conv_kernel(re_ref, im_ref, w_ref, b_ref, ore_ref, oim_ref):
    """Fourier-domain 1x1 conv. Weight is pre-permuted to [real(0..C-1), imag(0..C-1)]."""
    c = re_ref.shape[1]
    re = re_ref[0].astype(jnp.float32)                   # (C, tcol)
    im = im_ref[0].astype(jnp.float32)
    w = w_ref[...].astype(jnp.float32)                   # (2C, 2C), concat order
    out = (jnp.dot(w[:, :c], re, preferred_element_type=jnp.float32)
           + jnp.dot(w[:, c:], im, preferred_element_type=jnp.float32)
           + b_ref[...].astype(jnp.float32))             # (2C, tcol)
    ore_ref[0] = out[:c].astype(ore_ref.dtype)
    oim_ref[0] = out[c:].astype(oim_ref.dtype)


def _tail_kernel(g_ref, s_ref, r_ref, w3_ref, b3_ref, beta_ref,
                 ln2w_ref, ln2b_ref, w4_ref, b4_ref, w5_ref, b5_ref, gamma_ref,
                 o_ref):
    """Fused tail: (g+sfb) -> conv3*beta+inp -> norm2 -> conv4 -> SG -> conv5*gamma + y."""
    f32 = jnp.float32
    xt = g_ref[0].astype(f32) + s_ref[0].astype(f32)     # (C, tcol)
    y = r_ref[0].astype(f32) + (
        jnp.dot(w3_ref[...].astype(f32), xt, preferred_element_type=f32)
        + b3_ref[...].astype(f32)) * beta_ref[...].astype(f32)
    mu = jnp.mean(y, axis=0, keepdims=True)
    yc = y - mu
    var = jnp.mean(yc * yc, axis=0, keepdims=True)
    yn = yc * jax.lax.rsqrt(var + EPS) * ln2w_ref[...].astype(f32) \
        + ln2b_ref[...].astype(f32)
    t4 = jnp.dot(w4_ref[...].astype(f32), yn, preferred_element_type=f32) \
        + b4_ref[...].astype(f32)                        # (2C, tcol)
    half = t4.shape[0] // 2
    gate = t4[:half] * t4[half:]                         # SimpleGate
    x5 = jnp.dot(w5_ref[...].astype(f32), gate, preferred_element_type=f32) \
        + b5_ref[...].astype(f32)
    o_ref[0] = (y + x5 * gamma_ref[...].astype(f32)).astype(o_ref.dtype)


def _dwconv3x3_gate_kernel(x_ref, top_ref, bot_ref, w_ref, b_ref, o_ref):
    """3x3 depthwise conv (pad=1) + SimpleGate, NCHW row tile with 1-row halos."""
    f32 = jnp.float32
    x = x_ref[0].astype(f32)                              # (2C, th, W)
    twoc, th, wd = x.shape
    top = top_ref[...].astype(f32).reshape(twoc, 1, wd)   # row above the tile (0 at border)
    bot = bot_ref[...].astype(f32).reshape(twoc, 1, wd)   # row below the tile (0 at border)
    xh = jnp.concatenate([top, x, bot], axis=1)           # (2C, th+2, W)
    zcol = jnp.zeros((twoc, th + 2, 1), f32)
    xp = jnp.concatenate([zcol, xh, zcol], axis=2)        # (2C, th+2, W+2)
    wgt = w_ref[...].astype(f32)                          # (3, 3, 2C, 1, 1)
    acc = jnp.zeros((twoc, th, wd), f32)
    for dy in range(3):
        for dx in range(3):
            acc = acc + xp[:, dy:dy + th, dx:dx + wd] * wgt[dy, dx]
    acc = acc + b_ref[...].astype(f32)                    # (2C, 1, 1) broadcast
    c = twoc // 2
    o_ref[0] = (acc[:c] * acc[c:]).astype(o_ref.dtype)    # SimpleGate


# ----------------------------- pallas_call wrappers --------------------------

def ln_conv1x1_cm(x, ln_w, ln_b, w, b):
    """x: (B, Ci, M) channel-major; returns (B, Co, M)."""
    B, Ci, M = x.shape
    Co = w.shape[0]
    tcol = _choose_tcol(M)
    ncol = pl.cdiv(M, tcol)
    dspec_in = pl.BlockSpec((1, Ci, tcol), lambda bi, i: (bi, 0, i))
    dspec_out = pl.BlockSpec((1, Co, tcol), lambda bi, i: (bi, 0, i))
    return pl.pallas_call(
        _ln_conv_kernel,
        out_shape=jax.ShapeDtypeStruct((B, Co, M), x.dtype),
        grid=(B, ncol),
        in_specs=[dspec_in,
                  _const_spec((Ci, 1)), _const_spec((Ci, 1)),
                  _const_spec((Co, Ci)), _const_spec((Co, 1))],
        out_specs=dspec_out,
        compiler_params=_cparams(),
    )(x, ln_w, ln_b, w, b)


def sfb_conv1x1(re, im, w, b):
    """re/im: (B, C, Mf); w: (2C, 2C) in [real|imag] concat order; returns (re, im)."""
    B, C, M = re.shape
    tcol = _choose_tcol(M)
    ncol = pl.cdiv(M, tcol)
    dspec = pl.BlockSpec((1, C, tcol), lambda bi, i: (bi, 0, i))
    return pl.pallas_call(
        _sfb_conv_kernel,
        out_shape=(jax.ShapeDtypeStruct((B, C, M), re.dtype),
                   jax.ShapeDtypeStruct((B, C, M), re.dtype)),
        grid=(B, ncol),
        in_specs=[dspec, dspec,
                  _const_spec((2 * C, 2 * C)), _const_spec((2 * C, 1))],
        out_specs=(dspec, dspec),
        compiler_params=_cparams(),
    )(re, im, w, b)


def tail_fused(g, sfb, res, w3, b3, beta, ln2w, ln2b, w4, b4, w5, b5, gamma):
    """Fused residual tail over (B, C, M) channel-major activations."""
    B, C, M = g.shape
    Ce = w4.shape[0]
    tcol = _choose_tcol(M)
    ncol = pl.cdiv(M, tcol)
    dspec = pl.BlockSpec((1, C, tcol), lambda bi, i: (bi, 0, i))
    return pl.pallas_call(
        _tail_kernel,
        out_shape=jax.ShapeDtypeStruct((B, C, M), g.dtype),
        grid=(B, ncol),
        in_specs=[dspec, dspec, dspec,
                  _const_spec((C, C)), _const_spec((C, 1)), _const_spec((C, 1)),
                  _const_spec((C, 1)), _const_spec((C, 1)),
                  _const_spec((Ce, C)), _const_spec((Ce, 1)),
                  _const_spec((C, C)), _const_spec((C, 1)), _const_spec((C, 1))],
        out_specs=dspec,
        compiler_params=_cparams(),
    )(g, sfb, res, w3, b3, beta, ln2w, ln2b, w4, b4, w5, b5, gamma)


def dwconv3x3_gate(t4d, w, b):
    """3x3 depthwise conv (pad=1) + SimpleGate on NCHW, row-tiled with 1-row halos."""
    B, twoc, H, W = t4d.shape
    C = twoc // 2
    th = H
    for cand in (32, 16, 8):                       # largest row tile that divides H
        if H % cand == 0 and H // cand >= 2:       # and leaves >= 2 tiles for pipelining
            th = cand
            break
    nh = H // th

    # 1-row halos per tile (zeros at image borders) - tiny vs. a full padded copy.
    zrow = jnp.zeros((B, twoc, 1, W), t4d.dtype)
    if nh > 1:
        tops = t4d[:, :, th - 1:H - 1:th, :]       # row above tiles 1..nh-1
        bots = t4d[:, :, th:H:th, :]               # row below tiles 0..nh-2
        top_halo = jnp.concatenate([zrow, tops], axis=2)
        bot_halo = jnp.concatenate([bots, zrow], axis=2)
    else:
        top_halo, bot_halo = zrow, zrow
    # (B, nh, 2C, 1, W): trailing (1, W) so the kernel gets a (2C, 1, W) value directly.
    top_halo = jnp.transpose(top_halo, (0, 2, 1, 3)).reshape(B, nh, twoc, 1, W)
    bot_halo = jnp.transpose(bot_halo, (0, 2, 1, 3)).reshape(B, nh, twoc, 1, W)
    w5d = jnp.transpose(w, (1, 2, 0)).reshape(3, 3, twoc, 1, 1)

    return pl.pallas_call(
        _dwconv3x3_gate_kernel,
        out_shape=jax.ShapeDtypeStruct((B, C, H, W), t4d.dtype),
        grid=(B, nh),
        in_specs=[
            pl.BlockSpec((1, twoc, th, W), lambda bi, i: (bi, 0, i, 0)),
            pl.BlockSpec((1, 1, twoc, 1, W), lambda bi, i: (bi, i, 0, 0, 0)),
            pl.BlockSpec((1, 1, twoc, 1, W), lambda bi, i: (bi, i, 0, 0, 0)),
            _const_spec((3, 3, twoc, 1, 1)),
            _const_spec((twoc, 1, 1)),
        ],
        out_specs=pl.BlockSpec((1, C, th, W), lambda bi, i: (bi, 0, i, 0)),
        compiler_params=_cparams(),
    )(t4d, top_halo, bot_halo, w5d, b)


# ----------------------------- AFFBlock forward -------------------------------

def aff_block(inp, p):
    """Forward pass of AFFBlock. inp: (B, C, H, W) NCHW (PyTorch convention)."""
    B, C, H, W = inp.shape
    HW = H * W
    x_flat = inp.reshape(B, C, HW)                          # free channel-major view

    # norm1 + conv1 (1x1, c -> 2c)
    t = ln_conv1x1_cm(x_flat, p['ln1_w'], p['ln1_b'], p['w1'], p['b1'])   # (B, 2C, HW)

    # conv2 (3x3 depthwise) + SimpleGate
    g = dwconv3x3_gate(t.reshape(B, 2 * C, H, W), p['w2'], p['b2'])       # (B, C, H, W)

    # SimplifiedFourierBlock.
    # TODO(synk): rfft2/irfft2 have no Pallas TPU primitive; they stay as XLA FFT.
    ff = jnp.fft.rfft2(g.astype(jnp.float32), axes=(-2, -1), norm='ortho')
    Wf = ff.shape[-1]
    # Fold the torch [c0_r, c0_i, c1_r, c1_i, ...] interleave into a weight
    # permutation so real/imag planes feed the Pallas matmul directly.
    idx = jnp.concatenate([jnp.arange(C) * 2, jnp.arange(C) * 2 + 1])
    sfb_w_cm = p['sfb_w'][idx][:, idx]
    sfb_b_cm = p['sfb_b'][idx]
    o_re, o_im = sfb_conv1x1(ff.real.reshape(B, C, H * Wf),
                             ff.imag.reshape(B, C, H * Wf),
                             sfb_w_cm, sfb_b_cm)
    cplx = jax.lax.complex(o_re.reshape(B, C, H, Wf), o_im.reshape(B, C, H, Wf))
    sfb_out = jnp.fft.irfft2(cplx, s=(H, W), axes=(-2, -1), norm='ortho')

    # Fused tail: (g + sfb) -> conv3*beta + inp -> norm2 -> conv4 -> SG -> conv5*gamma + y
    out_flat = tail_fused(g.reshape(B, C, HW),
                          sfb_out.astype(inp.dtype).reshape(B, C, HW),
                          x_flat,
                          p['w3'], p['b3'], p['beta'],
                          p['ln2_w'], p['ln2_b'], p['w4'], p['b4'],
                          p['w5'], p['b5'], p['gamma'])
    return out_flat.reshape(B, C, H, W)


# ----------------------------- pure-JAX reference ------------------------------

def aff_block_ref(inp, p):
    """Straightforward JAX mirror of the PyTorch module (for correctness check)."""
    B, C, H, W = inp.shape

    def ln(x, w, b):
        mu = jnp.mean(x, axis=1, keepdims=True)
        var = jnp.mean((x - mu) ** 2, axis=1, keepdims=True)
        return (x - mu) * jax.lax.rsqrt(var + EPS) * w.reshape(1, -1, 1, 1) \
            + b.reshape(1, -1, 1, 1)

    def conv1x1(x, w, b):
        return jnp.einsum('oc,bchw->bohw', w, x) + b.reshape(1, -1, 1, 1)

    def dwconv(x, w, b):
        xp = jnp.pad(x, ((0, 0), (0, 0), (1, 1), (1, 1)))
        acc = jnp.zeros_like(x)
        for dy in range(3):
            for dx in range(3):
                acc = acc + xp[:, :, dy:dy + H, dx:dx + W] * w[:, dy, dx].reshape(1, -1, 1, 1)
        return acc + b.reshape(1, -1, 1, 1)

    def sg(x):
        c = x.shape[1] // 2
        return x[:, :c] * x[:, c:]

    x = ln(inp, p['ln1_w'], p['ln1_b'])
    x = conv1x1(x, p['w1'], p['b1'])
    x = dwconv(x, p['w2'], p['b2'])
    x = sg(x)
    # SimplifiedFourierBlock
    ff = jnp.fft.rfft2(x, axes=(-2, -1), norm='ortho')
    Wf = ff.shape[-1]
    st = jnp.stack([ff.real, ff.imag], axis=2).reshape(B, 2 * C, H, Wf)
    st = jnp.einsum('oc,bchw->bohw', p['sfb_w'], st) + p['sfb_b'].reshape(1, -1, 1, 1)
    st = st.reshape(B, C, 2, H, Wf)
    sfb = jnp.fft.irfft2(jax.lax.complex(st[:, :, 0], st[:, :, 1]),
                         s=(H, W), axes=(-2, -1), norm='ortho')
    x = x + sfb
    x = conv1x1(x, p['w3'], p['b3'])
    y = inp + x * p['beta'].reshape(1, -1, 1, 1)
    x = conv1x1(ln(y, p['ln2_w'], p['ln2_b']), p['w4'], p['b4'])
    x = sg(x)
    x = conv1x1(x, p['w5'], p['b5'])
    return y + x * p['gamma'].reshape(1, -1, 1, 1)


# ----------------------------- parameter init ---------------------------------

def init_params(key, c):
    dw = 2 * c       # DW_Expand * c
    ffn = 2 * c      # FFN_Expand * c
    ks = jax.random.split(key, 14)

    def rnd(k, shape, scale=0.1):
        return jax.random.normal(k, shape, jnp.float32) * scale

    # NOTE: beta/gamma are zero-initialized in the PyTorch module; small non-zero
    # values are used here so the full compute path is exercised.
    return dict(
        ln1_w=jnp.ones((c, 1), jnp.float32), ln1_b=jnp.zeros((c, 1), jnp.float32),
        ln2_w=jnp.ones((c, 1), jnp.float32), ln2_b=jnp.zeros((c, 1), jnp.float32),
        w1=rnd(ks[0], (dw, c)),        b1=rnd(ks[1], (dw, 1)),
        w2=rnd(ks[2], (dw, 3, 3)),     b2=rnd(ks[3], (dw, 1, 1)),    # depthwise 3x3
        w3=rnd(ks[4], (c, dw // 2)),   b3=rnd(ks[5], (c, 1)),
        sfb_w=rnd(ks[6], (dw, dw)),    sfb_b=rnd(ks[7], (dw, 1)),    # torch interleaved order
        w4=rnd(ks[8], (ffn, c)),       b4=rnd(ks[9], (ffn, 1)),
        w5=rnd(ks[10], (c, ffn // 2)), b5=rnd(ks[11], (c, 1)),
        beta=rnd(ks[12], (c, 1)),      gamma=rnd(ks[13], (c, 1)),
    )


# ----------------------------------- main --------------------------------------

if __name__ == "__main__":
    key = jax.random.PRNGKey(0)
    kx, kp = jax.random.split(key)
    B, C, H, W = 2, 4, 16, 16
    inp = jax.random.normal(kx, (B, C, H, W), jnp.float32)
    params = init_params(kp, C)

    out = jax.jit(aff_block)(inp, params)
    out = jax.block_until_ready(out)
    assert out.shape == (B, C, H, W) and out.dtype == jnp.float32
    assert bool(jnp.all(jnp.isfinite(out)))

    ref = jax.block_until_ready(jax.jit(aff_block_ref)(inp, params))
    assert bool(jnp.allclose(out, ref, atol=1e-2, rtol=1e-2)), \
        float(jnp.max(jnp.abs(out - ref)))

    print("KERNEL_OK")
</pallas_src>

<mosaic_0001>
module attributes {stable_mosaic.version = 11 : i64} {
  func.func @_ln_conv_kernel(%arg0: i32, %arg1: i32, %arg2: memref<1x4x256xf32, #tpu.memory_space<vmem>>, %arg3: memref<4x1xf32, #tpu.memory_space<vmem>>, %arg4: memref<4x1xf32, #tpu.memory_space<vmem>>, %arg5: memref<8x4xf32, #tpu.memory_space<vmem>>, %arg6: memref<8x1xf32, #tpu.memory_space<vmem>>, %arg7: memref<1x8x256xf32, #tpu.memory_space<vmem>>) attributes {dimension_semantics = [#tpu.dimension_semantics<parallel>, #tpu.dimension_semantics<parallel>], iteration_bounds = array<i64: 2, 1>, scalar_prefetch = 0 : i64, scratch_operands = 0 : i64, tpu.core_type = #tpu.core_type<tc>, window_params = [{transform_indices = @transform_0, window_bounds = array<i64: 1, 4, 256>}, {pipeline_mode = #tpu.pipeline_mode<synchronous>, transform_indices = @transform_1, window_bounds = array<i64: 4, 1>}, {pipeline_mode = #tpu.pipeline_mode<synchronous>, transform_indices = @transform_2, window_bounds = array<i64: 4, 1>}, {pipeline_mode = #tpu.pipeline_mode<synchronous>, transform_indices = @transform_3, window_bounds = array<i64: 8, 4>}, {pipeline_mode = #tpu.pipeline_mode<synchronous>, transform_indices = @transform_4, window_bounds = array<i64: 8, 1>}, {transform_indices = @transform_5, window_bounds = array<i64: 1, 8, 256>}]} {
    %c0 = arith.constant 0 : index
    %c0_0 = arith.constant 0 : index
    %c0_1 = arith.constant 0 : index
    %0 = vector.load %arg2[%c0, %c0_0, %c0_1] : memref<1x4x256xf32, #tpu.memory_space<vmem>>, vector<1x4x256xf32>
    %1 = vector.shape_cast %0 : vector<1x4x256xf32> to vector<4x256xf32>
    %cst = arith.constant dense<0.000000e+00> : vector<256xf32>
    %2 = vector.multi_reduction <add>, %1, %cst [0] : vector<4x256xf32> to vector<256xf32>
    %3 = vector.shape_cast %2 : vector<256xf32> to vector<1x256xf32>
    %cst_2 = arith.constant 4.000000e+00 : f32
    %4 = vector.broadcast %cst_2 : f32 to vector<1x256xf32>
    %5 = arith.divf %3, %4 : vector<1x256xf32>
    %6 = vector.broadcast %5 : vector<1x256xf32> to vector<4x256xf32>
    %7 = arith.subf %1, %6 : vector<4x256xf32>
    %8 = arith.mulf %7, %7 : vector<4x256xf32>
    %cst_3 = arith.constant dense<0.000000e+00> : vector<256xf32>
    %9 = vector.multi_reduction <add>, %8, %cst_3 [0] : vector<4x256xf32> to vector<256xf32>
    %10 = vector.shape_cast %9 : vector<256xf32> to vector<1x256xf32>
    %cst_4 = arith.constant 4.000000e+00 : f32
    %11 = vector.broadcast %cst_4 : f32 to vector<1x256xf32>
    %12 = arith.divf %10, %11 : vector<1x256xf32>
    %cst_5 = arith.constant 9.99999997E-7 : f32
    %13 = vector.broadcast %cst_5 : f32 to vector<1x256xf32>
    %14 = arith.addf %12, %13 : vector<1x256xf32>
    %15 = math.rsqrt %14 : vector<1x256xf32>
    %16 = vector.broadcast %15 : vector<1x256xf32> to vector<4x256xf32>
    %17 = arith.mulf %7, %16 : vector<4x256xf32>
    %c0_6 = arith.constant 0 : index
    %c0_7 = arith.constant 0 : index
    %18 = vector.load %arg3[%c0_6, %c0_7] : memref<4x1xf32, #tpu.memory_space<vmem>>, vector<4x1xf32>
    %19 = vector.broadcast %18 : vector<4x1xf32> to vector<4x256xf32>
    %20 = arith.mulf %17, %19 : vector<4x256xf32>
    %c0_8 = arith.constant 0 : index
    %c0_9 = arith.constant 0 : index
    %21 = vector.load %arg4[%c0_8, %c0_9] : memref<4x1xf32, #tpu.memory_space<vmem>>, vector<4x1xf32>
    %22 = vector.broadcast %21 : vector<4x1xf32> to vector<4x256xf32>
    %23 = arith.addf %20, %22 : vector<4x256xf32>
    %c0_10 = arith.constant 0 : index
    %c0_11 = arith.constant 0 : index
    %24 = vector.load %arg5[%c0_10, %c0_11] : memref<8x4xf32, #tpu.memory_space<vmem>>, vector<8x4xf32>
    %cst_12 = arith.constant dense<0.000000e+00> : vector<8x256xf32>
    %25 = tpu.matmul %24, %23, %cst_12 {dimension_numbers = #tpu.dot_dimension_numbers<[1], [0], [0], [1], [0, 0, 1, 1], [], []>} : vector<8x4xf32>, vector<4x256xf32>, vector<8x256xf32> -> vector<8x256xf32>
    %c0_13 = arith.constant 0 : index
    %c0_14 = arith.constant 0 : index
    %26 = vector.load %arg6[%c0_13, %c0_14] : memref<8x1xf32, #tpu.memory_space<vmem>>, vector<8x1xf32>
    %27 = vector.broadcast %26 : vector<8x1xf32> to vector<8x256xf32>
    %28 = arith.addf %25, %27 : vector<8x256xf32>
    %c0_15 = arith.constant 0 : index
    %c0_16 = arith.constant 0 : index
    %c0_17 = arith.constant 0 : index
    %29 = vector.load %arg7[%c0_15, %c0_16, %c0_17] : memref<1x8x256xf32, #tpu.memory_space<vmem>>, vector<1x8x256xf32>
    %30 = vector.shape_cast %29 : vector<1x8x256xf32> to vector<8x256xf32>
    %31 = vector.shape_cast %28 : vector<8x256xf32> to vector<1x8x256xf32>
    tpu.vector_store %arg7[%c0_15, %c0_16, %c0_17], %31 {strides = array<i32>} : memref<1x8x256xf32, #tpu.memory_space<vmem>>, vector<1x8x256xf32>,
    return
  }
  func.func @transform_0(%arg0: i32, %arg1: i32) -> (i32, i32, i32) {
    %c0_i32 = arith.constant 0 : i32
    %c0_i32_0 = arith.constant 0 : i32
    return %arg0, %c0_i32, %arg1 : i32, i32, i32
  }
  func.func @transform_1(%arg0: i32, %arg1: i32) -> (i32, i32) {
    %c0_i32 = arith.constant 0 : i32
    %c0_i32_0 = arith.constant 0 : i32
    %c0_i32_1 = arith.constant 0 : i32
    return %c0_i32, %c0_i32_0 : i32, i32
  }
  func.func @transform_2(%arg0: i32, %arg1: i32) -> (i32, i32) {
    %c0_i32 = arith.constant 0 : i32
    %c0_i32_0 = arith.constant 0 : i32
    %c0_i32_1 = arith.constant 0 : i32
    return %c0_i32, %c0_i32_0 : i32, i32
  }
  func.func @transform_3(%arg0: i32, %arg1: i32) -> (i32, i32) {
    %c0_i32 = arith.constant 0 : i32
    %c0_i32_0 = arith.constant 0 : i32
    %c0_i32_1 = arith.constant 0 : i32
    return %c0_i32, %c0_i32_0 : i32, i32
  }
  func.func @transform_4(%arg0: i32, %arg1: i32) -> (i32, i32) {
    %c0_i32 = arith.constant 0 : i32
    %c0_i32_0 = arith.constant 0 : i32
    %c0_i32_1 = arith.constant 0 : i32
    return %c0_i32, %c0_i32_0 : i32, i32
  }
  func.func @transform_5(%arg0: i32, %arg1: i32) -> (i32, i32, i32) {
    %c0_i32 = arith.constant 0 : i32
    %c0_i32_0 = arith.constant 0 : i32
    return %arg0, %c0_i32, %arg1 : i32, i32, i32
  }
}

module attributes {stable_mosaic.version = 11 : i64} {
  func.func @_dwconv3x3_gate_kernel(%arg0: i32, %arg1: i32, %arg2: memref<1x8x8x16xf32, #tpu.memory_space<vmem>>, %arg3: memref<1x1x8x1x16xf32, #tpu.memory_space<vmem>>, %arg4: memref<1x1x8x1x16xf32, #tpu.memory_space<vmem>>, %arg5: memref<3x3x8x1x1xf32, #tpu.memory_space<vmem>>, %arg6: memref<8x1x1xf32, #tpu.memory_space<vmem>>, %arg7: memref<1x4x8x16xf32, #tpu.memory_space<vmem>>) attributes {dimension_semantics = [#tpu.dimension_semantics<parallel>, #tpu.dimension_semantics<parallel>], iteration_bounds = array<i64: 2, 2>, scalar_prefetch = 0 : i64, scratch_operands = 0 : i64, tpu.core_type = #tpu.core_type<tc>, window_params = [{transform_indices = @transform_0, window_bounds = array<i64: 1, 8, 8, 16>}, {transform_indices = @transform_1, window_bounds = array<i64: 1, 1, 8, 1, 16>}, {transform_indices = @transform_2, window_bounds = array<i64: 1, 1, 8, 1, 16>}, {pipeline_mode = #tpu.pipeline_mode<synchronous>, transform_indices = @transform_3, window_bounds = array<i64: 3, 3, 8, 1, 1>}, {pipeline_mode = #tpu.pipeline_mode<synchronous>, transform_indices = @transform_4, window_bounds = array<i64: 8, 1, 1>}, {transform_indices = @transform_5, window_bounds = array<i64: 1, 4, 8, 16>}]} {
    %c0 = arith.constant 0 : index
    %c0_0 = arith.constant 0 : index
    %c0_1 = arith.constant 0 : index
    %c0_2 = arith.constant 0 : index
    %0 = vector.load %arg2[%c0, %c0_0, %c0_1, %c0_2] : memref<1x8x8x16xf32, #tpu.memory_space<vmem>>, vector<1x8x8x16xf32>
    %1 = vector.shape_cast %0 : vector<1x8x8x16xf32> to vector<8x8x16xf32>
    %c0_3 = arith.constant 0 : index
    %c0_4 = arith.constant 0 : index
    %c0_5 = arith.constant 0 : index
    %c0_6 = arith.constant 0 : index
    %c0_7 = arith.constant 0 : index
    %2 = vector.load %arg3[%c0_3, %c0_4, %c0_5, %c0_6, %c0_7] : memref<1x1x8x1x16xf32, #tpu.memory_space<vmem>>, vector<1x1x8x1x16xf32>
    %3 = vector.shape_cast %2 : vector<1x1x8x1x16xf32> to vector<8x1x16xf32>
    %c0_8 = arith.constant 0 : index
    %c0_9 = arith.constant 0 : index
    %c0_10 = arith.constant 0 : index
    %c0_11 = arith.constant 0 : index
    %c0_12 = arith.constant 0 : index
    %4 = vector.load %arg4[%c0_8, %c0_9, %c0_10, %c0_11, %c0_12] : memref<1x1x8x1x16xf32, #tpu.memory_space<vmem>>, vector<1x1x8x1x16xf32>
    %5 = vector.shape_cast %4 : vector<1x1x8x1x16xf32> to vector<8x1x16xf32>
    %6 = tpu.concatenate %3, %1, %5 in 1 : vector<8x1x16xf32>, vector<8x8x16xf32>, vector<8x1x16xf32> -> vector<8x10x16xf32>
    %cst = arith.constant 0.000000e+00 : f32
    %7 = vector.broadcast %cst : f32 to vector<8x10x1xf32>
    %8 = tpu.concatenate %7, %6, %7 in 2 : vector<8x10x1xf32>, vector<8x10x16xf32>, vector<8x10x1xf32> -> vector<8x10x18xf32>
    %c0_13 = arith.constant 0 : index
    %c0_14 = arith.constant 0 : index
    %c0_15 = arith.constant 0 : index
    %c0_16 = arith.constant 0 : index
    %c0_17 = arith.constant 0 : index
    %9 = vector.load %arg5[%c0_13, %c0_14, %c0_15, %c0_16, %c0_17] : memref<3x3x8x1x1xf32, #tpu.memory_space<vmem>>, vector<3x3x8x1x1xf32>
    %cst_18 = arith.constant 0.000000e+00 : f32
    %10 = vector.broadcast %cst_18 : f32 to vector<8x8x16xf32>
    %11 = vector.extract_strided_slice %8 {offsets = [0, 0, 0], sizes = [8, 8, 16], strides = [1, 1, 1]} : vector<8x10x18xf32> to vector<8x8x16xf32>
    %12 = vector.extract_strided_slice %9 {offsets = [0, 0, 0, 0, 0], sizes = [1, 1, 8, 1, 1], strides = [1, 1, 1, 1, 1]} : vector<3x3x8x1x1xf32> to vector<1x1x8x1x1xf32>
    %13 = vector.shape_cast %12 : vector<1x1x8x1x1xf32> to vector<8x1x1xf32>
    %14 = vector.broadcast %13 : vector<8x1x1xf32> to vector<8x8x16xf32>
    %15 = arith.mulf %11, %14 : vector<8x8x16xf32>
    %16 = arith.addf %10, %15 : vector<8x8x16xf32>
    %17 = vector.extract_strided_slice %8 {offsets = [0, 0, 1], sizes = [8, 8, 16], strides = [1, 1, 1]} : vector<8x10x18xf32> to vector<8x8x16xf32>
    %18 = vector.extract_strided_slice %9 {offsets = [0, 1, 0, 0, 0], sizes = [1, 1, 8, 1, 1], strides = [1, 1, 1, 1, 1]} : vector<3x3x8x1x1xf32> to vector<1x1x8x1x1xf32>
    %19 = vector.shape_cast %18 : vector<1x1x8x1x1xf32> to vector<8x1x1xf32>
    %20 = vector.broadcast %19 : vector<8x1x1xf32> to vector<8x8x16xf32>
    %21 = arith.mulf %17, %20 : vector<8x8x16xf32>
    %22 = arith.addf %16, %21 : vector<8x8x16xf32>
    %23 = vector.extract_strided_slice %8 {offsets = [0, 0, 2], sizes = [8, 8, 16], strides = [1, 1, 1]} : vector<8x10x18xf32> to vector<8x8x16xf32>
    %24 = vector.extract_strided_slice %9 {offsets = [0, 2, 0, 0, 0], sizes = [1, 1, 8, 1, 1], strides = [1, 1, 1, 1, 1]} : vector<3x3x8x1x1xf32> to vector<1x1x8x1x1xf32>
    %25 = vector.shape_cast %24 : vector<1x1x8x1x1xf32> to vector<8x1x1xf32>
    %26 = vector.broadcast %25 : vector<8x1x1xf32> to vector<8x8x16xf32>
    %27 = arith.mulf %23, %26 : vector<8x8x16xf32>
    %28 = arith.addf %22, %27 : vector<8x8x16xf32>
    %29 = vector.extract_strided_slice %8 {offsets = [0, 1, 0], sizes = [8, 8, 16], strides = [1, 1, 1]} : vector<8x10x18xf32> to vector<8x8x16xf32>
    %30 = vector.extract_strided_slice %9 {offsets = [1, 0, 0, 0, 0], sizes = [1, 1, 8, 1, 1], strides = [1, 1, 1, 1, 1]} : vector<3x3x8x1x1xf32> to vector<1x1x8x1x1xf32>
    %31 = vector.shape_cast %30 : vector<1x1x8x1x1xf32> to vector<8x1x1xf32>
    %32 = vector.broadcast %31 : vector<8x1x1xf32> to vector<8x8x16xf32>
    %33 = arith.mulf %29, %32 : vector<8x8x16xf32>
    %34 = arith.addf %28, %33 : vector<8x8x16xf32>
    %35 = vector.extract_strided_slice %8 {offsets = [0, 1, 1], sizes = [8, 8, 16], strides = [1, 1, 1]} : vector<8x10x18xf32> to vector<8x8x16xf32>
    %36 = vector.extract_strided_slice %9 {offsets = [1, 1, 0, 0, 0], sizes = [1, 1, 8, 1, 1], strides = [1, 1, 1, 1, 1]} : vector<3x3x8x1x1xf32> to vector<1x1x8x1x1xf32>
    %37 = vector.shape_cast %36 : vector<1x1x8x1x1xf32> to vector<8x1x1xf32>
    %38 = vector.broadcast %37 : vector<8x1x1xf32> to vector<8x8x16xf32>
    %39 = arith.mulf %35, %38 : vector<8x8x16xf32>
    %40 = arith.addf %34, %39 : vector<8x8x16xf32>
    %41 = vector.extract_strided_slice %8 {offsets = [0, 1, 2], sizes = [8, 8, 16], strides = [1, 1, 1]} : vector<8x10x18xf32> to vector<8x8x16xf32>
    %42 = vector.extract_strided_slice %9 {offsets = [1, 2, 0, 0, 0], sizes = [1, 1, 8, 1, 1], strides = [1, 1, 1, 1, 1]} : vector<3x3x8x1x1xf32> to vector<1x1x8x1x1xf32>
    %43 = vector.shape_cast %42 : vector<1x1x8x1x1xf32> to vector<8x1x1xf32>
    %44 = vector.broadcast %43 : vector<8x1x1xf32> to vector<8x8x16xf32>
    %45 = arith.mulf %41, %44 : vector<8x8x16xf32>
    %46 = arith.addf %40, %45 : vector<8x8x16xf32>
    %47 = vector.extract_strided_slice %8 {offsets = [0, 2, 0], sizes = [8, 8, 16], strides = [1, 1, 1]} : vector<8x10x18xf32> to vector<8x8x16xf32>
    %48 = vector.extract_strided_slice %9 {offsets = [2, 0, 0, 0, 0], sizes = [1, 1, 8, 1, 1], strides = [1, 1, 1, 1, 1]} : vector<3x3x8x1x1xf32> to vector<1x1x8x1x1xf32>
    %49 = vector.shape_cast %48 : vector<1x1x8x1x1xf32> to vector<8x1x1xf32>
    %50 = vector.broadcast %49 : vector<8x1x1xf32> to vector<8x8x16xf32>
    %51 = arith.mulf %47, %50 : vector<8x8x16xf32>
    %52 = arith.addf %46, %51 : vector<8x8x16xf32>
    %53 = vector.extract_strided_slice %8 {offsets = [0, 2, 1], sizes = [8, 8, 16], strides = [1, 1, 1]} : vector<8x10x18xf32> to vector<8x8x16xf32>
    %54 = vector.extract_strided_slice %9 {offsets = [2, 1, 0, 0, 0], sizes = [1, 1, 8, 1, 1], strides = [1, 1, 1, 1, 1]} : vector<3x3x8x1x1xf32> to vector<1x1x8x1x1xf32>
    %55 = vector.shape_cast %54 : vector<1x1x8x1x1xf32> to vector<8x1x1xf32>
    %56 = vector.broadcast %55 : vector<8x1x1xf32> to vector<8x8x16xf32>
    %57 = arith.mulf %53, %56 : vector<8x8x16xf32>
    %58 = arith.addf %52, %57 : vector<8x8x16xf32>
    %59 = vector.extract_strided_slice %8 {offsets = [0, 2, 2], sizes = [8, 8, 16], strides = [1, 1, 1]} : vector<8x10x18xf32> to vector<8x8x16xf32>
    %60 = vector.extract_strided_slice %9 {offsets = [2, 2, 0, 0, 0], sizes = [1, 1, 8, 1, 1], strides = [1, 1, 1, 1, 1]} : vector<3x3x8x1x1xf32> to vector<1x1x8x1x1xf32>
    %61 = vector.shape_cast %60 : vector<1x1x8x1x1xf32> to vector<8x1x1xf32>
    %62 = vector.broadcast %61 : vector<8x1x1xf32> to vector<8x8x16xf32>
    %63 = arith.mulf %59, %62 : vector<8x8x16xf32>
    %64 = arith.addf %58, %63 : vector<8x8x16xf32>
    %c0_19 = arith.constant 0 : index
    %c0_20 = arith.constant 0 : index
    %c0_21 = arith.constant 0 : index
    %65 = vector.load %arg6[%c0_19, %c0_20, %c0_21] : memref<8x1x1xf32, #tpu.memory_space<vmem>>, vector<8x1x1xf32>
    %66 = vector.broadcast %65 : vector<8x1x1xf32> to vector<8x8x16xf32>
    %67 = arith.addf %64, %66 : vector<8x8x16xf32>
    %68 = vector.extract_strided_slice %67 {offsets = [0, 0, 0], sizes = [4, 8, 16], strides = [1, 1, 1]} : vector<8x8x16xf32> to vector<4x8x16xf32>
    %69 = vector.extract_strided_slice %67 {offsets = [4, 0, 0], sizes = [4, 8, 16], strides = [1, 1, 1]} : vector<8x8x16xf32> to vector<4x8x16xf32>
    %70 = arith.mulf %68, %69 : vector<4x8x16xf32>
    %c0_22 = arith.constant 0 : index
    %c0_23 = arith.constant 0 : index
    %c0_24 = arith.constant 0 : index
    %c0_25 = arith.constant 0 : index
    %71 = vector.load %arg7[%c0_22, %c0_23, %c0_24, %c0_25] : memref<1x4x8x16xf32, #tpu.memory_space<vmem>>, vector<1x4x8x16xf32>
    %72 = vector.shape_cast %71 : vector<1x4x8x16xf32> to vector<4x8x16xf32>
    %73 = vector.shape_cast %70 : vector<4x8x16xf32> to vector<1x4x8x16xf32>
    tpu.vector_store %arg7[%c0_22, %c0_23, %c0_24, %c0_25], %73 {strides = array<i32>} : memref<1x4x8x16xf32, #tpu.memory_space<vmem>>, vector<1x4x8x16xf32>,
    return
  }
  func.func @transform_0(%arg0: i32, %arg1: i32) -> (i32, i32, i32, i32) {
    %c0_i32 = arith.constant 0 : i32
    %c0_i32_0 = arith.constant 0 : i32
    %c0_i32_1 = arith.constant 0 : i32
    return %arg0, %c0_i32, %arg1, %c0_i32_0 : i32, i32, i32, i32
  }
  func.func @transform_1(%arg0: i32, %arg1: i32) -> (i32, i32, i32, i32, i32) {
    %c0_i32 = arith.constant 0 : i32
    %c0_i32_0 = arith.constant 0 : i32
    %c0_i32_1 = arith.constant 0 : i32
    %c0_i32_2 = arith.constant 0 : i32
    return %arg0, %arg1, %c0_i32, %c0_i32_0, %c0_i32_1 : i32, i32, i32, i32, i32
  }
  func.func @transform_2(%arg0: i32, %arg1: i32) -> (i32, i32, i32, i32, i32) {
    %c0_i32 = arith.constant 0 : i32
    %c0_i32_0 = arith.constant 0 : i32
    %c0_i32_1 = arith.constant 0 : i32
    %c0_i32_2 = arith.constant 0 : i32
    return %arg0, %arg1, %c0_i32, %c0_i32_0, %c0_i32_1 : i32, i32, i32, i32, i32
  }
  func.func @transform_3(%arg0: i32, %arg1: i32) -> (i32, i32, i32, i32, i32) {
    %c0_i32 = arith.constant 0 : i32
    %c0_i32_0 = arith.constant 0 : i32
    %c0_i32_1 = arith.constant 0 : i32
    %c0_i32_2 = arith.constant 0 : i32
    %c0_i32_3 = arith.constant 0 : i32
    %c0_i32_4 = arith.constant 0 : i32
    return %c0_i32, %c0_i32_0, %c0_i32_1, %c0_i32_2, %c0_i32_3 : i32, i32, i32, i32, i32
  }
  func.func @transform_4(%arg0: i32, %arg1: i32) -> (i32, i32, i32) {
    %c0_i32 = arith.constant 0 : i32
    %c0_i32_0 = arith.constant 0 : i32
    %c0_i32_1 = arith.constant 0 : i32
    %c0_i32_2 = arith.constant 0 : i32
    return %c0_i32, %c0_i32_0, %c0_i32_1 : i32, i32, i32
  }
  func.func @transform_5(%arg0: i32, %arg1: i32) -> (i32, i32, i32, i32) {
    %c0_i32 = arith.constant 0 : i32
    %c0_i32_0 = arith.constant 0 : i32
    %c0_i32_1 = arith.constant 0 : i32
    return %arg0, %c0_i32, %arg1, %c0_i32_0 : i32, i32, i32, i32
  }
}

module attributes {stable_mosaic.version = 11 : i64} {
  func.func @_sfb_conv_kernel(%arg0: i32, %arg1: i32, %arg2: memref<1x4x144xf32, #tpu.memory_space<vmem>>, %arg3: memref<1x4x144xf32, #tpu.memory_space<vmem>>, %arg4: memref<8x8xf32, #tpu.memory_space<vmem>>, %arg5: memref<8x1xf32, #tpu.memory_space<vmem>>, %arg6: memref<1x4x144xf32, #tpu.memory_space<vmem>>, %arg7: memref<1x4x144xf32, #tpu.memory_space<vmem>>) attributes {dimension_semantics = [#tpu.dimension_semantics<parallel>, #tpu.dimension_semantics<parallel>], iteration_bounds = array<i64: 2, 1>, scalar_prefetch = 0 : i64, scratch_operands = 0 : i64, tpu.core_type = #tpu.core_type<tc>, window_params = [{transform_indices = @transform_0, window_bounds = array<i64: 1, 4, 144>}, {transform_indices = @transform_1, window_bounds = array<i64: 1, 4, 144>}, {pipeline_mode = #tpu.pipeline_mode<synchronous>, transform_indices = @transform_2, window_bounds = array<i64: 8, 8>}, {pipeline_mode = #tpu.pipeline_mode<synchronous>, transform_indices = @transform_3, window_bounds = array<i64: 8, 1>}, {transform_indices = @transform_4, window_bounds = array<i64: 1, 4, 144>}, {transform_indices = @transform_5, window_bounds = array<i64: 1, 4, 144>}]} {
    %c0 = arith.constant 0 : index
    %c0_0 = arith.constant 0 : index
    %c0_1 = arith.constant 0 : index
    %0 = vector.load %arg2[%c0, %c0_0, %c0_1] : memref<1x4x144xf32, #tpu.memory_space<vmem>>, vector<1x4x144xf32>
    %1 = vector.shape_cast %0 : vector<1x4x144xf32> to vector<4x144xf32>
    %c0_2 = arith.constant 0 : index
    %c0_3 = arith.constant 0 : index
    %c0_4 = arith.constant 0 : index
    %2 = vector.load %arg3[%c0_2, %c0_3, %c0_4] : memref<1x4x144xf32, #tpu.memory_space<vmem>>, vector<1x4x144xf32>
    %3 = vector.shape_cast %2 : vector<1x4x144xf32> to vector<4x144xf32>
    %c0_5 = arith.constant 0 : index
    %c0_6 = arith.constant 0 : index
    %4 = vector.load %arg4[%c0_5, %c0_6] : memref<8x8xf32, #tpu.memory_space<vmem>>, vector<8x8xf32>
    %5 = vector.extract_strided_slice %4 {offsets = [0, 0], sizes = [8, 4], strides = [1, 1]} : vector<8x8xf32> to vector<8x4xf32>
    %cst = arith.constant dense<0.000000e+00> : vector<8x144xf32>
    %6 = tpu.matmul %5, %1, %cst {dimension_numbers = #tpu.dot_dimension_numbers<[1], [0], [0], [1], [0, 0, 1, 1], [], []>} : vector<8x4xf32>, vector<4x144xf32>, vector<8x144xf32> -> vector<8x144xf32>
    %7 = vector.extract_strided_slice %4 {offsets = [0, 4], sizes = [8, 4], strides = [1, 1]} : vector<8x8xf32> to vector<8x4xf32>
    %cst_7 = arith.constant dense<0.000000e+00> : vector<8x144xf32>
    %8 = tpu.matmul %7, %3, %cst_7 {dimension_numbers = #tpu.dot_dimension_numbers<[1], [0], [0], [1], [0, 0, 1, 1], [], []>} : vector<8x4xf32>, vector<4x144xf32>, vector<8x144xf32> -> vector<8x144xf32>
    %9 = arith.addf %6, %8 : vector<8x144xf32>
    %c0_8 = arith.constant 0 : index
    %c0_9 = arith.constant 0 : index
    %10 = vector.load %arg5[%c0_8, %c0_9] : memref<8x1xf32, #tpu.memory_space<vmem>>, vector<8x1xf32>
    %11 = vector.broadcast %10 : vector<8x1xf32> to vector<8x144xf32>
    %12 = arith.addf %9, %11 : vector<8x144xf32>
    %13 = vector.extract_strided_slice %12 {offsets = [0, 0], sizes = [4, 144], strides = [1, 1]} : vector<8x144xf32> to vector<4x144xf32>
    %c0_10 = arith.constant 0 : index
    %c0_11 = arith.constant 0 : index
    %c0_12 = arith.constant 0 : index
    %14 = vector.load %arg6[%c0_10, %c0_11, %c0_12] : memref<1x4x144xf32, #tpu.memory_space<vmem>>, vector<1x4x144xf32>
    %15 = vector.shape_cast %14 : vector<1x4x144xf32> to vector<4x144xf32>
    %16 = vector.shape_cast %13 : vector<4x144xf32> to vector<1x4x144xf32>
    tpu.vector_store %arg6[%c0_10, %c0_11, %c0_12], %16 {strides = array<i32>} : memref<1x4x144xf32, #tpu.memory_space<vmem>>, vector<1x4x144xf32>,
    %17 = vector.extract_strided_slice %12 {offsets = [4, 0], sizes = [4, 144], strides = [1, 1]} : vector<8x144xf32> to vector<4x144xf32>
    %c0_13 = arith.constant 0 : index
    %c0_14 = arith.constant 0 : index
    %c0_15 = arith.constant 0 : index
    %18 = vector.load %arg7[%c0_13, %c0_14, %c0_15] : memref<1x4x144xf32, #tpu.memory_space<vmem>>, vector<1x4x144xf32>
    %19 = vector.shape_cast %18 : vector<1x4x144xf32> to vector<4x144xf32>
    %20 = vector.shape_cast %17 : vector<4x144xf32> to vector<1x4x144xf32>
    tpu.vector_store %arg7[%c0_13, %c0_14, %c0_15], %20 {strides = array<i32>} : memref<1x4x144xf32, #tpu.memory_space<vmem>>, vector<1x4x144xf32>,
    return
  }
  func.func @transform_0(%arg0: i32, %arg1: i32) -> (i32, i32, i32) {
    %c0_i32 = arith.constant 0 : i32
    %c0_i32_0 = arith.constant 0 : i32
    return %arg0, %c0_i32, %arg1 : i32, i32, i32
  }
  func.func @transform_1(%arg0: i32, %arg1: i32) -> (i32, i32, i32) {
    %c0_i32 = arith.constant 0 : i32
    %c0_i32_0 = arith.constant 0 : i32
    return %arg0, %c0_i32, %arg1 : i32, i32, i32
  }
  func.func @transform_2(%arg0: i32, %arg1: i32) -> (i32, i32) {
    %c0_i32 = arith.constant 0 : i32
    %c0_i32_0 = arith.constant 0 : i32
    %c0_i32_1 = arith.constant 0 : i32
    return %c0_i32, %c0_i32_0 : i32, i32
  }
  func.func @transform_3(%arg0: i32, %arg1: i32) -> (i32, i32) {
    %c0_i32 = arith.constant 0 : i32
    %c0_i32_0 = arith.constant 0 : i32
    %c0_i32_1 = arith.constant 0 : i32
    return %c0_i32, %c0_i32_0 : i32, i32
  }
  func.func @transform_4(%arg0: i32, %arg1: i32) -> (i32, i32, i32) {
    %c0_i32 = arith.constant 0 : i32
    %c0_i32_0 = arith.constant 0 : i32
    return %arg0, %c0_i32, %arg1 : i32, i32, i32
  }
  func.func @transform_5(%arg0: i32, %arg1: i32) -> (i32, i32, i32) {
    %c0_i32 = arith.constant 0 : i32
    %c0_i32_0 = arith.constant 0 : i32
    return %arg0, %c0_i32, %arg1 : i32, i32, i32
  }
}

module attributes {stable_mosaic.version = 11 : i64} {
  func.func @_tail_kernel(%arg0: i32, %arg1: i32, %arg2: memref<1x4x256xf32, #tpu.memory_space<vmem>>, %arg3: memref<1x4x256xf32, #tpu.memory_space<vmem>>, %arg4: memref<1x4x256xf32, #tpu.memory_space<vmem>>, %arg5: memref<4x4xf32, #tpu.memory_space<vmem>>, %arg6: memref<4x1xf32, #tpu.memory_space<vmem>>, %arg7: memref<4x1xf32, #tpu.memory_space<vmem>>, %arg8: memref<4x1xf32, #tpu.memory_space<vmem>>, %arg9: memref<4x1xf32, #tpu.memory_space<vmem>>, %arg10: memref<8x4xf32, #tpu.memory_space<vmem>>, %arg11: memref<8x1xf32, #tpu.memory_space<vmem>>, %arg12: memref<4x4xf32, #tpu.memory_space<vmem>>, %arg13: memref<4x1xf32, #tpu.memory_space<vmem>>, %arg14: memref<4x1xf32, #tpu.memory_space<vmem>>, %arg15: memref<1x4x256xf32, #tpu.memory_space<vmem>>) attributes {dimension_semantics = [#tpu.dimension_semantics<parallel>, #tpu.dimension_semantics<parallel>], iteration_bounds = array<i64: 2, 1>, scalar_prefetch = 0 : i64, scratch_operands = 0 : i64, tpu.core_type = #tpu.core_type<tc>, window_params = [{transform_indices = @transform_0, window_bounds = array<i64: 1, 4, 256>}, {transform_indices = @transform_1, window_bounds = array<i64: 1, 4, 256>}, {transform_indices = @transform_2, window_bounds = array<i64: 1, 4, 256>}, {pipeline_mode = #tpu.pipeline_mode<synchronous>, transform_indices = @transform_3, window_bounds = array<i64: 4, 4>}, {pipeline_mode = #tpu.pipeline_mode<synchronous>, transform_indices = @transform_4, window_bounds = array<i64: 4, 1>}, {pipeline_mode = #tpu.pipeline_mode<synchronous>, transform_indices = @transform_5, window_bounds = array<i64: 4, 1>}, {pipeline_mode = #tpu.pipeline_mode<synchronous>, transform_indices = @transform_6, window_bounds = array<i64: 4, 1>}, {pipeline_mode = #tpu.pipeline_mode<synchronous>, transform_indices = @transform_7, window_bounds = array<i64: 4, 1>}, {pipeline_mode = #tpu.pipeline_mode<synchronous>, transform_indices = @transform_8, window_bounds = array<i64: 8, 4>}, {pipeline_mode = #tpu.pipeline_mode<synchronous>, transform_indices = @transform_9, window_bounds = array<i64: 8, 1>}, {pipeline_mode = #tpu.pipeline_mode<synchronous>, transform_indices = @transform_10, window_bounds = array<i64: 4, 4>}, {pipeline_mode = #tpu.pipeline_mode<synchronous>, transform_indices = @transform_11, window_bounds = array<i64: 4, 1>}, {pipeline_mode = #tpu.pipeline_mode<synchronous>, transform_indices = @transform_12, window_bounds = array<i64: 4, 1>}, {transform_indices = @transform_13, window_bounds = array<i64: 1, 4, 256>}]} {
    %c0 = arith.constant 0 : index
    %c0_0 = arith.constant 0 : index
    %c0_1 = arith.constant 0 : index
    %0 = vector.load %arg2[%c0, %c0_0, %c0_1] : memref<1x4x256xf32, #tpu.memory_space<vmem>>, vector<1x4x256xf32>
    %1 = vector.shape_cast %0 : vector<1x4x256xf32> to vector<4x256xf32>
    %c0_2 = arith.constant 0 : index
    %c0_3 = arith.constant 0 : index
    %c0_4 = arith.constant 0 : index
    %2 = vector.load %arg3[%c0_2, %c0_3, %c0_4] : memref<1x4x256xf32, #tpu.memory_space<vmem>>, vector<1x4x256xf32>
    %3 = vector.shape_cast %2 : vector<1x4x256xf32> to vector<4x256xf32>
    %4 = arith.addf %1, %3 : vector<4x256xf32>
    %c0_5 = arith.constant 0 : index
    %c0_6 = arith.constant 0 : index
    %c0_7 = arith.constant 0 : index
    %5 = vector.load %arg4[%c0_5, %c0_6, %c0_7] : memref<1x4x256xf32, #tpu.memory_space<vmem>>, vector<1x4x256xf32>
    %6 = vector.shape_cast %5 : vector<1x4x256xf32> to vector<4x256xf32>
    %c0_8 = arith.constant 0 : index
    %c0_9 = arith.constant 0 : index
    %7 = vector.load %arg5[%c0_8, %c0_9] : memref<4x4xf32, #tpu.memory_space<vmem>>, vector<4x4xf32>
    %cst = arith.constant dense<0.000000e+00> : vector<4x256xf32>
    %8 = tpu.matmul %7, %4, %cst {dimension_numbers = #tpu.dot_dimension_numbers<[1], [0], [0], [1], [0, 0, 1, 1], [], []>} : vector<4x4xf32>, vector<4x256xf32>, vector<4x256xf32> -> vector<4x256xf32>
    %c0_10 = arith.constant 0 : index
    %c0_11 = arith.constant 0 : index
    %9 = vector.load %arg6[%c0_10, %c0_11] : memref<4x1xf32, #tpu.memory_space<vmem>>, vector<4x1xf32>
    %10 = vector.broadcast %9 : vector<4x1xf32> to vector<4x256xf32>
    %11 = arith.addf %8, %10 : vector<4x256xf32>
    %c0_12 = arith.constant 0 : index
    %c0_13 = arith.constant 0 : index
    %12 = vector.load %arg7[%c0_12, %c0_13] : memref<4x1xf32, #tpu.memory_space<vmem>>, vector<4x1xf32>
    %13 = vector.broadcast %12 : vector<4x1xf32> to vector<4x256xf32>
    %14 = arith.mulf %11, %13 : vector<4x256xf32>
    %15 = arith.addf %6, %14 : vector<4x256xf32>
    %cst_14 = arith.constant dense<0.000000e+00> : vector<256xf32>
    %16 = vector.multi_reduction <add>, %15, %cst_14 [0] : vector<4x256xf32> to vector<256xf32>
    %17 = vector.shape_cast %16 : vector<256xf32> to vector<1x256xf32>
    %cst_15 = arith.constant 4.000000e+00 : f32
    %18 = vector.broadcast %cst_15 : f32 to vector<1x256xf32>
    %19 = arith.divf %17, %18 : vector<1x256xf32>
    %20 = vector.broadcast %19 : vector<1x256xf32> to vector<4x256xf32>
    %21 = arith.subf %15, %20 : vector<4x256xf32>
    %22 = arith.mulf %21, %21 : vector<4x256xf32>
    %cst_16 = arith.constant dense<0.000000e+00> : vector<256xf32>
    %23 = vector.multi_reduction <add>, %22, %cst_16 [0] : vector<4x256xf32> to vector<256xf32>
    %24 = vector.shape_cast %23 : vector<256xf32> to vector<1x256xf32>
    %cst_17 = arith.constant 4.000000e+00 : f32
    %25 = vector.broadcast %cst_17 : f32 to vector<1x256xf32>
    %26 = arith.divf %24, %25 : vector<1x256xf32>
    %cst_18 = arith.constant 9.99999997E-7 : f32
    %27 = vector.broadcast %cst_18 : f32 to vector<1x256xf32>
    %28 = arith.addf %26, %27 : vector<1x256xf32>
    %29 = math.rsqrt %28 : vector<1x256xf32>
    %30 = vector.broadcast %29 : vector<1x256xf32> to vector<4x256xf32>
    %31 = arith.mulf %21, %30 : vector<4x256xf32>
    %c0_19 = arith.constant 0 : index
    %c0_20 = arith.constant 0 : index
    %32 = vector.load %arg8[%c0_19, %c0_20] : memref<4x1xf32, #tpu.memory_space<vmem>>, vector<4x1xf32>
    %33 = vector.broadcast %32 : vector<4x1xf32> to vector<4x256xf32>
    %34 = arith.mulf %31, %33 : vector<4x256xf32>
    %c0_21 = arith.constant 0 : index
    %c0_22 = arith.constant 0 : index
    %35 = vector.load %arg9[%c0_21, %c0_22] : memref<4x1xf32, #tpu.memory_space<vmem>>, vector<4x1xf32>
    %36 = vector.broadcast %35 : vector<4x1xf32> to vector<4x256xf32>
    %37 = arith.addf %34, %36 : vector<4x256xf32>
    %c0_23 = arith.constant 0 : index
    %c0_24 = arith.constant 0 : index
    %38 = vector.load %arg10[%c0_23, %c0_24] : memref<8x4xf32, #tpu.memory_space<vmem>>, vector<8x4xf32>
    %cst_25 = arith.constant dense<0.000000e+00> : vector<8x256xf32>
    %39 = tpu.matmul %38, %37, %cst_25 {dimension_numbers = #tpu.dot_dimension_numbers<[1], [0], [0], [1], [0, 0, 1, 1], [], []>} : vector<8x4xf32>, vector<4x256xf32>, vector<8x256xf32> -> vector<8x256xf32>
    %c0_26 = arith.constant 0 : index
    %c0_27 = arith.constant 0 : index
    %40 = vector.load %arg11[%c0_26, %c0_27] : memref<8x1xf32, #tpu.memory_space<vmem>>, vector<8x1xf32>
    %41 = vector.broadcast %40 : vector<8x1xf32> to vector<8x256xf32>
    %42 = arith.addf %39, %41 : vector<8x256xf32>
    %43 = vector.extract_strided_slice %42 {offsets = [0, 0], sizes = [4, 256], strides = [1, 1]} : vector<8x256xf32> to vector<4x256xf32>
    %44 = vector.extract_strided_slice %42 {offsets = [4, 0], sizes = [4, 256], strides = [1, 1]} : vector<8x256xf32> to vector<4x256xf32>
    %45 = arith.mulf %43, %44 : vector<4x256xf32>
    %c0_28 = arith.constant 0 : index
    %c0_29 = arith.constant 0 : index
    %46 = vector.load %arg12[%c0_28, %c0_29] : memref<4x4xf32, #tpu.memory_space<vmem>>, vector<4x4xf32>
    %cst_30 = arith.constant dense<0.000000e+00> : vector<4x256xf32>
    %47 = tpu.matmul %46, %45, %cst_30 {dimension_numbers = #tpu.dot_dimension_numbers<[1], [0], [0], [1], [0, 0, 1, 1], [], []>} : vector<4x4xf32>, vector<4x256xf32>, vector<4x256xf32> -> vector<4x256xf32>
    %c0_31 = arith.constant 0 : index
    %c0_32 = arith.constant 0 : index
    %48 = vector.load %arg13[%c0_31, %c0_32] : memref<4x1xf32, #tpu.memory_space<vmem>>, vector<4x1xf32>
    %49 = vector.broadcast %48 : vector<4x1xf32> to vector<4x256xf32>
    %50 = arith.addf %47, %49 : vector<4x256xf32>
    %c0_33 = arith.constant 0 : index
    %c0_34 = arith.constant 0 : index
    %51 = vector.load %arg14[%c0_33, %c0_34] : memref<4x1xf32, #tpu.memory_space<vmem>>, vector<4x1xf32>
    %52 = vector.broadcast %51 : vector<4x1xf32> to vector<4x256xf32>
    %53 = arith.mulf %50, %52 : vector<4x256xf32>
    %54 = arith.addf %15, %53 : vector<4x256xf32>
    %c0_35 = arith.constant 0 : index
    %c0_36 = arith.constant 0 : index
    %c0_37 = arith.constant 0 : index
    %55 = vector.load %arg15[%c0_35, %c0_36, %c0_37] : memref<1x4x256xf32, #tpu.memory_space<vmem>>, vector<1x4x256xf32>
    %56 = vector.shape_cast %55 : vector<1x4x256xf32> to vector<4x256xf32>
    %57 = vector.shape_cast %54 : vector<4x256xf32> to vector<1x4x256xf32>
    tpu.vector_store %arg15[%c0_35, %c0_36, %c0_37], %57 {strides = array<i32>} : memref<1x4x256xf32, #tpu.memory_space<vmem>>, vector<1x4x256xf32>,
    return
  }
  func.func @transform_0(%arg0: i32, %arg1: i32) -> (i32, i32, i32) {
    %c0_i32 = arith.constant 0 : i32
    %c0_i32_0 = arith.constant 0 : i32
    return %arg0, %c0_i32, %arg1 : i32, i32, i32
  }
  func.func @transform_1(%arg0: i32, %arg1: i32) -> (i32, i32, i32) {
    %c0_i32 = arith.constant 0 : i32
    %c0_i32_0 = arith.constant 0 : i32
    return %arg0, %c0_i32, %arg1 : i32, i32, i32
  }
  func.func @transform_2(%arg0: i32, %arg1: i32) -> (i32, i32, i32) {
    %c0_i32 = arith.constant 0 : i32
    %c0_i32_0 = arith.constant 0 : i32
    return %arg0, %c0_i32, %arg1 : i32, i32, i32
  }
  func.func @transform_3(%arg0: i32, %arg1: i32) -> (i32, i32) {
    %c0_i32 = arith.constant 0 : i32
    %c0_i32_0 = arith.constant 0 : i32
    %c0_i32_1 = arith.constant 0 : i32
    return %c0_i32, %c0_i32_0 : i32, i32
  }
  func.func @transform_4(%arg0: i32, %arg1: i32) -> (i32, i32) {
    %c0_i32 = arith.constant 0 : i32
    %c0_i32_0 = arith.constant 0 : i32
    %c0_i32_1 = arith.constant 0 : i32
    return %c0_i32, %c0_i32_0 : i32, i32
  }
  func.func @transform_5(%arg0: i32, %arg1: i32) -> (i32, i32) {
    %c0_i32 = arith.constant 0 : i32
    %c0_i32_0 = arith.constant 0 : i32
    %c0_i32_1 = arith.constant 0 : i32
    return %c0_i32, %c0_i32_0 : i32, i32
  }
  func.func @transform_6(%arg0: i32, %arg1: i32) -> (i32, i32) {
    %c0_i32 = arith.constant 0 : i32
    %c0_i32_0 = arith.constant 0 : i32
    %c0_i32_1 = arith.constant 0 : i32
    return %c0_i32, %c0_i32_0 : i32, i32
  }
  func.func @transform_7(%arg0: i32, %arg1: i32) -> (i32, i32) {
    %c0_i32 = arith.constant 0 : i32
    %c0_i32_0 = arith.constant 0 : i32
    %c0_i32_1 = arith.constant 0 : i32
    return %c0_i32, %c0_i32_0 : i32, i32
  }
  func.func @transform_8(%arg0: i32, %arg1: i32) -> (i32, i32) {
    %c0_i32 = arith.constant 0 : i32
    %c0_i32_0 = arith.constant 0 : i32
    %c0_i32_1 = arith.constant 0 : i32
    return %c0_i32, %c0_i32_0 : i32, i32
  }
  func.func @transform_9(%arg0: i32, %arg1: i32) -> (i32, i32) {
    %c0_i32 = arith.constant 0 : i32
    %c0_i32_0 = arith.constant 0 : i32
    %c0_i32_1 = arith.constant 0 : i32
    return %c0_i32, %c0_i32_0 : i32, i32
  }
  func.func @transform_10(%arg0: i32, %arg1: i32) -> (i32, i32) {
    %c0_i32 = arith.constant 0 : i32
    %c0_i32_0 = arith.constant 0 : i32
    %c0_i32_1 = arith.constant 0 : i32
    return %c0_i32, %c0_i32_0 : i32, i32
  }
  func.func @transform_11(%arg0: i32, %arg1: i32) -> (i32, i32) {
    %c0_i32 = arith.constant 0 : i32
    %c0_i32_0 = arith.constant 0 : i32
    %c0_i32_1 = arith.constant 0 : i32
    return %c0_i32, %c0_i32_0 : i32, i32
  }
  func.func @transform_12(%arg0: i32, %arg1: i32) -> (i32, i32) {
    %c0_i32 = arith.constant 0 : i32
    %c0_i32_0 = arith.constant 0 : i32
    %c0_i32_1 = arith.constant 0 : i32
    return %c0_i32, %c0_i32_0 : i32, i32
  }
  func.func @transform_13(%arg0: i32, %arg1: i32) -> (i32, i32, i32) {
    %c0_i32 = arith.constant 0 : i32
    %c0_i32_0 = arith.constant 0 : i32
    return %arg0, %c0_i32, %arg1 : i32, i32, i32
  }
}

</mosaic_0001>

<llo_original>
// kernel: aff_block.4
$region0: #{aff_block.4}
  #allocation0 [shape = 'u32[]', space=smem, size = 0x4, offset = 0x4, fixed_abs, tag = 'smem constant byte address 0x4 - core index']
  #allocation1 [shape = 'u32[72,128]{1,0:T(1,128)}', space=vmem, size = 0x9000, scoped, tag = 'internal scratch']
  %s0 = inlined_call_operand.vmem [shape: f32[2,4,256], index: 0, kind: input, shape index: {}]
  %s1 = inlined_call_operand.vmem [shape: f32[4,1], index: 1, kind: input, shape index: {}]
  %s2 = inlined_call_operand.vmem [shape: f32[4,1], index: 2, kind: input, shape index: {}]
  %s3 = inlined_call_operand.vmem [shape: f32[8,4], index: 3, kind: input, shape index: {}]
  %s4 = inlined_call_operand.vmem [shape: f32[8,1], index: 4, kind: input, shape index: {}]
  %s5 = inlined_call_operand.vmem [shape: f32[2,8,256], index: 5, kind: output, shape index: {}]
  %s6 = sld [smem:[#allocation0]]
  $region53: #{aff_block.4} parent=0
    _
  %s8 = ssub.s32 1, %s6
  %s9 = scalar_select 0, %s8, %s6
  loop: start=0, step=1, limit=4
  $region2: #{aff_block.4} parent=0 // loop_pre_header
    _
  $region3: #{aff_block.4} parent=0 // loop_header
    %s11 = sphi 0, %s15
    %p12 = scmp.ge.s32.totalorder %s11, 4
    %s18 = sphi 0, %s30
    %s19 = sphi 0, %s26
    %s20 = sphi 0, %s18
    %s21 = sphi 0, %s19
    %s22 = sphi 0, %s20
    %s23 = sphi 0, %s21
    %s35 = sphi 0, %s37
    %s38 = sphi 0, %s35
    %s39 = sphi 0, %s38
    %s55 = sphi 0, %s39
    %s59 = sphi 0, %s59
    %s61 = sphi 0, %s59
    %s62 = sphi 0, %s61
    %s76 = sphi 0, %s62
    %s80 = sphi 0, %s80
    %s82 = sphi 0, %s80
    %s83 = sphi 0, %s82
    %s97 = sphi 0, %s83
    %s101 = sphi 0, %s101
    %s103 = sphi 0, %s101
    %s104 = sphi 0, %s103
    %s118 = sphi 0, %s104
    %s122 = sphi 0, %s122
    %s124 = sphi 0, %s122
    %s125 = sphi 0, %s124
    %s139 = sphi 0, %s125
    %s147 = sphi 0, %s149
    %s150 = sphi 0, %s147
    %s151 = sphi 0, %s150
    %s167 = sphi 0, %s151
  $region4: #{aff_block.4} parent=0 // loop_header_branch
    %14 = sbr.rel (%p12) target = $region8
  $region5: #{aff_block.4} parent=0 // loop_body
    %s16 = ssub.s32 %s11, 1
    %s17 = ssub.s32 %s11, 2
    %s24 = sadd.s32 1, %s19
    %p25 = scmp.ge.s32.totalorder %s24, 1
    %s26 = scalar_select %p25, 0, %s24
    %s27 = sadd.s32 1, %s18
    %s28 = scalar_select %p25, %s27, %s18
    %p29 = scmp.ge.s32.totalorder %s28, 2
    %s30 = scalar_select %p29, 0, %s28
    %s31 = ssub.s32 %s18, %s30
    %s32 = ssub.s32 %s19, %s26
    %s33 = sor.u32 %s31, %s32
    %p34 = scmp.eq.s32.totalorder %s33, 0
    %s36 = sadd.s32 %s35, 1
    %s37 = scalar_select %p34, %s35, %s36
    %p40 = pneg %p34
    %p41 = scmp.eq.s32.totalorder %s11, 1
    %p42 = por %p40, %p41
    %p43 = scmp.ne.s32.totalorder %s35, %s38
    %p44 = scmp.eq.s32.totalorder %s11, 0
    %p45 = por %p43, %p44
    %p46 = scmp.ne.s32.totalorder %s35, %s38
    %p47 = scmp.eq.s32.totalorder %s16, 1
    %p48 = por %p46, %p47
    %p49 = scmp.ne.s32.totalorder %s38, %s39
    %p50 = scmp.eq.s32.totalorder %s16, 0
    %p51 = por %p49, %p50
    %p52 = scmp.ne.s32.totalorder %s38, %s39
    %p53 = scmp.eq.s32.totalorder %s17, 1
    %p54 = por %p52, %p53
    %p56 = scmp.ne.s32.totalorder %s39, %s55
    %p57 = scmp.eq.s32.totalorder %s17, 0
    %p58 = por %p56, %p57
    %s60 = sadd.s32 %s59, 1
    %p63 = scmp.eq.s32.totalorder %s11, 1
    %p64 = scmp.ne.s32.totalorder %s59, %s61
    %p65 = scmp.eq.s32.totalorder %s11, 0
    %p66 = por %p64, %p65
    %p67 = scmp.ne.s32.totalorder %s59, %s61
    %p68 = scmp.eq.s32.totalorder %s16, 1
    %p69 = por %p67, %p68
    %p70 = scmp.ne.s32.totalorder %s61, %s62
    %p71 = scmp.eq.s32.totalorder %s16, 0
    %p72 = por %p70, %p71
    %p73 = scmp.ne.s32.totalorder %s61, %s62
    %p74 = scmp.eq.s32.totalorder %s17, 1
    %p75 = por %p73, %p74
    %p77 = scmp.ne.s32.totalorder %s62, %s76
    %p78 = scmp.eq.s32.totalorder %s17, 0
    %p79 = por %p77, %p78
    %s81 = sadd.s32 %s80, 1
    %p84 = scmp.eq.s32.totalorder %s11, 1
    %p85 = scmp.ne.s32.totalorder %s80, %s82
    %p86 = scmp.eq.s32.totalorder %s11, 0
    %p87 = por %p85, %p86
    %p88 = scmp.ne.s32.totalorder %s80, %s82
    %p89 = scmp.eq.s32.totalorder %s16, 1
    %p90 = por %p88, %p89
    %p91 = scmp.ne.s32.totalorder %s82, %s83
    %p92 = scmp.eq.s32.totalorder %s16, 0
    %p93 = por %p91, %p92
    %p94 = scmp.ne.s32.totalorder %s82, %s83
    %p95 = scmp.eq.s32.totalorder %s17, 1
    %p96 = por %p94, %p95
    %p98 = scmp.ne.s32.totalorder %s83, %s97
    %p99 = scmp.eq.s32.totalorder %s17, 0
    %p100 = por %p98, %p99
    %s102 = sadd.s32 %s101, 1
    %p105 = scmp.eq.s32.totalorder %s11, 1
    %p106 = scmp.ne.s32.totalorder %s101, %s103
    %p107 = scmp.eq.s32.totalorder %s11, 0
    %p108 = por %p106, %p107
    %p109 = scmp.ne.s32.totalorder %s101, %s103
    %p110 = scmp.eq.s32.totalorder %s16, 1
    %p111 = por %p109, %p110
    %p112 = scmp.ne.s32.totalorder %s103, %s104
    %p113 = scmp.eq.s32.totalorder %s16, 0
    %p114 = por %p112, %p113
    %p115 = scmp.ne.s32.totalorder %s103, %s104
    %p116 = scmp.eq.s32.totalorder %s17, 1
    %p117 = por %p115, %p116
    %p119 = scmp.ne.s32.totalorder %s104, %s118
    %p120 = scmp.eq.s32.totalorder %s17, 0
    %p121 = por %p119, %p120
    %s123 = sadd.s32 %s122, 1
    %p126 = scmp.eq.s32.totalorder %s11, 1
    %p127 = scmp.ne.s32.totalorder %s122, %s124
    %p128 = scmp.eq.s32.totalorder %s11, 0
    %p129 = por %p127, %p128
    %p130 = scmp.ne.s32.totalorder %s122, %s124
    %p131 = scmp.eq.s32.totalorder %s16, 1
    %p132 = por %p130, %p131
    %p133 = scmp.ne.s32.totalorder %s124, %s125
    %p134 = scmp.eq.s32.totalorder %s16, 0
    %p135 = por %p133, %p134
    %p136 = scmp.ne.s32.totalorder %s124, %s125
    %p137 = scmp.eq.s32.totalorder %s17, 1
    %p138 = por %p136, %p137
    %p140 = scmp.ne.s32.totalorder %s125, %s139
    %p141 = scmp.eq.s32.totalorder %s17, 0
    %p142 = por %p140, %p141
    %s143 = ssub.s32 %s18, %s30
    %s144 = ssub.s32 %s19, %s26
    %s145 = sor.u32 %s143, %s144
    %p146 = scmp.eq.s32.totalorder %s145, 0
    %s148 = sadd.s32 %s147, 1
    %s149 = scalar_select %p146, %s147, %s148
    %p152 = pneg %p146
    %p153 = scmp.eq.s32.totalorder %s11, 1
    %p154 = por %p152, %p153
    %p155 = scmp.ne.s32.totalorder %s147, %s150
    %p156 = scmp.eq.s32.totalorder %s11, 0
    %p157 = por %p155, %p156
    %p158 = scmp.ne.s32.totalorder %s147, %s150
    %p159 = scmp.eq.s32.totalorder %s16, 1
    %p160 = por %p158, %p159
    %p161 = scmp.ne.s32.totalorder %s150, %s151
    %p162 = scmp.eq.s32.totalorder %s16, 0
    %p163 = por %p161, %p162
    %p164 = scmp.ne.s32.totalorder %s150, %s151
    %p165 = scmp.eq.s32.totalorder %s17, 1
    %p166 = por %p164, %p165
    %p168 = scmp.ne.s32.totalorder %s151, %s167
    %p169 = scmp.eq.s32.totalorder %s17, 0
    %p170 = por %p168, %p169
    %p171 = scmp.le.s32.totalorder 1, %s11
    %p172 = scmp.lt.s32.totalorder %s11, 3
    %p173 = pnand %p171, %p172
    %p174 = pneg %p173
    // Predicated region
    $region9: #{aff_block.4} parent=5 // pred_check
      _
    $region10: #{aff_block.4} parent=5 // pred_check_branch
      %176 = sbr.rel (%p173) target = $region12
    $region11: #{aff_block.4} parent=5 // pred_region
      %s177 = ssub.s32 %s11, 1
      // Predicated region
      $region13: #{aff_block.4} parent=11 // pred_check
        %p178 = pneg %p72
      $region14: #{aff_block.4} parent=11 // pred_check_branch
        %180 = sbr.rel (%p178) target = $region16
      $region15: #{aff_block.4} parent=11 // pred_region
        _
      $region16: #{aff_block.4} parent=11 // pred_fallthru
        _
      // Predicated region
      $region17: #{aff_block.4} parent=11 // pred_check
        %p181 = pneg %p93
      $region18: #{aff_block.4} parent=11 // pred_check_branch
        %183 = sbr.rel (%p181) target = $region20
      $region19: #{aff_block.4} parent=11 // pred_region
        _
      $region20: #{aff_block.4} parent=11 // pred_fallthru
        _
      // Predicated region
      $region21: #{aff_block.4} parent=11 // pred_check
        %p184 = pneg %p114
      $region22: #{aff_block.4} parent=11 // pred_check_branch
        %186 = sbr.rel (%p184) target = $region24
      $region23: #{aff_block.4} parent=11 // pred_region
        _
      $region24: #{aff_block.4} parent=11 // pred_fallthru
        _
      // Predicated region
      $region25: #{aff_block.4} parent=11 // pred_check
        %p187 = pneg %p135
      $region26: #{aff_block.4} parent=11 // pred_check_branch
        %189 = sbr.rel (%p187) target = $region28
      $region27: #{aff_block.4} parent=11 // pred_region
        _
      $region28: #{aff_block.4} parent=11 // pred_fallthru
        _
    $region12: #{aff_block.4} parent=5 // pred_fallthru
      _
    %p190 = scmp.lt.s32.totalorder %s11, 2
    // Predicated region
    $region29: #{aff_block.4} parent=5 // pred_check
      %p191 = pneg %p190
    $region30: #{aff_block.4} parent=5 // pred_check_branch
      %193 = sbr.rel (%p191) target = $region32
    $region31: #{aff_block.4} parent=5 // pred_region
      // Predicated region
      $region33: #{aff_block.4} parent=31 // pred_check
        %p194 = pneg %p45
      $region34: #{aff_block.4} parent=31 // pred_check_branch
        %196 = sbr.rel (%p194) target = $region36
      $region35: #{aff_block.4} parent=31 // pred_region
        %s197 = smul.u32 2, %s19
        %p198 = scmp.lt.s32.totalorder %s18, 1
        %s199 = scalar_select %p198, %s18, 1
        %p200 = scmp.lt.s32.totalorder %s197, 1
        %s201 = scalar_select %p200, %s197, 1
        %s202 = smul.addr %s199, 2
        %s203 = sadd.s32 %s201, %s202
        %s204 = smul.addr %s203, 4
        %s205 = scalar_lea.vmem %s0, %s204
        %s206 = smul.u32 2, %s19
      $region36: #{aff_block.4} parent=31 // pred_fallthru
        _
    $region32: #{aff_block.4} parent=5 // pred_fallthru
      _
    %p207 = scmp.le.s32.totalorder 1, %s11
    %p208 = scmp.lt.s32.totalorder %s11, 3
    %p209 = pnand %p207, %p208
    %p210 = pneg %p209
    // Predicated region
    $region37: #{aff_block.4} parent=5 // pred_check
      _
    $region38: #{aff_block.4} parent=5 // pred_check_branch
      %212 = sbr.rel (%p209) target = $region40
    $region39: #{aff_block.4} parent=5 // pred_region
      %s213 = ssub.s32 %s11, 1
      %s214 = smul.u32 2, %s21
      %p215 = scmp.lt.s32.totalorder %s20, 1
      %s216 = scalar_select %p215, %s20, 1
      %p217 = scmp.lt.s32.totalorder %s214, 1
      %s218 = scalar_select %p217, %s214, 1
      %s219 = smul.addr %s216, 2
      %s220 = sadd.s32 %s218, %s219
      %s221 = smul.addr %s220, 4
      %s222 = scalar_lea.vmem %s0, %s221
      %p223 = pneg %p51
      %p224 = pneg %p48
      %p225 = pneg %p72
      %p226 = pneg %p69
      %p227 = pneg %p93
      %p228 = pneg %p90
      %p229 = pneg %p114
      %p230 = pneg %p111
      %p231 = pneg %p135
      %p232 = pneg %p132
      %p233 = pneg %p163
      %p234 = pneg %p160
      %s235 = smul.u32 2, %s21
      %p236 = scmp.lt.s32.totalorder %s20, 1
      %s237 = scalar_select %p236, %s20, 1
      %p238 = scmp.lt.s32.totalorder %s235, 1
      %s239 = scalar_select %p238, %s235, 1
      %s240 = smul.addr %s237, 2
      %s241 = sadd.s32 %s239, %s240
      %s242 = smul.addr %s241, 8
      %s243 = scalar_lea.vmem %s5, %s242
      %s244 = smul.u32 2, %s21
      %p245 = scmp.lt.s32.totalorder %s20, 1
      %s246 = scalar_select %p245, %s20, 1
      %p247 = scmp.lt.s32.totalorder %s244, 1
      %s248 = scalar_select %p247, %s244, 1
      %s249 = smul.addr %s246, 2
      %s250 = sadd.s32 %s248, %s249
      %s251 = smul.addr %s250, 4
      %s252 = scalar_lea.vmem %s0, %s251
      %s253 = smul.u32 2, %s21
      %s254 = smul.u32 2, %s21
      %p255 = scmp.lt.s32.totalorder %s20, 1
      %s256 = scalar_select %p255, %s20, 1
      %p257 = scmp.lt.s32.totalorder %s254, 1
      %s258 = scalar_select %p257, %s254, 1
      %s259 = smul.addr %s256, 2
      %s260 = sadd.s32 %s258, %s259
      %s261 = smul.addr %s260, 8
      %s262 = scalar_lea.vmem %s5, %s261
      %s263 = smul.u32 2, %s21
      %v264 = vld [vmem:[%s252] sm:$0xff]
      %266 = vst [vmem:[#allocation1] ss:$2 sm:$0xff] %v264
      %v267 = vld.sshfl [vmem:[#allocation1] sm:$0xff pattern:$0x75316420]
      %v268 = vld.sshfl [vmem:[#allocation1 + $0x8] sm:$0xff pattern:$0x75316420]
      %vm271 = vcmask 1043456
      %v272 = vsel %vm271, %v267, 0.0
      %v273 = vrot.slane %v272, 4
      %v274 = vadd.f32 %v272, %v273
      %v275 = vrot.slane %v274, 2
      %v276 = vadd.f32 %v274, %v275
      %v277 = vrot.slane %v276, 1
      %v278 = vadd.f32 %v276, %v277
      %v279 = vsel %vm271, %v268, 0.0
      %v280 = vrot.slane %v279, 4
      %v281 = vadd.f32 %v279, %v280
      %v282 = vrot.slane %v281, 2
      %v283 = vadd.f32 %v281, %v282
      %v284 = vrot.slane %v283, 1
      %v285 = vadd.f32 %v283, %v284
      %v286 = vrcp.pop 4.0
      %v287 = vmul.f32 4.0, %v286
      %v288 = vsub.f32 1.0, %v287
      %v289 = vmul.f32 %v286, %v288
      %v290 = vadd.f32 %v286, %v289
      %vm291 = vweird.f32 %v286
      %v292 = vsel %vm291, %v286, %v290
      %v293 = vmul.f32 %v278, %v292
      %v294 = vmul.f32 %v285, %v292
      %v297 = vrot.slane %v294, 4
      %v298 = vsel %vm271, %v293, %v297
      %v300 = vsub.f32 %v264, %v298
      %v301 = vmul.f32 %v300, %v300
      %303 = vst [vmem:[#allocation1] ss:$2 sm:$0xff] %v301
      %v304 = vld.sshfl [vmem:[#allocation1] sm:$0xff pattern:$0x75316420]
      %v305 = vld.sshfl [vmem:[#allocation1 + $0x8] sm:$0xff pattern:$0x75316420]
      %v308 = vsel %vm271, %v304, 0.0
      %v309 = vrot.slane %v308, 4
      %v310 = vadd.f32 %v308, %v309
      %v311 = vrot.slane %v310, 2
      %v312 = vadd.f32 %v310, %v311
      %v313 = vrot.slane %v312, 1
      %v314 = vadd.f32 %v312, %v313
      %v315 = vsel %vm271, %v305, 0.0
      %v316 = vrot.slane %v315, 4
      %v317 = vadd.f32 %v315, %v316
      %v318 = vrot.slane %v317, 2
      %v319 = vadd.f32 %v317, %v318
      %v320 = vrot.slane %v319, 1
      %v321 = vadd.f32 %v319, %v320
      %v322 = vmul.f32 %v314, %v292
      %v323 = vmul.f32 %v321, %v292
      %v324 = vadd.f32 %v322, 1e-06
      %v325 = vadd.f32 %v323, 1e-06
      %v326 = vrsqrt.pop %v324
      %v327 = vmul.f32 %v326, %v324
      %v328 = vmul.f32 %v327, %v326
      %v329 = vmul.f32 0.5, %v328
      %v330 = vsub.f32 1.5, %v329
      %v331 = vmul.f32 %v326, %v330
      %vm332 = vweird.f32 %v324
      %vm333 = vweird.f32 %v326
      %vm334 = vmor %vm332, %vm333
      %v335 = vsel %vm334, %v326, %v331
      %v336 = vrsqrt.pop %v325
      %v337 = vmul.f32 %v336, %v325
      %v338 = vmul.f32 %v337, %v336
      %v339 = vmul.f32 0.5, %v338
      %v340 = vsub.f32 1.5, %v339
      %v341 = vmul.f32 %v336, %v340
      %vm342 = vweird.f32 %v325
      %vm343 = vweird.f32 %v336
      %vm344 = vmor %vm342, %vm343
      %v345 = vsel %vm344, %v336, %v341
      %v348 = vrot.slane %v345, 4
      %v349 = vsel %vm271, %v335, %v348
      %v351 = vmul.f32 %v300, %v349
      %v352 = vld [vmem:[%s1] sm:$0xf]
      %354 = vset.pattern.permute.xlu0 0
      %355 = vperm.xlu0 %354, %v352
      %v356 = vpop.permute.xlu0 %355
      %v358 = vunpack.c.l.s4 839922192
      %v359 = vunpack.c.0.s8 %v358
      %v360 = vperm.slane %v356, %v359
      %v362 = vmul.f32 %v351, %v360
      %v363 = vld [vmem:[%s2] sm:$0xf]
      %365 = vset.pattern.permute.xlu0 0
      %366 = vperm.xlu0 %365, %v363
      %v367 = vpop.permute.xlu0 %366
      %v369 = vunpack.c.l.s4 839922192
      %v370 = vunpack.c.0.s8 %v369
      %v371 = vperm.slane %v367, %v370
      %v373 = vadd.f32 %v362, %v371
      %v374 = vld [vmem:[%s3] sm:$0xff]
      %v375 = vld [vmem:[%s4] sm:$0xff]
      %377 = vset.pattern.permute.xlu0 0
      %378 = vperm.xlu0 %377, %v375
      %v379 = vpop.permute.xlu0 %378
      %382 = vst [vmem:[#allocation1] ss:$2 sm:$0xff] %v373
      %v383 = vld.sshfl [vmem:[#allocation1] sm:$0xff pattern:$0x75316420]
      %v384 = vld.sshfl [vmem:[#allocation1 + $0x8] sm:$0xff pattern:$0x75316420]
      %vm385 = vcmask 31744
      %v387 = vsel %vm385, %v374, 0
      %v389 = vsel %vm271, %v383, 0
      %v391 = vsel %vm271, %v384, 0
      %393 = vmatpush.msra.mxu0 0.0
      %394 = vmatpush.msra.mxu0 0.0
      %395 = vmatpush.msra.mxu0 0.0
      %396 = vmatpush.msra.mxu0 0.0
      %397 = vmatpush.msra.mxu0 0.0
      %398 = vmatpush.msra.mxu0 0.0
      %399 = vmatpush.msra.mxu0 0.0
      %400 = vmatpush.msra.mxu0 0.0
      %401 = vmatpush.msra.mxu0 0.0
      %402 = vmatpush.msra.mxu0 0.0
      %403 = vmatpush.msra.mxu0 0.0
      %404 = vmatpush.msra.mxu0 0.0
      %405 = vmatpush.msra.mxu0 0.0
      %406 = vmatpush.msra.mxu0 0.0
      %407 = vmatpush.msra.mxu0 0.0
      %408 = vmatpush.msra.mxu0 %v389
      %409 = vmatmul.f32.gmra.mxu0 %v387
      %v410 = vpop.f32.mrf.mxu0
      %v411 = vadd.f32 %v379, %v410
      %412 = vdwg.mxu0
      %413 = vmatpush.msra.mxu0 0.0
      %414 = vmatpush.msra.mxu0 0.0
      %415 = vmatpush.msra.mxu0 0.0
      %416 = vmatpush.msra.mxu0 0.0
      %417 = vmatpush.msra.mxu0 0.0
      %418 = vmatpush.msra.mxu0 0.0
      %419 = vmatpush.msra.mxu0 0.0
      %420 = vmatpush.msra.mxu0 0.0
      %421 = vmatpush.msra.mxu0 0.0
      %422 = vmatpush.msra.mxu0 0.0
      %423 = vmatpush.msra.mxu0 0.0
      %424 = vmatpush.msra.mxu0 0.0
      %425 = vmatpush.msra.mxu0 0.0
      %426 = vmatpush.msra.mxu0 0.0
      %427 = vmatpush.msra.mxu0 0.0
      %428 = vmatpush.msra.mxu0 %v391
      %429 = vmatmul.f32.gmra.mxu0 %v387
      %v430 = vpop.f32.mrf.mxu0
      %v431 = vadd.f32 %v379, %v430
      %432 = vdwg.mxu0
      %433 = vst [vmem:[%s262] sm:$0xff] %v411
      %434 = vst [vmem:[%s262 + $0x8] sm:$0xff] %v431
      %s435 = smul.u32 2, %s21
      %p436 = scmp.lt.s32.totalorder %s20, 1
      %s437 = scalar_select %p436, %s20, 1
      %p438 = scmp.lt.s32.totalorder %s435, 1
      %s439 = scalar_select %p438, %s435, 1
      %s440 = smul.addr %s437, 2
      %s441 = sadd.s32 %s439, %s440
      %s442 = smul.addr %s441, 8
      %s443 = scalar_lea.vmem %s5, %s442
      // Predicated region
      $region41: #{aff_block.4} parent=39 // pred_check
        %p444 = pneg %p160
      $region42: #{aff_block.4} parent=39 // pred_check_branch
        %446 = sbr.rel (%p444) target = $region44
      $region43: #{aff_block.4} parent=39 // pred_region
        %s447 = smul.u32 2, %s21
      $region44: #{aff_block.4} parent=39 // pred_fallthru
        _
    $region40: #{aff_block.4} parent=5 // pred_fallthru
      _
    %p448 = scmp.le.s32.totalorder 2, %s11
    // Predicated region
    $region45: #{aff_block.4} parent=5 // pred_check
      %p449 = pneg %p448
    $region46: #{aff_block.4} parent=5 // pred_check_branch
      %451 = sbr.rel (%p449) target = $region48
    $region47: #{aff_block.4} parent=5 // pred_region
      %s452 = ssub.s32 %s11, 2
      // Predicated region
      $region49: #{aff_block.4} parent=47 // pred_check
        %p453 = pneg %p166
      $region50: #{aff_block.4} parent=47 // pred_check_branch
        %455 = sbr.rel (%p453) target = $region52
      $region51: #{aff_block.4} parent=47 // pred_region
        %s456 = smul.u32 2, %s23
        %p457 = scmp.lt.s32.totalorder %s22, 1
        %s458 = scalar_select %p457, %s22, 1
        %p459 = scmp.lt.s32.totalorder %s456, 1
        %s460 = scalar_select %p459, %s456, 1
        %s461 = smul.addr %s458, 2
        %s462 = sadd.s32 %s460, %s461
        %s463 = smul.addr %s462, 8
        %s464 = scalar_lea.vmem %s5, %s463
      $region52: #{aff_block.4} parent=47 // pred_fallthru
        _
    $region48: #{aff_block.4} parent=5 // pred_fallthru
      _
  $region6: #{aff_block.4} parent=0 // loop_footer
    %s15 = sadd.s32 1, %s11
  $region7: #{aff_block.4} parent=0 // loop_footer_branch
    %10 = sbr.rel target = $region3
  $region8: #{aff_block.4} parent=0 // loop_exit
    _

// kernel: aff_block.5
$region0: #{aff_block.5}
  #allocation0 [shape = 'u32[]', space=smem, size = 0x4, offset = 0x4, fixed_abs, tag = 'smem constant byte address 0x4 - core index']
  #allocation1 [shape = 'u32[72,128]{1,0:T(1,128)}', space=vmem, size = 0x9000, scoped, tag = 'internal scratch']
  %s0 = inlined_call_operand.vmem [shape: f32[2,8,16,16], index: 0, kind: input, shape index: {}]
  %s1 = inlined_call_operand.vmem [shape: f32[2,2,8,1,16], index: 1, kind: input, shape index: {}]
  %s2 = inlined_call_operand.vmem [shape: f32[2,2,8,1,16], index: 2, kind: input, shape index: {}]
  %s3 = inlined_call_operand.vmem [shape: f32[3,3,8,1,1], index: 3, kind: input, shape index: {}]
  %s4 = inlined_call_operand.vmem [shape: f32[8,1,1], index: 4, kind: input, shape index: {}]
  %s5 = inlined_call_operand.vmem [shape: f32[2,4,16,16], index: 5, kind: output, shape index: {}]
  %s6 = sld [smem:[#allocation0]]
  $region125: #{aff_block.5} parent=0
    _
  %s8 = ssub.s32 1, %s6
  %s9 = scalar_select 0, %s8, %s6
  $region1: #{aff_block.5} parent=0
    #allocation2 [shape = 'u8[65536]{0}', space=vmem, size = 0x10000, scoped, tag = 'input window, operand 0']
    #allocation3 [shape = 'u8[32768]{0}', space=vmem, size = 0x8000, scoped, tag = 'output window, operand 0']
    loop: start=0, step=1, limit=6
    $region2: #{aff_block.5} parent=1 // loop_pre_header
      _
    $region3: #{aff_block.5} parent=1 // loop_header
      %s11 = sphi 0, %s15
      %p12 = scmp.ge.s32.totalorder %s11, 6
      %s18 = sphi 0, %s30
      %s19 = sphi 0, %s26
      %s20 = sphi 0, %s18
      %s21 = sphi 0, %s19
      %s22 = sphi 0, %s20
      %s23 = sphi 0, %s21
      %s35 = sphi 0, %s37
      %s38 = sphi 0, %s35
      %s39 = sphi 0, %s38
      %s55 = sphi 0, %s39
      %s63 = sphi 0, %s65
      %s66 = sphi 0, %s63
      %s67 = sphi 0, %s66
      %s83 = sphi 0, %s67
      %s91 = sphi 0, %s93
      %s94 = sphi 0, %s91
      %s95 = sphi 0, %s94
      %s111 = sphi 0, %s95
      %s115 = sphi 0, %s115
      %s117 = sphi 0, %s115
      %s118 = sphi 0, %s117
      %s132 = sphi 0, %s118
      %s136 = sphi 0, %s136
      %s138 = sphi 0, %s136
      %s139 = sphi 0, %s138
      %s153 = sphi 0, %s139
      %s161 = sphi 0, %s163
      %s164 = sphi 0, %s161
      %s165 = sphi 0, %s164
      %s181 = sphi 0, %s165
    $region4: #{aff_block.5} parent=1 // loop_header_branch
      %14 = sbr.rel (%p12) target = $region8
    $region5: #{aff_block.5} parent=1 // loop_body
      %s16 = ssub.s32 %s11, 1
      %s17 = ssub.s32 %s11, 2
      %s24 = sadd.s32 1, %s19
      %p25 = scmp.ge.s32.totalorder %s24, 2
      %s26 = scalar_select %p25, 0, %s24
      %s27 = sadd.s32 1, %s18
      %s28 = scalar_select %p25, %s27, %s18
      %p29 = scmp.ge.s32.totalorder %s28, 2
      %s30 = scalar_select %p29, 0, %s28
      %s31 = ssub.s32 %s18, %s30
      %s32 = ssub.s32 %s19, %s26
      %s33 = sor.u32 %s31, %s32
      %p34 = scmp.eq.s32.totalorder %s33, 0
      %s36 = sadd.s32 %s35, 1
      %s37 = scalar_select %p34, %s35, %s36
      %p40 = pneg %p34
      %p41 = scmp.eq.s32.totalorder %s11, 3
      %p42 = por %p40, %p41
      %p43 = scmp.ne.s32.totalorder %s35, %s38
      %p44 = scmp.eq.s32.totalorder %s11, 0
      %p45 = por %p43, %p44
      %p46 = scmp.ne.s32.totalorder %s35, %s38
      %p47 = scmp.eq.s32.totalorder %s16, 3
      %p48 = por %p46, %p47
      %p49 = scmp.ne.s32.totalorder %s38, %s39
      %p50 = scmp.eq.s32.totalorder %s16, 0
      %p51 = por %p49, %p50
      %p52 = scmp.ne.s32.totalorder %s38, %s39
      %p53 = scmp.eq.s32.totalorder %s17, 3
      %p54 = por %p52, %p53
      %p56 = scmp.ne.s32.totalorder %s39, %s55
      %p57 = scmp.eq.s32.totalorder %s17, 0
      %p58 = por %p56, %p57
      %s59 = ssub.s32 %s18, %s30
      %s60 = ssub.s32 %s19, %s26
      %s61 = sor.u32 %s59, %s60
      %p62 = scmp.eq.s32.totalorder %s61, 0
      %s64 = sadd.s32 %s63, 1
      %s65 = scalar_select %p62, %s63, %s64
      %p68 = pneg %p62
      %p69 = scmp.eq.s32.totalorder %s11, 3
      %p70 = por %p68, %p69
      %p71 = scmp.ne.s32.totalorder %s63, %s66
      %p72 = scmp.eq.s32.totalorder %s11, 0
      %p73 = por %p71, %p72
      %p74 = scmp.ne.s32.totalorder %s63, %s66
      %p75 = scmp.eq.s32.totalorder %s16, 3
      %p76 = por %p74, %p75
      %p77 = scmp.ne.s32.totalorder %s66, %s67
      %p78 = scmp.eq.s32.totalorder %s16, 0
      %p79 = por %p77, %p78
      %p80 = scmp.ne.s32.totalorder %s66, %s67
      %p81 = scmp.eq.s32.totalorder %s17, 3
      %p82 = por %p80, %p81
      %p84 = scmp.ne.s32.totalorder %s67, %s83
      %p85 = scmp.eq.s32.totalorder %s17, 0
      %p86 = por %p84, %p85
      %s87 = ssub.s32 %s18, %s30
      %s88 = ssub.s32 %s19, %s26
      %s89 = sor.u32 %s87, %s88
      %p90 = scmp.eq.s32.totalorder %s89, 0
      %s92 = sadd.s32 %s91, 1
      %s93 = scalar_select %p90, %s91, %s92
      %p96 = pneg %p90
      %p97 = scmp.eq.s32.totalorder %s11, 3
      %p98 = por %p96, %p97
      %p99 = scmp.ne.s32.totalorder %s91, %s94
      %p100 = scmp.eq.s32.totalorder %s11, 0
      %p101 = por %p99, %p100
      %p102 = scmp.ne.s32.totalorder %s91, %s94
      %p103 = scmp.eq.s32.totalorder %s16, 3
      %p104 = por %p102, %p103
      %p105 = scmp.ne.s32.totalorder %s94, %s95
      %p106 = scmp.eq.s32.totalorder %s16, 0
      %p107 = por %p105, %p106
      %p108 = scmp.ne.s32.totalorder %s94, %s95
      %p109 = scmp.eq.s32.totalorder %s17, 3
      %p110 = por %p108, %p109
      %p112 = scmp.ne.s32.totalorder %s95, %s111
      %p113 = scmp.eq.s32.totalorder %s17, 0
      %p114 = por %p112, %p113
      %s116 = sadd.s32 %s115, 1
      %p119 = scmp.eq.s32.totalorder %s11, 3
      %p120 = scmp.ne.s32.totalorder %s115, %s117
      %p121 = scmp.eq.s32.totalorder %s11, 0
      %p122 = por %p120, %p121
      %p123 = scmp.ne.s32.totalorder %s115, %s117
      %p124 = scmp.eq.s32.totalorder %s16, 3
      %p125 = por %p123, %p124
      %p126 = scmp.ne.s32.totalorder %s117, %s118
      %p127 = scmp.eq.s32.totalorder %s16, 0
      %p128 = por %p126, %p127
      %p129 = scmp.ne.s32.totalorder %s117, %s118
      %p130 = scmp.eq.s32.totalorder %s17, 3
      %p131 = por %p129, %p130
      %p133 = scmp.ne.s32.totalorder %s118, %s132
      %p134 = scmp.eq.s32.totalorder %s17, 0
      %p135 = por %p133, %p134
      %s137 = sadd.s32 %s136, 1
      %p140 = scmp.eq.s32.totalorder %s11, 3
      %p141 = scmp.ne.s32.totalorder %s136, %s138
      %p142 = scmp.eq.s32.totalorder %s11, 0
      %p143 = por %p141, %p142
      %p144 = scmp.ne.s32.totalorder %s136, %s138
      %p145 = scmp.eq.s32.totalorder %s16, 3
      %p146 = por %p144, %p145
      %p147 = scmp.ne.s32.totalorder %s138, %s139
      %p148 = scmp.eq.s32.totalorder %s16, 0
      %p149 = por %p147, %p148
      %p150 = scmp.ne.s32.totalorder %s138, %s139
      %p151 = scmp.eq.s32.totalorder %s17, 3
      %p152 = por %p150, %p151
      %p154 = scmp.ne.s32.totalorder %s139, %s153
      %p155 = scmp.eq.s32.totalorder %s17, 0
      %p156 = por %p154, %p155
      %s157 = ssub.s32 %s18, %s30
      %s158 = ssub.s32 %s19, %s26
      %s159 = sor.u32 %s157, %s158
      %p160 = scmp.eq.s32.totalorder %s159, 0
      %s162 = sadd.s32 %s161, 1
      %s163 = scalar_select %p160, %s161, %s162
      %p166 = pneg %p160
      %p167 = scmp.eq.s32.totalorder %s11, 3
      %p168 = por %p166, %p167
      %p169 = scmp.ne.s32.totalorder %s161, %s164
      %p170 = scmp.eq.s32.totalorder %s11, 0
      %p171 = por %p169, %p170
      %p172 = scmp.ne.s32.totalorder %s161, %s164
      %p173 = scmp.eq.s32.totalorder %s16, 3
      %p174 = por %p172, %p173
      %p175 = scmp.ne.s32.totalorder %s164, %s165
      %p176 = scmp.eq.s32.totalorder %s16, 0
      %p177 = por %p175, %p176
      %p178 = scmp.ne.s32.totalorder %s164, %s165
      %p179 = scmp.eq.s32.totalorder %s17, 3
      %p180 = por %p178, %p179
      %p182 = scmp.ne.s32.totalorder %s165, %s181
      %p183 = scmp.eq.s32.totalorder %s17, 0
      %p184 = por %p182, %p183
      %p185 = scmp.le.s32.totalorder 1, %s11
      %p186 = scmp.lt.s32.totalorder %s11, 5
      %p187 = pnand %p185, %p186
      %p188 = pneg %p187
      // Predicated region
      $region9: #{aff_block.5} parent=5 // pred_check
        _
      $region10: #{aff_block.5} parent=5 // pred_check_branch
        %190 = sbr.rel (%p187) target = $region12
      $region11: #{aff_block.5} parent=5 // pred_region
        %s191 = ssub.s32 %s11, 1
        // Predicated region
        $region13: #{aff_block.5} parent=11 // pred_check
          %p192 = pneg %p128
        $region14: #{aff_block.5} parent=11 // pred_check_branch
          %194 = sbr.rel (%p192) target = $region16
        $region15: #{aff_block.5} parent=11 // pred_region
          _
        $region16: #{aff_block.5} parent=11 // pred_fallthru
          _
        // Predicated region
        $region17: #{aff_block.5} parent=11 // pred_check
          %p195 = pneg %p149
        $region18: #{aff_block.5} parent=11 // pred_check_branch
          %197 = sbr.rel (%p195) target = $region20
        $region19: #{aff_block.5} parent=11 // pred_region
          _
        $region20: #{aff_block.5} parent=11 // pred_fallthru
          _
      $region12: #{aff_block.5} parent=5 // pred_fallthru
        _
      %p198 = scmp.lt.s32.totalorder %s11, 4
      // Predicated region
      $region21: #{aff_block.5} parent=5 // pred_check
        %p199 = pneg %p198
      $region22: #{aff_block.5} parent=5 // pred_check_branch
        %201 = sbr.rel (%p199) target = $region24
      $region23: #{aff_block.5} parent=5 // pred_region
        // Predicated region
        $region25: #{aff_block.5} parent=23 // pred_check
          %p202 = pneg %p45
        $region26: #{aff_block.5} parent=23 // pred_check_branch
          %204 = sbr.rel (%p202) target = $region28
        $region27: #{aff_block.5} parent=23 // pred_region
          %s205 = sand.u32 %s35, 1
          %s206 = sand.u32 %s35, 1
          %s207 = smul.addr %s206, 64
          %s208 = scalar_lea.vmem [#allocation2], %s207
          %s209 = smul.addr %s18, 16
          %s210 = sadd.s32 %s19, %s209
          %s211 = smul.addr %s210, 8
          %s212 = scalar_lea.vmem %s0, %s211
          // Predicated region
          $region29: #{aff_block.5} parent=27 // pred_check
            _
          $region30: #{aff_block.5} parent=27 // pred_check_branch
            %214 = sbr.rel (0) target = $region32
          $region31: #{aff_block.5} parent=27 // pred_region
            // Predicated region
            $region33: #{aff_block.5} parent=31 // pred_check
              _
            $region34: #{aff_block.5} parent=31 // pred_check_branch
              %216 = sbr.rel (0) target = $region36
            $region35: #{aff_block.5} parent=31 // pred_region
              // Predicated region
              $region48: #{aff_block.5} parent=35 // pred_check
                _
              $region49: #{aff_block.5} parent=35 // pred_check_branch
                %246 = sbr.rel (0) target = $region51
              $region50: #{aff_block.5} parent=35 // pred_region
                loop: start=0, step=1, limit=1
                $region52: #{aff_block.5} parent=50 // loop_pre_header
                  _
                $region53: #{aff_block.5} parent=50 // loop_header
                  %s248 = sphi 0, %s252
                  %p249 = scmp.ge.s32.totalorder %s248, 1
                  %s253 = sphi %s212, %s212
                  %s254 = sphi %s208, %s208
                $region54: #{aff_block.5} parent=50 // loop_header_branch
                  %251 = sbr.rel (%p249) target = $region58
                $region55: #{aff_block.5} parent=50 // loop_body
                  %v255 = vld [vmem:[%s253] sm:$0xff]
                  %256 = vst [vmem:[%s254] sm:$0xff] %v255
                  %v257 = vld [vmem:[%s253 + $0x10] sm:$0xff]
                  %258 = vst [vmem:[%s254 + $0x8] sm:$0xff] %v257
                  %v259 = vld [vmem:[%s253 + $0x20] sm:$0xff]
                  %260 = vst [vmem:[%s254 + $0x10] sm:$0xff] %v259
                  %v261 = vld [vmem:[%s253 + $0x30] sm:$0xff]
                  %262 = vst [vmem:[%s254 + $0x18] sm:$0xff] %v261
                  %v263 = vld [vmem:[%s253 + $0x40] sm:$0xff]
                  %264 = vst [vmem:[%s254 + $0x20] sm:$0xff] %v263
                  %v265 = vld [vmem:[%s253 + $0x50] sm:$0xff]
                  %266 = vst [vmem:[%s254 + $0x28] sm:$0xff] %v265
                  %v267 = vld [vmem:[%s253 + $0x60] sm:$0xff]
                  %268 = vst [vmem:[%s254 + $0x30] sm:$0xff] %v267
                  %v269 = vld [vmem:[%s253 + $0x70] sm:$0xff]
                  %270 = vst [vmem:[%s254 + $0x38] sm:$0xff] %v269
                $region56: #{aff_block.5} parent=50 // loop_footer
                  %s252 = sadd.s32 1, %s248
                $region57: #{aff_block.5} parent=50 // loop_footer_branch
                  %247 = sbr.rel target = $region53
                $region58: #{aff_block.5} parent=50 // loop_exit
                  _
              $region51: #{aff_block.5} parent=35 // pred_fallthru
                _
              // Predicated region
              $region59: #{aff_block.5} parent=35 // pred_check
                _
              $region60: #{aff_block.5} parent=35 // pred_check_branch
                %272 = sbr.rel target = $region62
              $region61: #{aff_block.5} parent=35 // pred_region
                _
              $region62: #{aff_block.5} parent=35 // pred_fallthru
                _
            $region36: #{aff_block.5} parent=31 // pred_fallthru
              _
            // Predicated region
            $region37: #{aff_block.5} parent=31 // pred_check
              _
            $region38: #{aff_block.5} parent=31 // pred_check_branch
              %218 = sbr.rel target = $region40
            $region39: #{aff_block.5} parent=31 // pred_region
              %s220 = ssub.s32 256, 1
              loop: start=0, step=1, limit=1
              $region41: #{aff_block.5} parent=39 // loop_pre_header
                _
              $region42: #{aff_block.5} parent=39 // loop_header
                %s222 = sphi 0, %s226
                %p223 = scmp.ge.s32.totalorder %s222, 1
                %s227 = sphi %s212, %s212
                %s228 = sphi %s208, %s208
              $region43: #{aff_block.5} parent=39 // loop_header_branch
                %225 = sbr.rel (%p223) target = $region47
              $region44: #{aff_block.5} parent=39 // loop_body
                %v229 = vld [vmem:[%s227] sm:%s220]
                %230 = vst [vmem:[%s228] sm:%s220] %v229
                %v231 = vld [vmem:[%s227 + $0x10] sm:%s220]
                %232 = vst [vmem:[%s228 + $0x8] sm:%s220] %v231
                %v233 = vld [vmem:[%s227 + $0x20] sm:%s220]
                %234 = vst [vmem:[%s228 + $0x10] sm:%s220] %v233
                %v235 = vld [vmem:[%s227 + $0x30] sm:%s220]
                %236 = vst [vmem:[%s228 + $0x18] sm:%s220] %v235
                %v237 = vld [vmem:[%s227 + $0x40] sm:%s220]
                %238 = vst [vmem:[%s228 + $0x20] sm:%s220] %v237
                %v239 = vld [vmem:[%s227 + $0x50] sm:%s220]
                %240 = vst [vmem:[%s228 + $0x28] sm:%s220] %v239
                %v241 = vld [vmem:[%s227 + $0x60] sm:%s220]
                %242 = vst [vmem:[%s228 + $0x30] sm:%s220] %v241
                %v243 = vld [vmem:[%s227 + $0x70] sm:%s220]
                %244 = vst [vmem:[%s228 + $0x38] sm:%s220] %v243
              $region45: #{aff_block.5} parent=39 // loop_footer
                %s226 = sadd.s32 1, %s222
              $region46: #{aff_block.5} parent=39 // loop_footer_branch
                %221 = sbr.rel target = $region42
              $region47: #{aff_block.5} parent=39 // loop_exit
                _
            $region40: #{aff_block.5} parent=31 // pred_fallthru
              _
          $region32: #{aff_block.5} parent=27 // pred_fallthru
            _
          %273 = vnop
        $region28: #{aff_block.5} parent=23 // pred_fallthru
          _
        // Predicated region
        $region63: #{aff_block.5} parent=23 // pred_check
          %p274 = pneg %p73
        $region64: #{aff_block.5} parent=23 // pred_check_branch
          %276 = sbr.rel (%p274) target = $region66
        $region65: #{aff_block.5} parent=23 // pred_region
          %p277 = scmp.lt.s32.totalorder %s18, 1
          %s278 = scalar_select %p277, %s18, 1
          %p279 = scmp.lt.s32.totalorder %s19, 1
          %s280 = scalar_select %p279, %s19, 1
          %s281 = smul.addr %s280, 8
          %s282 = smul.addr %s278, 16
          %s283 = sadd.s32 %s281, %s282
          %s284 = scalar_lea.vmem %s1, %s283
        $region66: #{aff_block.5} parent=23 // pred_fallthru
          _
        // Predicated region
        $region67: #{aff_block.5} parent=23 // pred_check
          %p285 = pneg %p101
        $region68: #{aff_block.5} parent=23 // pred_check_branch
          %287 = sbr.rel (%p285) target = $region70
        $region69: #{aff_block.5} parent=23 // pred_region
          %p288 = scmp.lt.s32.totalorder %s18, 1
          %s289 = scalar_select %p288, %s18, 1
          %p290 = scmp.lt.s32.totalorder %s19, 1
          %s291 = scalar_select %p290, %s19, 1
          %s292 = smul.addr %s291, 8
          %s293 = smul.addr %s289, 16
          %s294 = sadd.s32 %s292, %s293
          %s295 = scalar_lea.vmem %s2, %s294
        $region70: #{aff_block.5} parent=23 // pred_fallthru
          _
      $region24: #{aff_block.5} parent=5 // pred_fallthru
        _
      %p296 = scmp.le.s32.totalorder 1, %s11
      %p297 = scmp.lt.s32.totalorder %s11, 5
      %p298 = pnand %p296, %p297
      %p299 = pneg %p298
      // Predicated region
      $region71: #{aff_block.5} parent=5 // pred_check
        _
      $region72: #{aff_block.5} parent=5 // pred_check_branch
        %301 = sbr.rel (%p298) target = $region74
      $region73: #{aff_block.5} parent=5 // pred_region
        %s302 = ssub.s32 %s11, 1
        %s303 = sand.u32 %s38, 1
        %s304 = sand.u32 %s38, 1
        %s305 = smul.addr %s304, 64
        %s306 = scalar_lea.vmem [#allocation2], %s305
        // Predicated region
        $region75: #{aff_block.5} parent=73 // pred_check
          %p307 = pneg %p51
        $region76: #{aff_block.5} parent=73 // pred_check_branch
          %309 = sbr.rel (%p307) target = $region78
        $region77: #{aff_block.5} parent=73 // pred_region
          _
        $region78: #{aff_block.5} parent=73 // pred_fallthru
          _
        %s310 = sand.u32 %s38, 1
        %s311 = sand.u32 %s38, 1
        %s312 = smul.addr %s311, 64
        %s313 = scalar_lea.vmem [#allocation2], %s312
        %p314 = pneg %p51
        %p315 = pneg %p48
        %p316 = scmp.lt.s32.totalorder %s20, 1
        %s317 = scalar_select %p316, %s20, 1
        %p318 = scmp.lt.s32.totalorder %s21, 1
        %s319 = scalar_select %p318, %s21, 1
        %s320 = smul.addr %s319, 8
        %s321 = smul.addr %s317, 16
        %s322 = sadd.s32 %s320, %s321
        %s323 = scalar_lea.vmem %s1, %s322
        %p324 = pneg %p79
        %p325 = pneg %p76
        %p326 = scmp.lt.s32.totalorder %s20, 1
        %s327 = scalar_select %p326, %s20, 1
        %p328 = scmp.lt.s32.totalorder %s21, 1
        %s329 = scalar_select %p328, %s21, 1
        %s330 = smul.addr %s329, 8
        %s331 = smul.addr %s327, 16
        %s332 = sadd.s32 %s330, %s331
        %s333 = scalar_lea.vmem %s2, %s332
        %p334 = pneg %p107
        %p335 = pneg %p104
        %p336 = pneg %p128
        %p337 = pneg %p125
        %p338 = pneg %p149
        %p339 = pneg %p146
        %p340 = pneg %p177
        %p341 = pneg %p174
        %s342 = sand.u32 %s164, 1
        %s343 = sand.u32 %s164, 1
        %s344 = smul.addr %s343, 32
        %s345 = scalar_lea.vmem [#allocation3], %s344
        %p346 = scmp.lt.s32.totalorder %s20, 1
        %s347 = scalar_select %p346, %s20, 1
        %p348 = scmp.lt.s32.totalorder %s21, 1
        %s349 = scalar_select %p348, %s21, 1
        %s350 = smul.addr %s349, 8
        %s351 = smul.addr %s347, 16
        %s352 = sadd.s32 %s350, %s351
        %s353 = scalar_lea.vmem %s1, %s352
        %p354 = scmp.lt.s32.totalorder %s20, 1
        %s355 = scalar_select %p354, %s20, 1
        %p356 = scmp.lt.s32.totalorder %s21, 1
        %s357 = scalar_select %p356, %s21, 1
        %s358 = smul.addr %s357, 8
        %s359 = smul.addr %s355, 16
        %s360 = sadd.s32 %s358, %s359
        %s361 = scalar_lea.vmem %s2, %s360
        %v362 = vld [vmem:[%s306] sm:$0xff]
        %v363 = vld [vmem:[%s306 + $0x8] sm:$0xff]
        %v364 = vld [vmem:[%s306 + $0x10] sm:$0xff]
        %v365 = vld [vmem:[%s306 + $0x18] sm:$0xff]
        %v366 = vld [vmem:[%s306 + $0x20] sm:$0xff]
        %v367 = vld [vmem:[%s306 + $0x28] sm:$0xff]
        %v368 = vld [vmem:[%s306 + $0x30] sm:$0xff]
        %v369 = vld [vmem:[%s306 + $0x38] sm:$0xff]
        %v370 = vld [vmem:[%s353] sm:$0x1]
        %v371 = vld [vmem:[%s353 + $0x1] sm:$0x1]
        %v372 = vld [vmem:[%s353 + $0x2] sm:$0x1]
        %v373 = vld [vmem:[%s353 + $0x3] sm:$0x1]
        %v374 = vld [vmem:[%s353 + $0x4] sm:$0x1]
        %v375 = vld [vmem:[%s353 + $0x5] sm:$0x1]
        %v376 = vld [vmem:[%s353 + $0x6] sm:$0x1]
        %v377 = vld [vmem:[%s353 + $0x7] sm:$0x1]
        %v378 = vld [vmem:[%s361] sm:$0x1]
        %v379 = vld [vmem:[%s361 + $0x1] sm:$0x1]
        %v380 = vld [vmem:[%s361 + $0x2] sm:$0x1]
        %v381 = vld [vmem:[%s361 + $0x3] sm:$0x1]
        %v382 = vld [vmem:[%s361 + $0x4] sm:$0x1]
        %v383 = vld [vmem:[%s361 + $0x5] sm:$0x1]
        %v384 = vld [vmem:[%s361 + $0x6] sm:$0x1]
        %v385 = vld [vmem:[%s361 + $0x7] sm:$0x1]
        %v394 = vrot.slane %v362, 7
        %v395 = vrot.slane %v363, 7
        %v396 = vrot.slane %v364, 7
        %v397 = vrot.slane %v365, 7
        %v398 = vrot.slane %v366, 7
        %v399 = vrot.slane %v367, 7
        %v400 = vrot.slane %v368, 7
        %v401 = vrot.slane %v369, 7
        %v418 = vperm.slane %v378, 0
        %v419 = vperm.slane %v379, 0
        %v420 = vperm.slane %v380, 0
        %v421 = vperm.slane %v381, 0
        %v422 = vperm.slane %v382, 0
        %v423 = vperm.slane %v383, 0
        %v424 = vperm.slane %v384, 0
        %v425 = vperm.slane %v385, 0
        %vm434 = vcmask 1040384
        %v435 = vsel %vm434, %v370, %v394
        %v436 = vsel %vm434, %v371, %v395
        %v437 = vsel %vm434, %v372, %v396
        %v438 = vsel %vm434, %v373, %v397
        %v439 = vsel %vm434, %v374, %v398
        %v440 = vsel %vm434, %v375, %v399
        %v441 = vsel %vm434, %v376, %v400
        %v442 = vsel %vm434, %v377, %v401
        %v443 = vsel %vm434, %v394, %v418
        %v444 = vsel %vm434, %v395, %v419
        %v445 = vsel %vm434, %v396, %v420
        %v446 = vsel %vm434, %v397, %v421
        %v447 = vsel %vm434, %v398, %v422
        %v448 = vsel %vm434, %v399, %v423
        %v449 = vsel %vm434, %v400, %v424
        %v450 = vsel %vm434, %v401, %v425
        %467 = vrot.lane.b32.xlu0 %v435, 1
        %v468 = vpop.permute.xlu0 %467
        %469 = vrot.lane.b32.xlu0 %v443, 1
        %v470 = vpop.permute.xlu0 %469
        %471 = vrot.lane.b32.xlu0 %v436, 1
        %v472 = vpop.permute.xlu0 %471
        %473 = vrot.lane.b32.xlu0 %v444, 1
        %v474 = vpop.permute.xlu0 %473
        %475 = vrot.lane.b32.xlu0 %v437, 1
        %v476 = vpop.permute.xlu0 %475
        %477 = vrot.lane.b32.xlu0 %v445, 1
        %v478 = vpop.permute.xlu0 %477
        %479 = vrot.lane.b32.xlu0 %v438, 1
        %v480 = vpop.permute.xlu0 %479
        %481 = vrot.lane.b32.xlu0 %v446, 1
        %v482 = vpop.permute.xlu0 %481
        %483 = vrot.lane.b32.xlu0 %v439, 1
        %v484 = vpop.permute.xlu0 %483
        %485 = vrot.lane.b32.xlu0 %v447, 1
        %v486 = vpop.permute.xlu0 %485
        %487 = vrot.lane.b32.xlu0 %v440, 1
        %v488 = vpop.permute.xlu0 %487
        %489 = vrot.lane.b32.xlu0 %v448, 1
        %v490 = vpop.permute.xlu0 %489
        %491 = vrot.lane.b32.xlu0 %v441, 1
        %v492 = vpop.permute.xlu0 %491
        %493 = vrot.lane.b32.xlu0 %v449, 1
        %v494 = vpop.permute.xlu0 %493
        %495 = vrot.lane.b32.xlu0 %v442, 1
        %v496 = vpop.permute.xlu0 %495
        %497 = vrot.lane.b32.xlu0 %v450, 1
        %v498 = vpop.permute.xlu0 %497
        %vm515 = vcmask 7168
        %v516 = vsel %vm515, 0.0, %v468
        %v517 = vsel %vm515, 0.0, %v470
        %v518 = vsel %vm515, 0.0, %v472
        %v519 = vsel %vm515, 0.0, %v474
        %v520 = vsel %vm515, 0.0, %v476
        %v521 = vsel %vm515, 0.0, %v478
        %v522 = vsel %vm515, 0.0, %v480
        %v523 = vsel %vm515, 0.0, %v482
        %v524 = vsel %vm515, 0.0, %v484
        %v525 = vsel %vm515, 0.0, %v486
        %v526 = vsel %vm515, 0.0, %v488
        %v527 = vsel %vm515, 0.0, %v490
        %v528 = vsel %vm515, 0.0, %v492
        %v529 = vsel %vm515, 0.0, %v494
        %v530 = vsel %vm515, 0.0, %v496
        %v531 = vsel %vm515, 0.0, %v498
        %vm532 = vcmask 138240
        %v533 = vsel %vm532, %v516, 0.0
        %v534 = vsel %vm532, %v517, 0.0
        %v535 = vsel %vm532, %v518, 0.0
        %v536 = vsel %vm532, %v519, 0.0
        %v537 = vsel %vm532, %v520, 0.0
        %v538 = vsel %vm532, %v521, 0.0
        %v539 = vsel %vm532, %v522, 0.0
        %v540 = vsel %vm532, %v523, 0.0
        %v541 = vsel %vm532, %v524, 0.0
        %v542 = vsel %vm532, %v525, 0.0
        %v543 = vsel %vm532, %v526, 0.0
        %v544 = vsel %vm532, %v527, 0.0
        %v545 = vsel %vm532, %v528, 0.0
        %v546 = vsel %vm532, %v529, 0.0
        %v547 = vsel %vm532, %v530, 0.0
        %v548 = vsel %vm532, %v531, 0.0
        %v549 = vld [vmem:[%s3] sm:$0x1]
        %v550 = vld [vmem:[%s3 + $0x1] sm:$0x1]
        %v551 = vld [vmem:[%s3 + $0x2] sm:$0x1]
        %v552 = vld [vmem:[%s3 + $0x3] sm:$0x1]
        %v553 = vld [vmem:[%s3 + $0x4] sm:$0x1]
        %v554 = vld [vmem:[%s3 + $0x5] sm:$0x1]
        %v555 = vld [vmem:[%s3 + $0x6] sm:$0x1]
        %v556 = vld [vmem:[%s3 + $0x7] sm:$0x1]
        %v557 = vld [vmem:[%s3 + $0x8] sm:$0x1]
        %v558 = vld [vmem:[%s3 + $0x9] sm:$0x1]
        %v559 = vld [vmem:[%s3 + $0xa] sm:$0x1]
        %v560 = vld [vmem:[%s3 + $0xb] sm:$0x1]
        %v561 = vld [vmem:[%s3 + $0xc] sm:$0x1]
        %v562 = vld [vmem:[%s3 + $0xd] sm:$0x1]
        %v563 = vld [vmem:[%s3 + $0xe] sm:$0x1]
        %v564 = vld [vmem:[%s3 + $0xf] sm:$0x1]
        %v565 = vld [vmem:[%s3 + $0x10] sm:$0x1]
        %v566 = vld [vmem:[%s3 + $0x11] sm:$0x1]
        %v567 = vld [vmem:[%s3 + $0x12] sm:$0x1]
        %v568 = vld [vmem:[%s3 + $0x13] sm:$0x1]
        %v569 = vld [vmem:[%s3 + $0x14] sm:$0x1]
        %v570 = vld [vmem:[%s3 + $0x15] sm:$0x1]
        %v571 = vld [vmem:[%s3 + $0x16] sm:$0x1]
        %v572 = vld [vmem:[%s3 + $0x17] sm:$0x1]
        %v573 = vld [vmem:[%s3 + $0x18] sm:$0x1]
        %v574 = vld [vmem:[%s3 + $0x19] sm:$0x1]
        %v575 = vld [vmem:[%s3 + $0x1a] sm:$0x1]
        %v576 = vld [vmem:[%s3 + $0x1b] sm:$0x1]
        %v577 = vld [vmem:[%s3 + $0x1c] sm:$0x1]
        %v578 = vld [vmem:[%s3 + $0x1d] sm:$0x1]
        %v579 = vld [vmem:[%s3 + $0x1e] sm:$0x1]
        %v580 = vld [vmem:[%s3 + $0x1f] sm:$0x1]
        %v581 = vld [vmem:[%s3 + $0x20] sm:$0x1]
        %v582 = vld [vmem:[%s3 + $0x21] sm:$0x1]
        %v583 = vld [vmem:[%s3 + $0x22] sm:$0x1]
        %v584 = vld [vmem:[%s3 + $0x23] sm:$0x1]
        %v585 = vld [vmem:[%s3 + $0x24] sm:$0x1]
        %v586 = vld [vmem:[%s3 + $0x25] sm:$0x1]
        %v587 = vld [vmem:[%s3 + $0x26] sm:$0x1]
        %v588 = vld [vmem:[%s3 + $0x27] sm:$0x1]
        %v589 = vld [vmem:[%s3 + $0x28] sm:$0x1]
        %v590 = vld [vmem:[%s3 + $0x29] sm:$0x1]
        %v591 = vld [vmem:[%s3 + $0x2a] sm:$0x1]
        %v592 = vld [vmem:[%s3 + $0x2b] sm:$0x1]
        %v593 = vld [vmem:[%s3 + $0x2c] sm:$0x1]
        %v594 = vld [vmem:[%s3 + $0x2d] sm:$0x1]
        %v595 = vld [vmem:[%s3 + $0x2e] sm:$0x1]
        %v596 = vld [vmem:[%s3 + $0x2f] sm:$0x1]
        %v597 = vld [vmem:[%s3 + $0x30] sm:$0x1]
        %v598 = vld [vmem:[%s3 + $0x31] sm:$0x1]
        %v599 = vld [vmem:[%s3 + $0x32] sm:$0x1]
        %v600 = vld [vmem:[%s3 + $0x33] sm:$0x1]
        %v601 = vld [vmem:[%s3 + $0x34] sm:$0x1]
        %v602 = vld [vmem:[%s3 + $0x35] sm:$0x1]
        %v603 = vld [vmem:[%s3 + $0x36] sm:$0x1]
        %v604 = vld [vmem:[%s3 + $0x37] sm:$0x1]
        %v605 = vld [vmem:[%s3 + $0x38] sm:$0x1]
        %v606 = vld [vmem:[%s3 + $0x39] sm:$0x1]
        %v607 = vld [vmem:[%s3 + $0x3a] sm:$0x1]
        %v608 = vld [vmem:[%s3 + $0x3b] sm:$0x1]
        %v609 = vld [vmem:[%s3 + $0x3c] sm:$0x1]
        %v610 = vld [vmem:[%s3 + $0x3d] sm:$0x1]
        %v611 = vld [vmem:[%s3 + $0x3e] sm:$0x1]
        %v612 = vld [vmem:[%s3 + $0x3f] sm:$0x1]
        %v613 = vld [vmem:[%s3 + $0x40] sm:$0x1]
        %v614 = vld [vmem:[%s3 + $0x41] sm:$0x1]
        %v615 = vld [vmem:[%s3 + $0x42] sm:$0x1]
        %v616 = vld [vmem:[%s3 + $0x43] sm:$0x1]
        %v617 = vld [vmem:[%s3 + $0x44] sm:$0x1]
        %v618 = vld [vmem:[%s3 + $0x45] sm:$0x1]
        %v619 = vld [vmem:[%s3 + $0x46] sm:$0x1]
        %v620 = vld [vmem:[%s3 + $0x47] sm:$0x1]
        %v629 = vperm.slane %v549, 0
        %v630 = vperm.slane %v550, 0
        %v631 = vperm.slane %v551, 0
        %v632 = vperm.slane %v552, 0
        %v633 = vperm.slane %v553, 0
        %v634 = vperm.slane %v554, 0
        %v635 = vperm.slane %v555, 0
        %v636 = vperm.slane %v556, 0
        %637 = vset.pattern.permute.xlu0 0
        %638 = vperm.xlu0 %637, %v629
        %v639 = vpop.permute.xlu0 %638
        %641 = vset.pattern.permute.xlu0 0
        %642 = vperm.xlu0 %641, %v630
        %v643 = vpop.permute.xlu0 %642
        %645 = vset.pattern.permute.xlu0 0
        %646 = vperm.xlu0 %645, %v631
        %v647 = vpop.permute.xlu0 %646
        %649 = vset.pattern.permute.xlu0 0
        %650 = vperm.xlu0 %649, %v632
        %v651 = vpop.permute.xlu0 %650
        %653 = vset.pattern.permute.xlu0 0
        %654 = vperm.xlu0 %653, %v633
        %v655 = vpop.permute.xlu0 %654
        %657 = vset.pattern.permute.xlu0 0
        %658 = vperm.xlu0 %657, %v634
        %v659 = vpop.permute.xlu0 %658
        %661 = vset.pattern.permute.xlu0 0
        %662 = vperm.xlu0 %661, %v635
        %v663 = vpop.permute.xlu0 %662
        %665 = vset.pattern.permute.xlu0 0
        %666 = vperm.xlu0 %665, %v636
        %v667 = vpop.permute.xlu0 %666
        %v669 = vmul.f32 %v533, %v639
        %v670 = vmul.f32 %v535, %v643
        %v671 = vmul.f32 %v537, %v647
        %v672 = vmul.f32 %v539, %v651
        %v673 = vmul.f32 %v541, %v655
        %v674 = vmul.f32 %v543, %v659
        %v675 = vmul.f32 %v545, %v663
        %v676 = vmul.f32 %v547, %v667
        %v677 = vadd.f32 %v669, 0.0
        %v678 = vadd.f32 %v670, 0.0
        %v679 = vadd.f32 %v671, 0.0
        %v680 = vadd.f32 %v672, 0.0
        %v681 = vadd.f32 %v673, 0.0
        %v682 = vadd.f32 %v674, 0.0
        %v683 = vadd.f32 %v675, 0.0
        %v684 = vadd.f32 %v676, 0.0
        %v693 = vperm.slane %v557, 0
        %v694 = vperm.slane %v558, 0
        %v695 = vperm.slane %v559, 0
        %v696 = vperm.slane %v560, 0
        %v697 = vperm.slane %v561, 0
        %v698 = vperm.slane %v562, 0
        %v699 = vperm.slane %v563, 0
        %v700 = vperm.slane %v564, 0
        %701 = vset.pattern.permute.xlu0 0
        %702 = vperm.xlu0 %701, %v693
        %v703 = vpop.permute.xlu0 %702
        %705 = vset.pattern.permute.xlu0 0
        %706 = vperm.xlu0 %705, %v694
        %v707 = vpop.permute.xlu0 %706
        %709 = vset.pattern.permute.xlu0 0
        %710 = vperm.xlu0 %709, %v695
        %v711 = vpop.permute.xlu0 %710
        %713 = vset.pattern.permute.xlu0 0
        %714 = vperm.xlu0 %713, %v696
        %v715 = vpop.permute.xlu0 %714
        %717 = vset.pattern.permute.xlu0 0
        %718 = vperm.xlu0 %717, %v697
        %v719 = vpop.permute.xlu0 %718
        %721 = vset.pattern.permute.xlu0 0
        %722 = vperm.xlu0 %721, %v698
        %v723 = vpop.permute.xlu0 %722
        %725 = vset.pattern.permute.xlu0 0
        %726 = vperm.xlu0 %725, %v699
        %v727 = vpop.permute.xlu0 %726
        %729 = vset.pattern.permute.xlu0 0
        %730 = vperm.xlu0 %729, %v700
        %v731 = vpop.permute.xlu0 %730
        %v733 = vmul.f32 %v533, %v703
        %v734 = vmul.f32 %v535, %v707
        %v735 = vmul.f32 %v537, %v711
        %v736 = vmul.f32 %v539, %v715
        %v737 = vmul.f32 %v541, %v719
        %v738 = vmul.f32 %v543, %v723
        %v739 = vmul.f32 %v545, %v727
        %v740 = vmul.f32 %v547, %v731
        %749 = vrot.lane.b32.xlu0 %v733, 127
        %v750 = vpop.permute.xlu0 %749
        %751 = vrot.lane.b32.xlu0 %v734, 127
        %v752 = vpop.permute.xlu0 %751
        %753 = vrot.lane.b32.xlu0 %v735, 127
        %v754 = vpop.permute.xlu0 %753
        %755 = vrot.lane.b32.xlu0 %v736, 127
        %v756 = vpop.permute.xlu0 %755
        %757 = vrot.lane.b32.xlu0 %v737, 127
        %v758 = vpop.permute.xlu0 %757
        %759 = vrot.lane.b32.xlu0 %v738, 127
        %v760 = vpop.permute.xlu0 %759
        %761 = vrot.lane.b32.xlu0 %v739, 127
        %v762 = vpop.permute.xlu0 %761
        %763 = vrot.lane.b32.xlu0 %v740, 127
        %v764 = vpop.permute.xlu0 %763
        %v773 = vadd.f32 %v677, %v750
        %v774 = vadd.f32 %v678, %v752
        %v775 = vadd.f32 %v679, %v754
        %v776 = vadd.f32 %v680, %v756
        %v777 = vadd.f32 %v681, %v758
        %v778 = vadd.f32 %v682, %v760
        %v779 = vadd.f32 %v683, %v762
        %v780 = vadd.f32 %v684, %v764
        %v789 = vperm.slane %v565, 0
        %v790 = vperm.slane %v566, 0
        %v791 = vperm.slane %v567, 0
        %v792 = vperm.slane %v568, 0
        %v793 = vperm.slane %v569, 0
        %v794 = vperm.slane %v570, 0
        %v795 = vperm.slane %v571, 0
        %v796 = vperm.slane %v572, 0
        %797 = vset.pattern.permute.xlu0 0
        %798 = vperm.xlu0 %797, %v789
        %v799 = vpop.permute.xlu0 %798
        %801 = vset.pattern.permute.xlu0 0
        %802 = vperm.xlu0 %801, %v790
        %v803 = vpop.permute.xlu0 %802
        %805 = vset.pattern.permute.xlu0 0
        %806 = vperm.xlu0 %805, %v791
        %v807 = vpop.permute.xlu0 %806
        %809 = vset.pattern.permute.xlu0 0
        %810 = vperm.xlu0 %809, %v792
        %v811 = vpop.permute.xlu0 %810
        %813 = vset.pattern.permute.xlu0 0
        %814 = vperm.xlu0 %813, %v793
        %v815 = vpop.permute.xlu0 %814
        %817 = vset.pattern.permute.xlu0 0
        %818 = vperm.xlu0 %817, %v794
        %v819 = vpop.permute.xlu0 %818
        %821 = vset.pattern.permute.xlu0 0
        %822 = vperm.xlu0 %821, %v795
        %v823 = vpop.permute.xlu0 %822
        %825 = vset.pattern.permute.xlu0 0
        %826 = vperm.xlu0 %825, %v796
        %v827 = vpop.permute.xlu0 %826
        %v829 = vmul.f32 %v533, %v799
        %v830 = vmul.f32 %v535, %v803
        %v831 = vmul.f32 %v537, %v807
        %v832 = vmul.f32 %v539, %v811
        %v833 = vmul.f32 %v541, %v815
        %v834 = vmul.f32 %v543, %v819
        %v835 = vmul.f32 %v545, %v823
        %v836 = vmul.f32 %v547, %v827
        %845 = vrot.lane.b32.xlu0 %v829, 126
        %v846 = vpop.permute.xlu0 %845
        %847 = vrot.lane.b32.xlu0 %v830, 126
        %v848 = vpop.permute.xlu0 %847
        %849 = vrot.lane.b32.xlu0 %v831, 126
        %v850 = vpop.permute.xlu0 %849
        %851 = vrot.lane.b32.xlu0 %v832, 126
        %v852 = vpop.permute.xlu0 %851
        %853 = vrot.lane.b32.xlu0 %v833, 126
        %v854 = vpop.permute.xlu0 %853
        %855 = vrot.lane.b32.xlu0 %v834, 126
        %v856 = vpop.permute.xlu0 %855
        %857 = vrot.lane.b32.xlu0 %v835, 126
        %v858 = vpop.permute.xlu0 %857
        %859 = vrot.lane.b32.xlu0 %v836, 126
        %v860 = vpop.permute.xlu0 %859
        %v869 = vadd.f32 %v773, %v846
        %v870 = vadd.f32 %v774, %v848
        %v871 = vadd.f32 %v775, %v850
        %v872 = vadd.f32 %v776, %v852
        %v873 = vadd.f32 %v777, %v854
        %v874 = vadd.f32 %v778, %v856
        %v875 = vadd.f32 %v779, %v858
        %v876 = vadd.f32 %v780, %v860
        %v885 = vperm.slane %v573, 0
        %v886 = vperm.slane %v574, 0
        %v887 = vperm.slane %v575, 0
        %v888 = vperm.slane %v576, 0
        %v889 = vperm.slane %v577, 0
        %v890 = vperm.slane %v578, 0
        %v891 = vperm.slane %v579, 0
        %v892 = vperm.slane %v580, 0
        %893 = vset.pattern.permute.xlu0 0
        %894 = vperm.xlu0 %893, %v885
        %v895 = vpop.permute.xlu0 %894
        %897 = vset.pattern.permute.xlu0 0
        %898 = vperm.xlu0 %897, %v886
        %v899 = vpop.permute.xlu0 %898
        %901 = vset.pattern.permute.xlu0 0
        %902 = vperm.xlu0 %901, %v887
        %v903 = vpop.permute.xlu0 %902
        %905 = vset.pattern.permute.xlu0 0
        %906 = vperm.xlu0 %905, %v888
        %v907 = vpop.permute.xlu0 %906
        %909 = vset.pattern.permute.xlu0 0
        %910 = vperm.xlu0 %909, %v889
        %v911 = vpop.permute.xlu0 %910
        %913 = vset.pattern.permute.xlu0 0
        %914 = vperm.xlu0 %913, %v890
        %v915 = vpop.permute.xlu0 %914
        %917 = vset.pattern.permute.xlu0 0
        %918 = vperm.xlu0 %917, %v891
        %v919 = vpop.permute.xlu0 %918
        %921 = vset.pattern.permute.xlu0 0
        %922 = vperm.xlu0 %921, %v892
        %v923 = vpop.permute.xlu0 %922
        %v925 = vmul.f32 %v533, %v895
        %v926 = vmul.f32 %v534, %v895
        %v927 = vmul.f32 %v535, %v899
        %v928 = vmul.f32 %v536, %v899
        %v929 = vmul.f32 %v537, %v903
        %v930 = vmul.f32 %v538, %v903
        %v931 = vmul.f32 %v539, %v907
        %v932 = vmul.f32 %v540, %v907
        %v933 = vmul.f32 %v541, %v911
        %v934 = vmul.f32 %v542, %v911
        %v935 = vmul.f32 %v543, %v915
        %v936 = vmul.f32 %v544, %v915
        %v937 = vmul.f32 %v545, %v919
        %v938 = vmul.f32 %v546, %v919
        %v939 = vmul.f32 %v547, %v923
        %v940 = vmul.f32 %v548, %v923
        %vm957 = vcmask 1046528
        %v958 = vrot.slane %v925, 1
        %v959 = vrot.slane %v926, 1
        %v960 = vsel %vm957, %v958, %v959
        %v961 = vrot.slane %v927, 1
        %v962 = vrot.slane %v928, 1
        %v963 = vsel %vm957, %v961, %v962
        %v964 = vrot.slane %v929, 1
        %v965 = vrot.slane %v930, 1
        %v966 = vsel %vm957, %v964, %v965
        %v967 = vrot.slane %v931, 1
        %v968 = vrot.slane %v932, 1
        %v969 = vsel %vm957, %v967, %v968
        %v970 = vrot.slane %v933, 1
        %v971 = vrot.slane %v934, 1
        %v972 = vsel %vm957, %v970, %v971
        %v973 = vrot.slane %v935, 1
        %v974 = vrot.slane %v936, 1
        %v975 = vsel %vm957, %v973, %v974
        %v976 = vrot.slane %v937, 1
        %v977 = vrot.slane %v938, 1
        %v978 = vsel %vm957, %v976, %v977
        %v979 = vrot.slane %v939, 1
        %v980 = vrot.slane %v940, 1
        %v981 = vsel %vm957, %v979, %v980
        %v990 = vadd.f32 %v869, %v960
        %v991 = vadd.f32 %v870, %v963
        %v992 = vadd.f32 %v871, %v966
        %v993 = vadd.f32 %v872, %v969
        %v994 = vadd.f32 %v873, %v972
        %v995 = vadd.f32 %v874, %v975
        %v996 = vadd.f32 %v875, %v978
        %v997 = vadd.f32 %v876, %v981
        %v1006 = vperm.slane %v581, 0
        %v1007 = vperm.slane %v582, 0
        %v1008 = vperm.slane %v583, 0
        %v1009 = vperm.slane %v584, 0
        %v1010 = vperm.slane %v585, 0
        %v1011 = vperm.slane %v586, 0
        %v1012 = vperm.slane %v587, 0
        %v1013 = vperm.slane %v588, 0
        %1014 = vset.pattern.permute.xlu0 0
        %1015 = vperm.xlu0 %1014, %v1006
        %v1016 = vpop.permute.xlu0 %1015
        %1018 = vset.pattern.permute.xlu0 0
        %1019 = vperm.xlu0 %1018, %v1007
        %v1020 = vpop.permute.xlu0 %1019
        %1022 = vset.pattern.permute.xlu0 0
        %1023 = vperm.xlu0 %1022, %v1008
        %v1024 = vpop.permute.xlu0 %1023
        %1026 = vset.pattern.permute.xlu0 0
        %1027 = vperm.xlu0 %1026, %v1009
        %v1028 = vpop.permute.xlu0 %1027
        %1030 = vset.pattern.permute.xlu0 0
        %1031 = vperm.xlu0 %1030, %v1010
        %v1032 = vpop.permute.xlu0 %1031
        %1034 = vset.pattern.permute.xlu0 0
        %1035 = vperm.xlu0 %1034, %v1011
        %v1036 = vpop.permute.xlu0 %1035
        %1038 = vset.pattern.permute.xlu0 0
        %1039 = vperm.xlu0 %1038, %v1012
        %v1040 = vpop.permute.xlu0 %1039
        %1042 = vset.pattern.permute.xlu0 0
        %1043 = vperm.xlu0 %1042, %v1013
        %v1044 = vpop.permute.xlu0 %1043
        %v1046 = vmul.f32 %v533, %v1016
        %v1047 = vmul.f32 %v534, %v1016
        %v1048 = vmul.f32 %v535, %v1020
        %v1049 = vmul.f32 %v536, %v1020
        %v1050 = vmul.f32 %v537, %v1024
        %v1051 = vmul.f32 %v538, %v1024
        %v1052 = vmul.f32 %v539, %v1028
        %v1053 = vmul.f32 %v540, %v1028
        %v1054 = vmul.f32 %v541, %v1032
        %v1055 = vmul.f32 %v542, %v1032
        %v1056 = vmul.f32 %v543, %v1036
        %v1057 = vmul.f32 %v544, %v1036
        %v1058 = vmul.f32 %v545, %v1040
        %v1059 = vmul.f32 %v546, %v1040
        %v1060 = vmul.f32 %v547, %v1044
        %v1061 = vmul.f32 %v548, %v1044
        %v1078 = vrot.slane %v1046, 1
        %v1079 = vrot.slane %v1047, 1
        %v1080 = vsel %vm957, %v1078, %v1079
        %v1081 = vrot.slane %v1048, 1
        %v1082 = vrot.slane %v1049, 1
        %v1083 = vsel %vm957, %v1081, %v1082
        %v1084 = vrot.slane %v1050, 1
        %v1085 = vrot.slane %v1051, 1
        %v1086 = vsel %vm957, %v1084, %v1085
        %v1087 = vrot.slane %v1052, 1
        %v1088 = vrot.slane %v1053, 1
        %v1089 = vsel %vm957, %v1087, %v1088
        %v1090 = vrot.slane %v1054, 1
        %v1091 = vrot.slane %v1055, 1
        %v1092 = vsel %vm957, %v1090, %v1091
        %v1093 = vrot.slane %v1056, 1
        %v1094 = vrot.slane %v1057, 1
        %v1095 = vsel %vm957, %v1093, %v1094
        %v1096 = vrot.slane %v1058, 1
        %v1097 = vrot.slane %v1059, 1
        %v1098 = vsel %vm957, %v1096, %v1097
        %v1099 = vrot.slane %v1060, 1
        %v1100 = vrot.slane %v1061, 1
        %v1101 = vsel %vm957, %v1099, %v1100
        %1102 = vrot.lane.b32.xlu0 %v1080, 127
        %v1103 = vpop.permute.xlu0 %1102
        %1104 = vrot.lane.b32.xlu0 %v1083, 127
        %v1105 = vpop.permute.xlu0 %1104
        %1106 = vrot.lane.b32.xlu0 %v1086, 127
        %v1107 = vpop.permute.xlu0 %1106
        %1108 = vrot.lane.b32.xlu0 %v1089, 127
        %v1109 = vpop.permute.xlu0 %1108
        %1110 = vrot.lane.b32.xlu0 %v1092, 127
        %v1111 = vpop.permute.xlu0 %1110
        %1112 = vrot.lane.b32.xlu0 %v1095, 127
        %v1113 = vpop.permute.xlu0 %1112
        %1114 = vrot.lane.b32.xlu0 %v1098, 127
        %v1115 = vpop.permute.xlu0 %1114
        %1116 = vrot.lane.b32.xlu0 %v1101, 127
        %v1117 = vpop.permute.xlu0 %1116
        %v1126 = vadd.f32 %v990, %v1103
        %v1127 = vadd.f32 %v991, %v1105
        %v1128 = vadd.f32 %v992, %v1107
        %v1129 = vadd.f32 %v993, %v1109
        %v1130 = vadd.f32 %v994, %v1111
        %v1131 = vadd.f32 %v995, %v1113
        %v1132 = vadd.f32 %v996, %v1115
        %v1133 = vadd.f32 %v997, %v1117
        %v1142 = vperm.slane %v589, 0
        %v1143 = vperm.slane %v590, 0
        %v1144 = vperm.slane %v591, 0
        %v1145 = vperm.slane %v592, 0
        %v1146 = vperm.slane %v593, 0
        %v1147 = vperm.slane %v594, 0
        %v1148 = vperm.slane %v595, 0
        %v1149 = vperm.slane %v596, 0
        %1150 = vset.pattern.permute.xlu0 0
        %1151 = vperm.xlu0 %1150, %v1142
        %v1152 = vpop.permute.xlu0 %1151
        %1154 = vset.pattern.permute.xlu0 0
        %1155 = vperm.xlu0 %1154, %v1143
        %v1156 = vpop.permute.xlu0 %1155
        %1158 = vset.pattern.permute.xlu0 0
        %1159 = vperm.xlu0 %1158, %v1144
        %v1160 = vpop.permute.xlu0 %1159
        %1162 = vset.pattern.permute.xlu0 0
        %1163 = vperm.xlu0 %1162, %v1145
        %v1164 = vpop.permute.xlu0 %1163
        %1166 = vset.pattern.permute.xlu0 0
        %1167 = vperm.xlu0 %1166, %v1146
        %v1168 = vpop.permute.xlu0 %1167
        %1170 = vset.pattern.permute.xlu0 0
        %1171 = vperm.xlu0 %1170, %v1147
        %v1172 = vpop.permute.xlu0 %1171
        %1174 = vset.pattern.permute.xlu0 0
        %1175 = vperm.xlu0 %1174, %v1148
        %v1176 = vpop.permute.xlu0 %1175
        %1178 = vset.pattern.permute.xlu0 0
        %1179 = vperm.xlu0 %1178, %v1149
        %v1180 = vpop.permute.xlu0 %1179
        %v1182 = vmul.f32 %v533, %v1152
        %v1183 = vmul.f32 %v534, %v1152
        %v1184 = vmul.f32 %v535, %v1156
        %v1185 = vmul.f32 %v536, %v1156
        %v1186 = vmul.f32 %v537, %v1160
        %v1187 = vmul.f32 %v538, %v1160
        %v1188 = vmul.f32 %v539, %v1164
        %v1189 = vmul.f32 %v540, %v1164
        %v1190 = vmul.f32 %v541, %v1168
        %v1191 = vmul.f32 %v542, %v1168
        %v1192 = vmul.f32 %v543, %v1172
        %v1193 = vmul.f32 %v544, %v1172
        %v1194 = vmul.f32 %v545, %v1176
        %v1195 = vmul.f32 %v546, %v1176
        %v1196 = vmul.f32 %v547, %v1180
        %v1197 = vmul.f32 %v548, %v1180
        %v1214 = vrot.slane %v1182, 1
        %v1215 = vrot.slane %v1183, 1
        %v1216 = vsel %vm957, %v1214, %v1215
        %v1217 = vrot.slane %v1184, 1
        %v1218 = vrot.slane %v1185, 1
        %v1219 = vsel %vm957, %v1217, %v1218
        %v1220 = vrot.slane %v1186, 1
        %v1221 = vrot.slane %v1187, 1
        %v1222 = vsel %vm957, %v1220, %v1221
        %v1223 = vrot.slane %v1188, 1
        %v1224 = vrot.slane %v1189, 1
        %v1225 = vsel %vm957, %v1223, %v1224
        %v1226 = vrot.slane %v1190, 1
        %v1227 = vrot.slane %v1191, 1
        %v1228 = vsel %vm957, %v1226, %v1227
        %v1229 = vrot.slane %v1192, 1
        %v1230 = vrot.slane %v1193, 1
        %v1231 = vsel %vm957, %v1229, %v1230
        %v1232 = vrot.slane %v1194, 1
        %v1233 = vrot.slane %v1195, 1
        %v1234 = vsel %vm957, %v1232, %v1233
        %v1235 = vrot.slane %v1196, 1
        %v1236 = vrot.slane %v1197, 1
        %v1237 = vsel %vm957, %v1235, %v1236
        %1238 = vrot.lane.b32.xlu0 %v1216, 126
        %v1239 = vpop.permute.xlu0 %1238
        %1240 = vrot.lane.b32.xlu0 %v1219, 126
        %v1241 = vpop.permute.xlu0 %1240
        %1242 = vrot.lane.b32.xlu0 %v1222, 126
        %v1243 = vpop.permute.xlu0 %1242
        %1244 = vrot.lane.b32.xlu0 %v1225, 126
        %v1245 = vpop.permute.xlu0 %1244
        %1246 = vrot.lane.b32.xlu0 %v1228, 126
        %v1247 = vpop.permute.xlu0 %1246
        %1248 = vrot.lane.b32.xlu0 %v1231, 126
        %v1249 = vpop.permute.xlu0 %1248
        %1250 = vrot.lane.b32.xlu0 %v1234, 126
        %v1251 = vpop.permute.xlu0 %1250
        %1252 = vrot.lane.b32.xlu0 %v1237, 126
        %v1253 = vpop.permute.xlu0 %1252
        %v1262 = vadd.f32 %v1126, %v1239
        %v1263 = vadd.f32 %v1127, %v1241
        %v1264 = vadd.f32 %v1128, %v1243
        %v1265 = vadd.f32 %v1129, %v1245
        %v1266 = vadd.f32 %v1130, %v1247
        %v1267 = vadd.f32 %v1131, %v1249
        %v1268 = vadd.f32 %v1132, %v1251
        %v1269 = vadd.f32 %v1133, %v1253
        %v1278 = vperm.slane %v597, 0
        %v1279 = vperm.slane %v598, 0
        %v1280 = vperm.slane %v599, 0
        %v1281 = vperm.slane %v600, 0
        %v1282 = vperm.slane %v601, 0
        %v1283 = vperm.slane %v602, 0
        %v1284 = vperm.slane %v603, 0
        %v1285 = vperm.slane %v604, 0
        %1286 = vset.pattern.permute.xlu0 0
        %1287 = vperm.xlu0 %1286, %v1278
        %v1288 = vpop.permute.xlu0 %1287
        %1290 = vset.pattern.permute.xlu0 0
        %1291 = vperm.xlu0 %1290, %v1279
        %v1292 = vpop.permute.xlu0 %1291
        %1294 = vset.pattern.permute.xlu0 0
        %1295 = vperm.xlu0 %1294, %v1280
        %v1296 = vpop.permute.xlu0 %1295
        %1298 = vset.pattern.permute.xlu0 0
        %1299 = vperm.xlu0 %1298, %v1281
        %v1300 = vpop.permute.xlu0 %1299
        %1302 = vset.pattern.permute.xlu0 0
        %1303 = vperm.xlu0 %1302, %v1282
        %v1304 = vpop.permute.xlu0 %1303
        %1306 = vset.pattern.permute.xlu0 0
        %1307 = vperm.xlu0 %1306, %v1283
        %v1308 = vpop.permute.xlu0 %1307
        %1310 = vset.pattern.permute.xlu0 0
        %1311 = vperm.xlu0 %1310, %v1284
        %v1312 = vpop.permute.xlu0 %1311
        %1314 = vset.pattern.permute.xlu0 0
        %1315 = vperm.xlu0 %1314, %v1285
        %v1316 = vpop.permute.xlu0 %1315
        %v1318 = vmul.f32 %v533, %v1288
        %v1319 = vmul.f32 %v534, %v1288
        %v1320 = vmul.f32 %v535, %v1292
        %v1321 = vmul.f32 %v536, %v1292
        %v1322 = vmul.f32 %v537, %v1296
        %v1323 = vmul.f32 %v538, %v1296
        %v1324 = vmul.f32 %v539, %v1300
        %v1325 = vmul.f32 %v540, %v1300
        %v1326 = vmul.f32 %v541, %v1304
        %v1327 = vmul.f32 %v542, %v1304
        %v1328 = vmul.f32 %v543, %v1308
        %v1329 = vmul.f32 %v544, %v1308
        %v1330 = vmul.f32 %v545, %v1312
        %v1331 = vmul.f32 %v546, %v1312
        %v1332 = vmul.f32 %v547, %v1316
        %v1333 = vmul.f32 %v548, %v1316
        %vm1350 = vcmask 1045504
        %v1351 = vrot.slane %v1318, 2
        %v1352 = vrot.slane %v1319, 2
        %v1353 = vsel %vm1350, %v1351, %v1352
        %v1354 = vrot.slane %v1320, 2
        %v1355 = vrot.slane %v1321, 2
        %v1356 = vsel %vm1350, %v1354, %v1355
        %v1357 = vrot.slane %v1322, 2
        %v1358 = vrot.slane %v1323, 2
        %v1359 = vsel %vm1350, %v1357, %v1358
        %v1360 = vrot.slane %v1324, 2
        %v1361 = vrot.slane %v1325, 2
        %v1362 = vsel %vm1350, %v1360, %v1361
        %v1363 = vrot.slane %v1326, 2
        %v1364 = vrot.slane %v1327, 2
        %v1365 = vsel %vm1350, %v1363, %v1364
        %v1366 = vrot.slane %v1328, 2
        %v1367 = vrot.slane %v1329, 2
        %v1368 = vsel %vm1350, %v1366, %v1367
        %v1369 = vrot.slane %v1330, 2
        %v1370 = vrot.slane %v1331, 2
        %v1371 = vsel %vm1350, %v1369, %v1370
        %v1372 = vrot.slane %v1332, 2
        %v1373 = vrot.slane %v1333, 2
        %v1374 = vsel %vm1350, %v1372, %v1373
        %v1383 = vadd.f32 %v1262, %v1353
        %v1384 = vadd.f32 %v1263, %v1356
        %v1385 = vadd.f32 %v1264, %v1359
        %v1386 = vadd.f32 %v1265, %v1362
        %v1387 = vadd.f32 %v1266, %v1365
        %v1388 = vadd.f32 %v1267, %v1368
        %v1389 = vadd.f32 %v1268, %v1371
        %v1390 = vadd.f32 %v1269, %v1374
        %v1399 = vperm.slane %v605, 0
        %v1400 = vperm.slane %v606, 0
        %v1401 = vperm.slane %v607, 0
        %v1402 = vperm.slane %v608, 0
        %v1403 = vperm.slane %v609, 0
        %v1404 = vperm.slane %v610, 0
        %v1405 = vperm.slane %v611, 0
        %v1406 = vperm.slane %v612, 0
        %1407 = vset.pattern.permute.xlu0 0
        %1408 = vperm.xlu0 %1407, %v1399
        %v1409 = vpop.permute.xlu0 %1408
        %1411 = vset.pattern.permute.xlu0 0
        %1412 = vperm.xlu0 %1411, %v1400
        %v1413 = vpop.permute.xlu0 %1412
        %1415 = vset.pattern.permute.xlu0 0
        %1416 = vperm.xlu0 %1415, %v1401
        %v1417 = vpop.permute.xlu0 %1416
        %1419 = vset.pattern.permute.xlu0 0
        %1420 = vperm.xlu0 %1419, %v1402
        %v1421 = vpop.permute.xlu0 %1420
        %1423 = vset.pattern.permute.xlu0 0
        %1424 = vperm.xlu0 %1423, %v1403
        %v1425 = vpop.permute.xlu0 %1424
        %1427 = vset.pattern.permute.xlu0 0
        %1428 = vperm.xlu0 %1427, %v1404
        %v1429 = vpop.permute.xlu0 %1428
        %1431 = vset.pattern.permute.xlu0 0
        %1432 = vperm.xlu0 %1431, %v1405
        %v1433 = vpop.permute.xlu0 %1432
        %1435 = vset.pattern.permute.xlu0 0
        %1436 = vperm.xlu0 %1435, %v1406
        %v1437 = vpop.permute.xlu0 %1436
        %v1439 = vmul.f32 %v533, %v1409
        %v1440 = vmul.f32 %v534, %v1409
        %v1441 = vmul.f32 %v535, %v1413
        %v1442 = vmul.f32 %v536, %v1413
        %v1443 = vmul.f32 %v537, %v1417
        %v1444 = vmul.f32 %v538, %v1417
        %v1445 = vmul.f32 %v539, %v1421
        %v1446 = vmul.f32 %v540, %v1421
        %v1447 = vmul.f32 %v541, %v1425
        %v1448 = vmul.f32 %v542, %v1425
        %v1449 = vmul.f32 %v543, %v1429
        %v1450 = vmul.f32 %v544, %v1429
        %v1451 = vmul.f32 %v545, %v1433
        %v1452 = vmul.f32 %v546, %v1433
        %v1453 = vmul.f32 %v547, %v1437
        %v1454 = vmul.f32 %v548, %v1437
        %v1471 = vrot.slane %v1439, 2
        %v1472 = vrot.slane %v1440, 2
        %v1473 = vsel %vm1350, %v1471, %v1472
        %v1474 = vrot.slane %v1441, 2
        %v1475 = vrot.slane %v1442, 2
        %v1476 = vsel %vm1350, %v1474, %v1475
        %v1477 = vrot.slane %v1443, 2
        %v1478 = vrot.slane %v1444, 2
        %v1479 = vsel %vm1350, %v1477, %v1478
        %v1480 = vrot.slane %v1445, 2
        %v1481 = vrot.slane %v1446, 2
        %v1482 = vsel %vm1350, %v1480, %v1481
        %v1483 = vrot.slane %v1447, 2
        %v1484 = vrot.slane %v1448, 2
        %v1485 = vsel %vm1350, %v1483, %v1484
        %v1486 = vrot.slane %v1449, 2
        %v1487 = vrot.slane %v1450, 2
        %v1488 = vsel %vm1350, %v1486, %v1487
        %v1489 = vrot.slane %v1451, 2
        %v1490 = vrot.slane %v1452, 2
        %v1491 = vsel %vm1350, %v1489, %v1490
        %v1492 = vrot.slane %v1453, 2
        %v1493 = vrot.slane %v1454, 2
        %v1494 = vsel %vm1350, %v1492, %v1493
        %1495 = vrot.lane.b32.xlu0 %v1473, 127
        %v1496 = vpop.permute.xlu0 %1495
        %1497 = vrot.lane.b32.xlu0 %v1476, 127
        %v1498 = vpop.permute.xlu0 %1497
        %1499 = vrot.lane.b32.xlu0 %v1479, 127
        %v1500 = vpop.permute.xlu0 %1499
        %1501 = vrot.lane.b32.xlu0 %v1482, 127
        %v1502 = vpop.permute.xlu0 %1501
        %1503 = vrot.lane.b32.xlu0 %v1485, 127
        %v1504 = vpop.permute.xlu0 %1503
        %1505 = vrot.lane.b32.xlu0 %v1488, 127
        %v1506 = vpop.permute.xlu0 %1505
        %1507 = vrot.lane.b32.xlu0 %v1491, 127
        %v1508 = vpop.permute.xlu0 %1507
        %1509 = vrot.lane.b32.xlu0 %v1494, 127
        %v1510 = vpop.permute.xlu0 %1509
        %v1519 = vadd.f32 %v1383, %v1496
        %v1520 = vadd.f32 %v1384, %v1498
        %v1521 = vadd.f32 %v1385, %v1500
        %v1522 = vadd.f32 %v1386, %v1502
        %v1523 = vadd.f32 %v1387, %v1504
        %v1524 = vadd.f32 %v1388, %v1506
        %v1525 = vadd.f32 %v1389, %v1508
        %v1526 = vadd.f32 %v1390, %v1510
        %v1535 = vperm.slane %v613, 0
        %v1536 = vperm.slane %v614, 0
        %v1537 = vperm.slane %v615, 0
        %v1538 = vperm.slane %v616, 0
        %v1539 = vperm.slane %v617, 0
        %v1540 = vperm.slane %v618, 0
        %v1541 = vperm.slane %v619, 0
        %v1542 = vperm.slane %v620, 0
        %1543 = vset.pattern.permute.xlu0 0
        %1544 = vperm.xlu0 %1543, %v1535
        %v1545 = vpop.permute.xlu0 %1544
        %1547 = vset.pattern.permute.xlu0 0
        %1548 = vperm.xlu0 %1547, %v1536
        %v1549 = vpop.permute.xlu0 %1548
        %1551 = vset.pattern.permute.xlu0 0
        %1552 = vperm.xlu0 %1551, %v1537
        %v1553 = vpop.permute.xlu0 %1552
        %1555 = vset.pattern.permute.xlu0 0
        %1556 = vperm.xlu0 %1555, %v1538
        %v1557 = vpop.permute.xlu0 %1556
        %1559 = vset.pattern.permute.xlu0 0
        %1560 = vperm.xlu0 %1559, %v1539
        %v1561 = vpop.permute.xlu0 %1560
        %1563 = vset.pattern.permute.xlu0 0
        %1564 = vperm.xlu0 %1563, %v1540
        %v1565 = vpop.permute.xlu0 %1564
        %1567 = vset.pattern.permute.xlu0 0
        %1568 = vperm.xlu0 %1567, %v1541
        %v1569 = vpop.permute.xlu0 %1568
        %1571 = vset.pattern.permute.xlu0 0
        %1572 = vperm.xlu0 %1571, %v1542
        %v1573 = vpop.permute.xlu0 %1572
        %v1575 = vmul.f32 %v533, %v1545
        %v1576 = vmul.f32 %v534, %v1545
        %v1577 = vmul.f32 %v535, %v1549
        %v1578 = vmul.f32 %v536, %v1549
        %v1579 = vmul.f32 %v537, %v1553
        %v1580 = vmul.f32 %v538, %v1553
        %v1581 = vmul.f32 %v539, %v1557
        %v1582 = vmul.f32 %v540, %v1557
        %v1583 = vmul.f32 %v541, %v1561
        %v1584 = vmul.f32 %v542, %v1561
        %v1585 = vmul.f32 %v543, %v1565
        %v1586 = vmul.f32 %v544, %v1565
        %v1587 = vmul.f32 %v545, %v1569
        %v1588 = vmul.f32 %v546, %v1569
        %v1589 = vmul.f32 %v547, %v1573
        %v1590 = vmul.f32 %v548, %v1573
        %v1607 = vrot.slane %v1575, 2
        %v1608 = vrot.slane %v1576, 2
        %v1609 = vsel %vm1350, %v1607, %v1608
        %v1610 = vrot.slane %v1577, 2
        %v1611 = vrot.slane %v1578, 2
        %v1612 = vsel %vm1350, %v1610, %v1611
        %v1613 = vrot.slane %v1579, 2
        %v1614 = vrot.slane %v1580, 2
        %v1615 = vsel %vm1350, %v1613, %v1614
        %v1616 = vrot.slane %v1581, 2
        %v1617 = vrot.slane %v1582, 2
        %v1618 = vsel %vm1350, %v1616, %v1617
        %v1619 = vrot.slane %v1583, 2
        %v1620 = vrot.slane %v1584, 2
        %v1621 = vsel %vm1350, %v1619, %v1620
        %v1622 = vrot.slane %v1585, 2
        %v1623 = vrot.slane %v1586, 2
        %v1624 = vsel %vm1350, %v1622, %v1623
        %v1625 = vrot.slane %v1587, 2
        %v1626 = vrot.slane %v1588, 2
        %v1627 = vsel %vm1350, %v1625, %v1626
        %v1628 = vrot.slane %v1589, 2
        %v1629 = vrot.slane %v1590, 2
        %v1630 = vsel %vm1350, %v1628, %v1629
        %1631 = vrot.lane.b32.xlu0 %v1609, 126
        %v1632 = vpop.permute.xlu0 %1631
        %1633 = vrot.lane.b32.xlu0 %v1612, 126
        %v1634 = vpop.permute.xlu0 %1633
        %1635 = vrot.lane.b32.xlu0 %v1615, 126
        %v1636 = vpop.permute.xlu0 %1635
        %1637 = vrot.lane.b32.xlu0 %v1618, 126
        %v1638 = vpop.permute.xlu0 %1637
        %1639 = vrot.lane.b32.xlu0 %v1621, 126
        %v1640 = vpop.permute.xlu0 %1639
        %1641 = vrot.lane.b32.xlu0 %v1624, 126
        %v1642 = vpop.permute.xlu0 %1641
        %1643 = vrot.lane.b32.xlu0 %v1627, 126
        %v1644 = vpop.permute.xlu0 %1643
        %1645 = vrot.lane.b32.xlu0 %v1630, 126
        %v1646 = vpop.permute.xlu0 %1645
        %v1655 = vadd.f32 %v1519, %v1632
        %v1656 = vadd.f32 %v1520, %v1634
        %v1657 = vadd.f32 %v1521, %v1636
        %v1658 = vadd.f32 %v1522, %v1638
        %v1659 = vadd.f32 %v1523, %v1640
        %v1660 = vadd.f32 %v1524, %v1642
        %v1661 = vadd.f32 %v1525, %v1644
        %v1662 = vadd.f32 %v1526, %v1646
        %v1663 = vld [vmem:[%s4] sm:$0x1]
        %v1664 = vld [vmem:[%s4 + $0x1] sm:$0x1]
        %v1665 = vld [vmem:[%s4 + $0x2] sm:$0x1]
        %v1666 = vld [vmem:[%s4 + $0x3] sm:$0x1]
        %v1667 = vld [vmem:[%s4 + $0x4] sm:$0x1]
        %v1668 = vld [vmem:[%s4 + $0x5] sm:$0x1]
        %v1669 = vld [vmem:[%s4 + $0x6] sm:$0x1]
        %v1670 = vld [vmem:[%s4 + $0x7] sm:$0x1]
        %v1679 = vperm.slane %v1663, 0
        %v1680 = vperm.slane %v1664, 0
        %v1681 = vperm.slane %v1665, 0
        %v1682 = vperm.slane %v1666, 0
        %v1683 = vperm.slane %v1667, 0
        %v1684 = vperm.slane %v1668, 0
        %v1685 = vperm.slane %v1669, 0
        %v1686 = vperm.slane %v1670, 0
        %1687 = vset.pattern.permute.xlu0 0
        %1688 = vperm.xlu0 %1687, %v1679
        %v1689 = vpop.permute.xlu0 %1688
        %1691 = vset.pattern.permute.xlu0 0
        %1692 = vperm.xlu0 %1691, %v1680
        %v1693 = vpop.permute.xlu0 %1692
        %1695 = vset.pattern.permute.xlu0 0
        %1696 = vperm.xlu0 %1695, %v1681
        %v1697 = vpop.permute.xlu0 %1696
        %1699 = vset.pattern.permute.xlu0 0
        %1700 = vperm.xlu0 %1699, %v1682
        %v1701 = vpop.permute.xlu0 %1700
        %1703 = vset.pattern.permute.xlu0 0
        %1704 = vperm.xlu0 %1703, %v1683
        %v1705 = vpop.permute.xlu0 %1704
        %1707 = vset.pattern.permute.xlu0 0
        %1708 = vperm.xlu0 %1707, %v1684
        %v1709 = vpop.permute.xlu0 %1708
        %1711 = vset.pattern.permute.xlu0 0
        %1712 = vperm.xlu0 %1711, %v1685
        %v1713 = vpop.permute.xlu0 %1712
        %1715 = vset.pattern.permute.xlu0 0
        %1716 = vperm.xlu0 %1715, %v1686
        %v1717 = vpop.permute.xlu0 %1716
        %v1719 = vadd.f32 %v1655, %v1689
        %v1720 = vadd.f32 %v1656, %v1693
        %v1721 = vadd.f32 %v1657, %v1697
        %v1722 = vadd.f32 %v1658, %v1701
        %v1723 = vadd.f32 %v1659, %v1705
        %v1724 = vadd.f32 %v1660, %v1709
        %v1725 = vadd.f32 %v1661, %v1713
        %v1726 = vadd.f32 %v1662, %v1717
        %v1727 = vmul.f32 %v1719, %v1723
        %v1728 = vmul.f32 %v1720, %v1724
        %v1729 = vmul.f32 %v1721, %v1725
        %v1730 = vmul.f32 %v1722, %v1726
        %vm1731 = vcmask 130048
        %1732 = vst.msk [vmem:[%s345] sm:$0xff] %vm1731, %v1727
        %1733 = vst.msk [vmem:[%s345 + $0x8] sm:$0xff] %vm1731, %v1728
        %1734 = vst.msk [vmem:[%s345 + $0x10] sm:$0xff] %vm1731, %v1729
        %1735 = vst.msk [vmem:[%s345 + $0x18] sm:$0xff] %vm1731, %v1730
        %s1736 = sand.u32 %s164, 1
        %s1737 = sand.u32 %s164, 1
        %s1738 = smul.addr %s1737, 32
        %s1739 = scalar_lea.vmem [#allocation3], %s1738
        // Predicated region
        $region79: #{aff_block.5} parent=73 // pred_check
          %p1740 = pneg %p174
        $region80: #{aff_block.5} parent=73 // pred_check_branch
          %1742 = sbr.rel (%p1740) target = $region82
        $region81: #{aff_block.5} parent=73 // pred_region
          %s1743 = smul.addr %s20, 8
          %s1744 = sadd.s32 %s21, %s1743
          %s1745 = smul.addr %s1744, 8
          %s1746 = scalar_lea.vmem %s5, %s1745
          // Predicated region
          $region83: #{aff_block.5} parent=81 // pred_check
            _
          $region84: #{aff_block.5} parent=81 // pred_check_branch
            %1748 = sbr.rel (0) target = $region86
          $region85: #{aff_block.5} parent=81 // pred_region
            // Predicated region
            $region87: #{aff_block.5} parent=85 // pred_check
              _
            $region88: #{aff_block.5} parent=85 // pred_check_branch
              %1750 = sbr.rel (0) target = $region90
            $region89: #{aff_block.5} parent=85 // pred_region
              // Predicated region
              $region102: #{aff_block.5} parent=89 // pred_check
                _
              $region103: #{aff_block.5} parent=89 // pred_check_branch
                %1772 = sbr.rel (0) target = $region105
              $region104: #{aff_block.5} parent=89 // pred_region
                loop: start=0, step=1, limit=1
                $region106: #{aff_block.5} parent=104 // loop_pre_header
                  _
                $region107: #{aff_block.5} parent=104 // loop_header
                  %s1774 = sphi 0, %s1778
                  %p1775 = scmp.ge.s32.totalorder %s1774, 1
                  %s1779 = sphi %s1739, %s1739
                  %s1780 = sphi %s1746, %s1746
                $region108: #{aff_block.5} parent=104 // loop_header_branch
                  %1777 = sbr.rel (%p1775) target = $region112
                $region109: #{aff_block.5} parent=104 // loop_body
                  %v1781 = vld [vmem:[%s1779] sm:$0xff]
                  %1782 = vst [vmem:[%s1780] sm:$0xff] %v1781
                  %v1783 = vld [vmem:[%s1779 + $0x8] sm:$0xff]
                  %1784 = vst [vmem:[%s1780 + $0x10] sm:$0xff] %v1783
                  %v1785 = vld [vmem:[%s1779 + $0x10] sm:$0xff]
                  %1786 = vst [vmem:[%s1780 + $0x20] sm:$0xff] %v1785
                  %v1787 = vld [vmem:[%s1779 + $0x18] sm:$0xff]
                  %1788 = vst [vmem:[%s1780 + $0x30] sm:$0xff] %v1787
                $region110: #{aff_block.5} parent=104 // loop_footer
                  %s1778 = sadd.s32 1, %s1774
                $region111: #{aff_block.5} parent=104 // loop_footer_branch
                  %1773 = sbr.rel target = $region107
                $region112: #{aff_block.5} parent=104 // loop_exit
                  _
              $region105: #{aff_block.5} parent=89 // pred_fallthru
                _
              // Predicated region
              $region113: #{aff_block.5} parent=89 // pred_check
                _
              $region114: #{aff_block.5} parent=89 // pred_check_branch
                %1790 = sbr.rel target = $region116
              $region115: #{aff_block.5} parent=89 // pred_region
                _
              $region116: #{aff_block.5} parent=89 // pred_fallthru
                _
            $region90: #{aff_block.5} parent=85 // pred_fallthru
              _
            // Predicated region
            $region91: #{aff_block.5} parent=85 // pred_check
              _
            $region92: #{aff_block.5} parent=85 // pred_check_branch
              %1752 = sbr.rel target = $region94
            $region93: #{aff_block.5} parent=85 // pred_region
              %s1754 = ssub.s32 256, 1
              loop: start=0, step=1, limit=1
              $region95: #{aff_block.5} parent=93 // loop_pre_header
                _
              $region96: #{aff_block.5} parent=93 // loop_header
                %s1756 = sphi 0, %s1760
                %p1757 = scmp.ge.s32.totalorder %s1756, 1
                %s1761 = sphi %s1739, %s1739
                %s1762 = sphi %s1746, %s1746
              $region97: #{aff_block.5} parent=93 // loop_header_branch
                %1759 = sbr.rel (%p1757) target = $region101
              $region98: #{aff_block.5} parent=93 // loop_body
                %v1763 = vld [vmem:[%s1761] sm:%s1754]
                %1764 = vst [vmem:[%s1762] sm:%s1754] %v1763
                %v1765 = vld [vmem:[%s1761 + $0x8] sm:%s1754]
                %1766 = vst [vmem:[%s1762 + $0x10] sm:%s1754] %v1765
                %v1767 = vld [vmem:[%s1761 + $0x10] sm:%s1754]
                %1768 = vst [vmem:[%s1762 + $0x20] sm:%s1754] %v1767
                %v1769 = vld [vmem:[%s1761 + $0x18] sm:%s1754]
                %1770 = vst [vmem:[%s1762 + $0x30] sm:%s1754] %v1769
              $region99: #{aff_block.5} parent=93 // loop_footer
                %s1760 = sadd.s32 1, %s1756
              $region100: #{aff_block.5} parent=93 // loop_footer_branch
                %1755 = sbr.rel target = $region96
              $region101: #{aff_block.5} parent=93 // loop_exit
                _
            $region94: #{aff_block.5} parent=85 // pred_fallthru
              _
          $region86: #{aff_block.5} parent=81 // pred_fallthru
            _
          %1791 = vnop
        $region82: #{aff_block.5} parent=73 // pred_fallthru
          _
      $region74: #{aff_block.5} parent=5 // pred_fallthru
        _
      %p1792 = scmp.le.s32.totalorder 2, %s11
      // Predicated region
      $region117: #{aff_block.5} parent=5 // pred_check
        %p1793 = pneg %p1792
      $region118: #{aff_block.5} parent=5 // pred_check_branch
        %1795 = sbr.rel (%p1793) target = $region120
      $region119: #{aff_block.5} parent=5 // pred_region
        %s1796 = ssub.s32 %s11, 2
        // Predicated region
        $region121: #{aff_block.5} parent=119 // pred_check
          %p1797 = pneg %p180
        $region122: #{aff_block.5} parent=119 // pred_check_branch
          %1799 = sbr.rel (%p1797) target = $region124
        $region123: #{aff_block.5} parent=119 // pred_region
          %s1800 = sand.u32 %s165, 1
          %s1801 = sand.u32 %s165, 1
          %s1802 = smul.addr %s1801, 32
          %s1803 = scalar_lea.vmem [#allocation3], %s1802
        $region124: #{aff_block.5} parent=119 // pred_fallthru
          _
      $region120: #{aff_block.5} parent=5 // pred_fallthru
        _
    $region6: #{aff_block.5} parent=1 // loop_footer
      %s15 = sadd.s32 1, %s11
    $region7: #{aff_block.5} parent=1 // loop_footer_branch
      %10 = sbr.rel target = $region3
    $region8: #{aff_block.5} parent=1 // loop_exit
      _

// kernel: reverse.0
$region0: #{reverse.0}
  %s0 = inlined_call_operand.vmem [shape: f32[2,4,16,7], index: 0, kind: input, shape index: {}]
  %s1 = inlined_call_operand.vmem [shape: f32[2,4,16,7], index: 1, kind: output, shape index: {}]
  $region1: #{reverse.0} parent=0
    #allocation0 [shape = 'u8[65536]{0}', space=vmem, size = 0x10000, scoped, tag = 'operand span for operand 0']
    #allocation1 [shape = 'u8[32768]{0}', space=vmem, size = 0x8000, scoped, tag = 'operand span for operand 1']
    %s2 = scalar_lea.vmem [#allocation0], 8
    // Predicated region
    $region2: #{reverse.0} parent=1 // pred_check
      _
    $region3: #{reverse.0} parent=1 // pred_check_branch
      %4 = sbr.rel (0) target = $region5
    $region4: #{reverse.0} parent=1 // pred_region
      // Predicated region
      $region6: #{reverse.0} parent=4 // pred_check
        _
      $region7: #{reverse.0} parent=4 // pred_check_branch
        %6 = sbr.rel (0) target = $region9
      $region8: #{reverse.0} parent=4 // pred_region
        // Predicated region
        $region21: #{reverse.0} parent=8 // pred_check
          _
        $region22: #{reverse.0} parent=8 // pred_check_branch
          %36 = sbr.rel (0) target = $region24
        $region23: #{reverse.0} parent=8 // pred_region
          loop: start=0, step=1, limit=1
          $region25: #{reverse.0} parent=23 // loop_pre_header
            _
          $region26: #{reverse.0} parent=23 // loop_header
            %s38 = sphi 0, %s42
            %p39 = scmp.ge.s32.totalorder %s38, 1
            %s43 = sphi %s0, %s0
            %s44 = sphi %s2, %s2
          $region27: #{reverse.0} parent=23 // loop_header_branch
            %41 = sbr.rel (%p39) target = $region31
          $region28: #{reverse.0} parent=23 // loop_body
            %v45 = vld [vmem:[%s43] sm:$0xff]
            %46 = vst [vmem:[%s44] sm:$0xff] %v45
            %v47 = vld [vmem:[%s43 + $0x8] sm:$0xff]
            %48 = vst [vmem:[%s44 + $0x10] sm:$0xff] %v47
            %v49 = vld [vmem:[%s43 + $0x10] sm:$0xff]
            %50 = vst [vmem:[%s44 + $0x20] sm:$0xff] %v49
            %v51 = vld [vmem:[%s43 + $0x18] sm:$0xff]
            %52 = vst [vmem:[%s44 + $0x30] sm:$0xff] %v51
            %v53 = vld [vmem:[%s43 + $0x20] sm:$0xff]
            %54 = vst [vmem:[%s44 + $0x40] sm:$0xff] %v53
            %v55 = vld [vmem:[%s43 + $0x28] sm:$0xff]
            %56 = vst [vmem:[%s44 + $0x50] sm:$0xff] %v55
            %v57 = vld [vmem:[%s43 + $0x30] sm:$0xff]
            %58 = vst [vmem:[%s44 + $0x60] sm:$0xff] %v57
            %v59 = vld [vmem:[%s43 + $0x38] sm:$0xff]
            %60 = vst [vmem:[%s44 + $0x70] sm:$0xff] %v59
          $region29: #{reverse.0} parent=23 // loop_footer
            %s42 = sadd.s32 1, %s38
          $region30: #{reverse.0} parent=23 // loop_footer_branch
            %37 = sbr.rel target = $region26
          $region31: #{reverse.0} parent=23 // loop_exit
            _
        $region24: #{reverse.0} parent=8 // pred_fallthru
          _
        // Predicated region
        $region32: #{reverse.0} parent=8 // pred_check
          _
        $region33: #{reverse.0} parent=8 // pred_check_branch
          %62 = sbr.rel target = $region35
        $region34: #{reverse.0} parent=8 // pred_region
          _
        $region35: #{reverse.0} parent=8 // pred_fallthru
          _
      $region9: #{reverse.0} parent=4 // pred_fallthru
        _
      // Predicated region
      $region10: #{reverse.0} parent=4 // pred_check
        _
      $region11: #{reverse.0} parent=4 // pred_check_branch
        %8 = sbr.rel target = $region13
      $region12: #{reverse.0} parent=4 // pred_region
        %s10 = ssub.s32 256, 1
        loop: start=0, step=1, limit=1
        $region14: #{reverse.0} parent=12 // loop_pre_header
          _
        $region15: #{reverse.0} parent=12 // loop_header
          %s12 = sphi 0, %s16
          %p13 = scmp.ge.s32.totalorder %s12, 1
          %s17 = sphi %s0, %s0
          %s18 = sphi %s2, %s2
        $region16: #{reverse.0} parent=12 // loop_header_branch
          %15 = sbr.rel (%p13) target = $region20
        $region17: #{reverse.0} parent=12 // loop_body
          %v19 = vld [vmem:[%s17] sm:%s10]
          %20 = vst [vmem:[%s18] sm:%s10] %v19
          %v21 = vld [vmem:[%s17 + $0x8] sm:%s10]
          %22 = vst [vmem:[%s18 + $0x10] sm:%s10] %v21
          %v23 = vld [vmem:[%s17 + $0x10] sm:%s10]
          %24 = vst [vmem:[%s18 + $0x20] sm:%s10] %v23
          %v25 = vld [vmem:[%s17 + $0x18] sm:%s10]
          %26 = vst [vmem:[%s18 + $0x30] sm:%s10] %v25
          %v27 = vld [vmem:[%s17 + $0x20] sm:%s10]
          %28 = vst [vmem:[%s18 + $0x40] sm:%s10] %v27
          %v29 = vld [vmem:[%s17 + $0x28] sm:%s10]
          %30 = vst [vmem:[%s18 + $0x50] sm:%s10] %v29
          %v31 = vld [vmem:[%s17 + $0x30] sm:%s10]
          %32 = vst [vmem:[%s18 + $0x60] sm:%s10] %v31
          %v33 = vld [vmem:[%s17 + $0x38] sm:%s10]
          %34 = vst [vmem:[%s18 + $0x70] sm:%s10] %v33
        $region18: #{reverse.0} parent=12 // loop_footer
          %s16 = sadd.s32 1, %s12
        $region19: #{reverse.0} parent=12 // loop_footer_branch
          %11 = sbr.rel target = $region15
        $region20: #{reverse.0} parent=12 // loop_exit
          _
      $region13: #{reverse.0} parent=4 // pred_fallthru
        _
    $region5: #{reverse.0} parent=1 // pred_fallthru
      _
    %63 = vnop
    %s64 = scalar_lea.vmem [#allocation0], 7
    %v65 = vld [vmem:[%s64] ss:$-1 sm:$0xff]
    %v66 = vrot.slane %v65, 1
    %67 = vst [vmem:[#allocation1] sm:$0xff] %v66
    %s68 = scalar_lea.vmem [#allocation0], 8
    %s69 = scalar_lea.vmem %s68, 7 [#allocation0]
    %v70 = vld [vmem:[%s69] ss:$-1 sm:$0xff]
    %v71 = vrot.slane %v70, 1
    %v72 = vlaneseq
    %v73 = vshrl.u32 %v72, 7
    %vm74 = vcmp.lt.s32.totalorder %v73, 7
    %75 = vst.msk [vmem:[#allocation1] sm:$0xff] %vm74, %v71
    %s76 = scalar_lea.vmem [#allocation1], 8
    %s77 = scalar_lea.vmem [#allocation0], 16
    %s78 = scalar_lea.vmem %s77, 7 [#allocation0]
    %v79 = vld [vmem:[%s78] ss:$-1 sm:$0xff]
    %v80 = vrot.slane %v79, 1
    %81 = vst [vmem:[%s76] sm:$0xff] %v80
    %s82 = scalar_lea.vmem %s77, 8 [#allocation0]
    %s83 = scalar_lea.vmem %s82, 7 [#allocation0]
    %v84 = vld [vmem:[%s83] ss:$-1 sm:$0xff]
    %v85 = vrot.slane %v84, 1
    %v86 = vlaneseq
    %v87 = vshrl.u32 %v86, 7
    %vm88 = vcmp.lt.s32.totalorder %v87, 7
    %89 = vst.msk [vmem:[%s76] sm:$0xff] %vm88, %v85
    %s90 = scalar_lea.vmem [#allocation1], 16
    %s91 = scalar_lea.vmem [#allocation0], 32
    %s92 = scalar_lea.vmem %s91, 7 [#allocation0]
    %v93 = vld [vmem:[%s92] ss:$-1 sm:$0xff]
    %v94 = vrot.slane %v93, 1
    %95 = vst [vmem:[%s90] sm:$0xff] %v94
    %s96 = scalar_lea.vmem %s91, 8 [#allocation0]
    %s97 = scalar_lea.vmem %s96, 7 [#allocation0]
    %v98 = vld [vmem:[%s97] ss:$-1 sm:$0xff]
    %v99 = vrot.slane %v98, 1
    %v100 = vlaneseq
    %v101 = vshrl.u32 %v100, 7
    %vm102 = vcmp.lt.s32.totalorder %v101, 7
    %103 = vst.msk [vmem:[%s90] sm:$0xff] %vm102, %v99
    %s104 = scalar_lea.vmem [#allocation1], 24
    %s105 = scalar_lea.vmem [#allocation0], 48
    %s106 = scalar_lea.vmem %s105, 7 [#allocation0]
    %v107 = vld [vmem:[%s106] ss:$-1 sm:$0xff]
    %v108 = vrot.slane %v107, 1
    %109 = vst [vmem:[%s104] sm:$0xff] %v108
    %s110 = scalar_lea.vmem %s105, 8 [#allocation0]
    %s111 = scalar_lea.vmem %s110, 7 [#allocation0]
    %v112 = vld [vmem:[%s111] ss:$-1 sm:$0xff]
    %v113 = vrot.slane %v112, 1
    %v114 = vlaneseq
    %v115 = vshrl.u32 %v114, 7
    %vm116 = vcmp.lt.s32.totalorder %v115, 7
    %117 = vst.msk [vmem:[%s104] sm:$0xff] %vm116, %v113
    %s118 = scalar_lea.vmem [#allocation1], 32
    %s119 = scalar_lea.vmem [#allocation0], 64
    %s120 = scalar_lea.vmem %s119, 7 [#allocation0]
    %v121 = vld [vmem:[%s120] ss:$-1 sm:$0xff]
    %v122 = vrot.slane %v121, 1
    %123 = vst [vmem:[%s118] sm:$0xff] %v122
    %s124 = scalar_lea.vmem %s119, 8 [#allocation0]
    %s125 = scalar_lea.vmem %s124, 7 [#allocation0]
    %v126 = vld [vmem:[%s125] ss:$-1 sm:$0xff]
    %v127 = vrot.slane %v126, 1
    %v128 = vlaneseq
    %v129 = vshrl.u32 %v128, 7
    %vm130 = vcmp.lt.s32.totalorder %v129, 7
    %131 = vst.msk [vmem:[%s118] sm:$0xff] %vm130, %v127
    %s132 = scalar_lea.vmem [#allocation1], 40
    %s133 = scalar_lea.vmem [#allocation0], 80
    %s134 = scalar_lea.vmem %s133, 7 [#allocation0]
    %v135 = vld [vmem:[%s134] ss:$-1 sm:$0xff]
    %v136 = vrot.slane %v135, 1
    %137 = vst [vmem:[%s132] sm:$0xff] %v136
    %s138 = scalar_lea.vmem %s133, 8 [#allocation0]
    %s139 = scalar_lea.vmem %s138, 7 [#allocation0]
    %v140 = vld [vmem:[%s139] ss:$-1 sm:$0xff]
    %v141 = vrot.slane %v140, 1
    %v142 = vlaneseq
    %v143 = vshrl.u32 %v142, 7
    %vm144 = vcmp.lt.s32.totalorder %v143, 7
    %145 = vst.msk [vmem:[%s132] sm:$0xff] %vm144, %v141
    %s146 = scalar_lea.vmem [#allocation1], 48
    %s147 = scalar_lea.vmem [#allocation0], 96
    %s148 = scalar_lea.vmem %s147, 7 [#allocation0]
    %v149 = vld [vmem:[%s148] ss:$-1 sm:$0xff]
    %v150 = vrot.slane %v149, 1
    %151 = vst [vmem:[%s146] sm:$0xff] %v150
    %s152 = scalar_lea.vmem %s147, 8 [#allocation0]
    %s153 = scalar_lea.vmem %s152, 7 [#allocation0]
    %v154 = vld [vmem:[%s153] ss:$-1 sm:$0xff]
    %v155 = vrot.slane %v154, 1
    %v156 = vlaneseq
    %v157 = vshrl.u32 %v156, 7
    %vm158 = vcmp.lt.s32.totalorder %v157, 7
    %159 = vst.msk [vmem:[%s146] sm:$0xff] %vm158, %v155
    %s160 = scalar_lea.vmem [#allocation1], 56
    %s161 = scalar_lea.vmem [#allocation0], 112
    %s162 = scalar_lea.vmem %s161, 7 [#allocation0]
    %v163 = vld [vmem:[%s162] ss:$-1 sm:$0xff]
    %v164 = vrot.slane %v163, 1
    %165 = vst [vmem:[%s160] sm:$0xff] %v164
    %s166 = scalar_lea.vmem %s161, 8 [#allocation0]
    %s167 = scalar_lea.vmem %s166, 7 [#allocation0]
    %v168 = vld [vmem:[%s167] ss:$-1 sm:$0xff]
    %v169 = vrot.slane %v168, 1
    %v170 = vlaneseq
    %v171 = vshrl.u32 %v170, 7
    %vm172 = vcmp.lt.s32.totalorder %v171, 7
    %173 = vst.msk [vmem:[%s160] sm:$0xff] %vm172, %v169
    // Predicated region
    $region36: #{reverse.0} parent=1 // pred_check
      _
    $region37: #{reverse.0} parent=1 // pred_check_branch
      %175 = sbr.rel (0) target = $region39
    $region38: #{reverse.0} parent=1 // pred_region
      // Predicated region
      $region40: #{reverse.0} parent=38 // pred_check
        _
      $region41: #{reverse.0} parent=38 // pred_check_branch
        %177 = sbr.rel (0) target = $region43
      $region42: #{reverse.0} parent=38 // pred_region
        // Predicated region
        $region55: #{reverse.0} parent=42 // pred_check
          _
        $region56: #{reverse.0} parent=42 // pred_check_branch
          %207 = sbr.rel (0) target = $region58
        $region57: #{reverse.0} parent=42 // pred_region
          loop: start=0, step=1, limit=1
          $region59: #{reverse.0} parent=57 // loop_pre_header
            _
          $region60: #{reverse.0} parent=57 // loop_header
            %s209 = sphi 0, %s213
            %p210 = scmp.ge.s32.totalorder %s209, 1
            %s214 = sphi [#allocation1], [#allocation1]
            %s215 = sphi %s1, %s1
          $region61: #{reverse.0} parent=57 // loop_header_branch
            %212 = sbr.rel (%p210) target = $region65
          $region62: #{reverse.0} parent=57 // loop_body
            %v216 = vld [vmem:[%s214] sm:$0xff]
            %217 = vst [vmem:[%s215] sm:$0xff] %v216
            %v218 = vld [vmem:[%s214 + $0x8] sm:$0xff]
            %219 = vst [vmem:[%s215 + $0x8] sm:$0xff] %v218
            %v220 = vld [vmem:[%s214 + $0x10] sm:$0xff]
            %221 = vst [vmem:[%s215 + $0x10] sm:$0xff] %v220
            %v222 = vld [vmem:[%s214 + $0x18] sm:$0xff]
            %223 = vst [vmem:[%s215 + $0x18] sm:$0xff] %v222
            %v224 = vld [vmem:[%s214 + $0x20] sm:$0xff]
            %225 = vst [vmem:[%s215 + $0x20] sm:$0xff] %v224
            %v226 = vld [vmem:[%s214 + $0x28] sm:$0xff]
            %227 = vst [vmem:[%s215 + $0x28] sm:$0xff] %v226
            %v228 = vld [vmem:[%s214 + $0x30] sm:$0xff]
            %229 = vst [vmem:[%s215 + $0x30] sm:$0xff] %v228
            %v230 = vld [vmem:[%s214 + $0x38] sm:$0xff]
            %231 = vst [vmem:[%s215 + $0x38] sm:$0xff] %v230
          $region63: #{reverse.0} parent=57 // loop_footer
            %s213 = sadd.s32 1, %s209
          $region64: #{reverse.0} parent=57 // loop_footer_branch
            %208 = sbr.rel target = $region60
          $region65: #{reverse.0} parent=57 // loop_exit
            _
        $region58: #{reverse.0} parent=42 // pred_fallthru
          _
        // Predicated region
        $region66: #{reverse.0} parent=42 // pred_check
          _
        $region67: #{reverse.0} parent=42 // pred_check_branch
          %233 = sbr.rel target = $region69
        $region68: #{reverse.0} parent=42 // pred_region
          _
        $region69: #{reverse.0} parent=42 // pred_fallthru
          _
      $region43: #{reverse.0} parent=38 // pred_fallthru
        _
      // Predicated region
      $region44: #{reverse.0} parent=38 // pred_check
        _
      $region45: #{reverse.0} parent=38 // pred_check_branch
        %179 = sbr.rel target = $region47
      $region46: #{reverse.0} parent=38 // pred_region
        %s181 = ssub.s32 256, 1
        loop: start=0, step=1, limit=1
        $region48: #{reverse.0} parent=46 // loop_pre_header
          _
        $region49: #{reverse.0} parent=46 // loop_header
          %s183 = sphi 0, %s187
          %p184 = scmp.ge.s32.totalorder %s183, 1
          %s188 = sphi [#allocation1], [#allocation1]
          %s189 = sphi %s1, %s1
        $region50: #{reverse.0} parent=46 // loop_header_branch
          %186 = sbr.rel (%p184) target = $region54
        $region51: #{reverse.0} parent=46 // loop_body
          %v190 = vld [vmem:[%s188] sm:%s181]
          %191 = vst [vmem:[%s189] sm:%s181] %v190
          %v192 = vld [vmem:[%s188 + $0x8] sm:%s181]
          %193 = vst [vmem:[%s189 + $0x8] sm:%s181] %v192
          %v194 = vld [vmem:[%s188 + $0x10] sm:%s181]
          %195 = vst [vmem:[%s189 + $0x10] sm:%s181] %v194
          %v196 = vld [vmem:[%s188 + $0x18] sm:%s181]
          %197 = vst [vmem:[%s189 + $0x18] sm:%s181] %v196
          %v198 = vld [vmem:[%s188 + $0x20] sm:%s181]
          %199 = vst [vmem:[%s189 + $0x20] sm:%s181] %v198
          %v200 = vld [vmem:[%s188 + $0x28] sm:%s181]
          %201 = vst [vmem:[%s189 + $0x28] sm:%s181] %v200
          %v202 = vld [vmem:[%s188 + $0x30] sm:%s181]
          %203 = vst [vmem:[%s189 + $0x30] sm:%s181] %v202
          %v204 = vld [vmem:[%s188 + $0x38] sm:%s181]
          %205 = vst [vmem:[%s189 + $0x38] sm:%s181] %v204
        $region52: #{reverse.0} parent=46 // loop_footer
          %s187 = sadd.s32 1, %s183
        $region53: #{reverse.0} parent=46 // loop_footer_branch
          %182 = sbr.rel target = $region49
        $region54: #{reverse.0} parent=46 // loop_exit
          _
      $region47: #{reverse.0} parent=38 // pred_fallthru
        _
    $region39: #{reverse.0} parent=1 // pred_fallthru
      _
    %234 = vnop

// kernel: aff_block.6
$region0: #{aff_block.6}
  #allocation0 [shape = 'u32[]', space=smem, size = 0x4, offset = 0x4, fixed_abs, tag = 'smem constant byte address 0x4 - core index']
  #allocation1 [shape = 'u32[72,128]{1,0:T(1,128)}', space=vmem, size = 0x9000, scoped, tag = 'internal scratch']
  %s0 = inlined_call_operand.vmem [shape: f32[2,4,144], index: 0, kind: input, shape index: {}]
  %s1 = inlined_call_operand.vmem [shape: f32[2,4,144], index: 1, kind: input, shape index: {}]
  %s2 = inlined_call_operand.vmem [shape: f32[8,8], index: 2, kind: input, shape index: {}]
  %s3 = inlined_call_operand.vmem [shape: f32[8,1], index: 3, kind: input, shape index: {}]
  %s4 = inlined_call_operand.vmem [shape: f32[2,4,144], index: 4, kind: output, shape index: {0}]
  %s5 = inlined_call_operand.vmem [shape: f32[2,4,144], index: 5, kind: output, shape index: {1}]
  %6 = xla_tuple %s4, %s5
  %s7 = sld [smem:[#allocation0]]
  $region57: #{aff_block.6} parent=0
    _
  %s9 = ssub.s32 1, %s7
  %s10 = scalar_select 0, %s9, %s7
  loop: start=0, step=1, limit=4
  $region2: #{aff_block.6} parent=0 // loop_pre_header
    _
  $region3: #{aff_block.6} parent=0 // loop_header
    %s12 = sphi 0, %s16
    %p13 = scmp.ge.s32.totalorder %s12, 4
    %s19 = sphi 0, %s31
    %s20 = sphi 0, %s27
    %s21 = sphi 0, %s19
    %s22 = sphi 0, %s20
    %s23 = sphi 0, %s21
    %s24 = sphi 0, %s22
    %s36 = sphi 0, %s38
    %s39 = sphi 0, %s36
    %s40 = sphi 0, %s39
    %s56 = sphi 0, %s40
    %s64 = sphi 0, %s66
    %s67 = sphi 0, %s64
    %s68 = sphi 0, %s67
    %s84 = sphi 0, %s68
    %s88 = sphi 0, %s88
    %s90 = sphi 0, %s88
    %s91 = sphi 0, %s90
    %s105 = sphi 0, %s91
    %s109 = sphi 0, %s109
    %s111 = sphi 0, %s109
    %s112 = sphi 0, %s111
    %s126 = sphi 0, %s112
    %s134 = sphi 0, %s136
    %s137 = sphi 0, %s134
    %s138 = sphi 0, %s137
    %s154 = sphi 0, %s138
    %s162 = sphi 0, %s164
    %s165 = sphi 0, %s162
    %s166 = sphi 0, %s165
    %s182 = sphi 0, %s166
  $region4: #{aff_block.6} parent=0 // loop_header_branch
    %15 = sbr.rel (%p13) target = $region8
  $region5: #{aff_block.6} parent=0 // loop_body
    %s17 = ssub.s32 %s12, 1
    %s18 = ssub.s32 %s12, 2
    %s25 = sadd.s32 1, %s20
    %p26 = scmp.ge.s32.totalorder %s25, 1
    %s27 = scalar_select %p26, 0, %s25
    %s28 = sadd.s32 1, %s19
    %s29 = scalar_select %p26, %s28, %s19
    %p30 = scmp.ge.s32.totalorder %s29, 2
    %s31 = scalar_select %p30, 0, %s29
    %s32 = ssub.s32 %s19, %s31
    %s33 = ssub.s32 %s20, %s27
    %s34 = sor.u32 %s32, %s33
    %p35 = scmp.eq.s32.totalorder %s34, 0
    %s37 = sadd.s32 %s36, 1
    %s38 = scalar_select %p35, %s36, %s37
    %p41 = pneg %p35
    %p42 = scmp.eq.s32.totalorder %s12, 1
    %p43 = por %p41, %p42
    %p44 = scmp.ne.s32.totalorder %s36, %s39
    %p45 = scmp.eq.s32.totalorder %s12, 0
    %p46 = por %p44, %p45
    %p47 = scmp.ne.s32.totalorder %s36, %s39
    %p48 = scmp.eq.s32.totalorder %s17, 1
    %p49 = por %p47, %p48
    %p50 = scmp.ne.s32.totalorder %s39, %s40
    %p51 = scmp.eq.s32.totalorder %s17, 0
    %p52 = por %p50, %p51
    %p53 = scmp.ne.s32.totalorder %s39, %s40
    %p54 = scmp.eq.s32.totalorder %s18, 1
    %p55 = por %p53, %p54
    %p57 = scmp.ne.s32.totalorder %s40, %s56
    %p58 = scmp.eq.s32.totalorder %s18, 0
    %p59 = por %p57, %p58
    %s60 = ssub.s32 %s19, %s31
    %s61 = ssub.s32 %s20, %s27
    %s62 = sor.u32 %s60, %s61
    %p63 = scmp.eq.s32.totalorder %s62, 0
    %s65 = sadd.s32 %s64, 1
    %s66 = scalar_select %p63, %s64, %s65
    %p69 = pneg %p63
    %p70 = scmp.eq.s32.totalorder %s12, 1
    %p71 = por %p69, %p70
    %p72 = scmp.ne.s32.totalorder %s64, %s67
    %p73 = scmp.eq.s32.totalorder %s12, 0
    %p74 = por %p72, %p73
    %p75 = scmp.ne.s32.totalorder %s64, %s67
    %p76 = scmp.eq.s32.totalorder %s17, 1
    %p77 = por %p75, %p76
    %p78 = scmp.ne.s32.totalorder %s67, %s68
    %p79 = scmp.eq.s32.totalorder %s17, 0
    %p80 = por %p78, %p79
    %p81 = scmp.ne.s32.totalorder %s67, %s68
    %p82 = scmp.eq.s32.totalorder %s18, 1
    %p83 = por %p81, %p82
    %p85 = scmp.ne.s32.totalorder %s68, %s84
    %p86 = scmp.eq.s32.totalorder %s18, 0
    %p87 = por %p85, %p86
    %s89 = sadd.s32 %s88, 1
    %p92 = scmp.eq.s32.totalorder %s12, 1
    %p93 = scmp.ne.s32.totalorder %s88, %s90
    %p94 = scmp.eq.s32.totalorder %s12, 0
    %p95 = por %p93, %p94
    %p96 = scmp.ne.s32.totalorder %s88, %s90
    %p97 = scmp.eq.s32.totalorder %s17, 1
    %p98 = por %p96, %p97
    %p99 = scmp.ne.s32.totalorder %s90, %s91
    %p100 = scmp.eq.s32.totalorder %s17, 0
    %p101 = por %p99, %p100
    %p102 = scmp.ne.s32.totalorder %s90, %s91
    %p103 = scmp.eq.s32.totalorder %s18, 1
    %p104 = por %p102, %p103
    %p106 = scmp.ne.s32.totalorder %s91, %s105
    %p107 = scmp.eq.s32.totalorder %s18, 0
    %p108 = por %p106, %p107
    %s110 = sadd.s32 %s109, 1
    %p113 = scmp.eq.s32.totalorder %s12, 1
    %p114 = scmp.ne.s32.totalorder %s109, %s111
    %p115 = scmp.eq.s32.totalorder %s12, 0
    %p116 = por %p114, %p115
    %p117 = scmp.ne.s32.totalorder %s109, %s111
    %p118 = scmp.eq.s32.totalorder %s17, 1
    %p119 = por %p117, %p118
    %p120 = scmp.ne.s32.totalorder %s111, %s112
    %p121 = scmp.eq.s32.totalorder %s17, 0
    %p122 = por %p120, %p121
    %p123 = scmp.ne.s32.totalorder %s111, %s112
    %p124 = scmp.eq.s32.totalorder %s18, 1
    %p125 = por %p123, %p124
    %p127 = scmp.ne.s32.totalorder %s112, %s126
    %p128 = scmp.eq.s32.totalorder %s18, 0
    %p129 = por %p127, %p128
    %s130 = ssub.s32 %s19, %s31
    %s131 = ssub.s32 %s20, %s27
    %s132 = sor.u32 %s130, %s131
    %p133 = scmp.eq.s32.totalorder %s132, 0
    %s135 = sadd.s32 %s134, 1
    %s136 = scalar_select %p133, %s134, %s135
    %p139 = pneg %p133
    %p140 = scmp.eq.s32.totalorder %s12, 1
    %p141 = por %p139, %p140
    %p142 = scmp.ne.s32.totalorder %s134, %s137
    %p143 = scmp.eq.s32.totalorder %s12, 0
    %p144 = por %p142, %p143
    %p145 = scmp.ne.s32.totalorder %s134, %s137
    %p146 = scmp.eq.s32.totalorder %s17, 1
    %p147 = por %p145, %p146
    %p148 = scmp.ne.s32.totalorder %s137, %s138
    %p149 = scmp.eq.s32.totalorder %s17, 0
    %p150 = por %p148, %p149
    %p151 = scmp.ne.s32.totalorder %s137, %s138
    %p152 = scmp.eq.s32.totalorder %s18, 1
    %p153 = por %p151, %p152
    %p155 = scmp.ne.s32.totalorder %s138, %s154
    %p156 = scmp.eq.s32.totalorder %s18, 0
    %p157 = por %p155, %p156
    %s158 = ssub.s32 %s19, %s31
    %s159 = ssub.s32 %s20, %s27
    %s160 = sor.u32 %s158, %s159
    %p161 = scmp.eq.s32.totalorder %s160, 0
    %s163 = sadd.s32 %s162, 1
    %s164 = scalar_select %p161, %s162, %s163
    %p167 = pneg %p161
    %p168 = scmp.eq.s32.totalorder %s12, 1
    %p169 = por %p167, %p168
    %p170 = scmp.ne.s32.totalorder %s162, %s165
    %p171 = scmp.eq.s32.totalorder %s12, 0
    %p172 = por %p170, %p171
    %p173 = scmp.ne.s32.totalorder %s162, %s165
    %p174 = scmp.eq.s32.totalorder %s17, 1
    %p175 = por %p173, %p174
    %p176 = scmp.ne.s32.totalorder %s165, %s166
    %p177 = scmp.eq.s32.totalorder %s17, 0
    %p178 = por %p176, %p177
    %p179 = scmp.ne.s32.totalorder %s165, %s166
    %p180 = scmp.eq.s32.totalorder %s18, 1
    %p181 = por %p179, %p180
    %p183 = scmp.ne.s32.totalorder %s166, %s182
    %p184 = scmp.eq.s32.totalorder %s18, 0
    %p185 = por %p183, %p184
    %p186 = scmp.le.s32.totalorder 1, %s12
    %p187 = scmp.lt.s32.totalorder %s12, 3
    %p188 = pnand %p186, %p187
    %p189 = pneg %p188
    // Predicated region
    $region9: #{aff_block.6} parent=5 // pred_check
      _
    $region10: #{aff_block.6} parent=5 // pred_check_branch
      %191 = sbr.rel (%p188) target = $region12
    $region11: #{aff_block.6} parent=5 // pred_region
      %s192 = ssub.s32 %s12, 1
      // Predicated region
      $region13: #{aff_block.6} parent=11 // pred_check
        %p193 = pneg %p101
      $region14: #{aff_block.6} parent=11 // pred_check_branch
        %195 = sbr.rel (%p193) target = $region16
      $region15: #{aff_block.6} parent=11 // pred_region
        _
      $region16: #{aff_block.6} parent=11 // pred_fallthru
        _
      // Predicated region
      $region17: #{aff_block.6} parent=11 // pred_check
        %p196 = pneg %p122
      $region18: #{aff_block.6} parent=11 // pred_check_branch
        %198 = sbr.rel (%p196) target = $region20
      $region19: #{aff_block.6} parent=11 // pred_region
        _
      $region20: #{aff_block.6} parent=11 // pred_fallthru
        _
    $region12: #{aff_block.6} parent=5 // pred_fallthru
      _
    %p199 = scmp.lt.s32.totalorder %s12, 2
    // Predicated region
    $region21: #{aff_block.6} parent=5 // pred_check
      %p200 = pneg %p199
    $region22: #{aff_block.6} parent=5 // pred_check_branch
      %202 = sbr.rel (%p200) target = $region24
    $region23: #{aff_block.6} parent=5 // pred_region
      // Predicated region
      $region25: #{aff_block.6} parent=23 // pred_check
        %p203 = pneg %p46
      $region26: #{aff_block.6} parent=23 // pred_check_branch
        %205 = sbr.rel (%p203) target = $region28
      $region27: #{aff_block.6} parent=23 // pred_region
        %s206 = smul.u32 2, %s20
        %p207 = scmp.lt.s32.totalorder %s19, 1
        %s208 = scalar_select %p207, %s19, 1
        %p209 = scmp.lt.s32.totalorder %s206, 1
        %s210 = scalar_select %p209, %s206, 1
        %s211 = smul.addr %s208, 2
        %s212 = sadd.s32 %s210, %s211
        %s213 = smul.addr %s212, 4
        %s214 = scalar_lea.vmem %s0, %s213
        %s215 = smul.u32 2, %s20
      $region28: #{aff_block.6} parent=23 // pred_fallthru
        _
      // Predicated region
      $region29: #{aff_block.6} parent=23 // pred_check
        %p216 = pneg %p74
      $region30: #{aff_block.6} parent=23 // pred_check_branch
        %218 = sbr.rel (%p216) target = $region32
      $region31: #{aff_block.6} parent=23 // pred_region
        %s219 = smul.u32 2, %s20
        %p220 = scmp.lt.s32.totalorder %s19, 1
        %s221 = scalar_select %p220, %s19, 1
        %p222 = scmp.lt.s32.totalorder %s219, 1
        %s223 = scalar_select %p222, %s219, 1
        %s224 = smul.addr %s221, 2
        %s225 = sadd.s32 %s223, %s224
        %s226 = smul.addr %s225, 4
        %s227 = scalar_lea.vmem %s1, %s226
        %s228 = smul.u32 2, %s20
      $region32: #{aff_block.6} parent=23 // pred_fallthru
        _
    $region24: #{aff_block.6} parent=5 // pred_fallthru
      _
    %p229 = scmp.le.s32.totalorder 1, %s12
    %p230 = scmp.lt.s32.totalorder %s12, 3
    %p231 = pnand %p229, %p230
    %p232 = pneg %p231
    // Predicated region
    $region33: #{aff_block.6} parent=5 // pred_check
      _
    $region34: #{aff_block.6} parent=5 // pred_check_branch
      %234 = sbr.rel (%p231) target = $region36
    $region35: #{aff_block.6} parent=5 // pred_region
      %s235 = ssub.s32 %s12, 1
      %s236 = smul.u32 2, %s22
      %p237 = scmp.lt.s32.totalorder %s21, 1
      %s238 = scalar_select %p237, %s21, 1
      %p239 = scmp.lt.s32.totalorder %s236, 1
      %s240 = scalar_select %p239, %s236, 1
      %s241 = smul.addr %s238, 2
      %s242 = sadd.s32 %s240, %s241
      %s243 = smul.addr %s242, 4
      %s244 = scalar_lea.vmem %s0, %s243
      %p245 = pneg %p52
      %p246 = pneg %p49
      %s247 = smul.u32 2, %s22
      %p248 = scmp.lt.s32.totalorder %s21, 1
      %s249 = scalar_select %p248, %s21, 1
      %p250 = scmp.lt.s32.totalorder %s247, 1
      %s251 = scalar_select %p250, %s247, 1
      %s252 = smul.addr %s249, 2
      %s253 = sadd.s32 %s251, %s252
      %s254 = smul.addr %s253, 4
      %s255 = scalar_lea.vmem %s1, %s254
      %p256 = pneg %p80
      %p257 = pneg %p77
      %p258 = pneg %p101
      %p259 = pneg %p98
      %p260 = pneg %p122
      %p261 = pneg %p119
      %p262 = pneg %p150
      %p263 = pneg %p147
      %s264 = smul.u32 2, %s22
      %p265 = scmp.lt.s32.totalorder %s21, 1
      %s266 = scalar_select %p265, %s21, 1
      %p267 = scmp.lt.s32.totalorder %s264, 1
      %s268 = scalar_select %p267, %s264, 1
      %s269 = smul.addr %s266, 2
      %s270 = sadd.s32 %s268, %s269
      %s271 = smul.addr %s270, 4
      %s272 = scalar_lea.vmem %s4, %s271
      %p273 = pneg %p178
      %p274 = pneg %p175
      %s275 = smul.u32 2, %s22
      %p276 = scmp.lt.s32.totalorder %s21, 1
      %s277 = scalar_select %p276, %s21, 1
      %p278 = scmp.lt.s32.totalorder %s275, 1
      %s279 = scalar_select %p278, %s275, 1
      %s280 = smul.addr %s277, 2
      %s281 = sadd.s32 %s279, %s280
      %s282 = smul.addr %s281, 4
      %s283 = scalar_lea.vmem %s5, %s282
      %s284 = smul.u32 2, %s22
      %p285 = scmp.lt.s32.totalorder %s21, 1
      %s286 = scalar_select %p285, %s21, 1
      %p287 = scmp.lt.s32.totalorder %s284, 1
      %s288 = scalar_select %p287, %s284, 1
      %s289 = smul.addr %s286, 2
      %s290 = sadd.s32 %s288, %s289
      %s291 = smul.addr %s290, 4
      %s292 = scalar_lea.vmem %s0, %s291
      %s293 = smul.u32 2, %s22
      %s294 = smul.u32 2, %s22
      %p295 = scmp.lt.s32.totalorder %s21, 1
      %s296 = scalar_select %p295, %s21, 1
      %p297 = scmp.lt.s32.totalorder %s294, 1
      %s298 = scalar_select %p297, %s294, 1
      %s299 = smul.addr %s296, 2
      %s300 = sadd.s32 %s298, %s299
      %s301 = smul.addr %s300, 4
      %s302 = scalar_lea.vmem %s1, %s301
      %s303 = smul.u32 2, %s22
      %s304 = smul.u32 2, %s22
      %p305 = scmp.lt.s32.totalorder %s21, 1
      %s306 = scalar_select %p305, %s21, 1
      %p307 = scmp.lt.s32.totalorder %s304, 1
      %s308 = scalar_select %p307, %s304, 1
      %s309 = smul.addr %s306, 2
      %s310 = sadd.s32 %s308, %s309
      %s311 = smul.addr %s310, 4
      %s312 = scalar_lea.vmem %s4, %s311
      %s313 = smul.u32 2, %s22
      %s314 = smul.u32 2, %s22
      %p315 = scmp.lt.s32.totalorder %s21, 1
      %s316 = scalar_select %p315, %s21, 1
      %p317 = scmp.lt.s32.totalorder %s314, 1
      %s318 = scalar_select %p317, %s314, 1
      %s319 = smul.addr %s316, 2
      %s320 = sadd.s32 %s318, %s319
      %s321 = smul.addr %s320, 4
      %s322 = scalar_lea.vmem %s5, %s321
      %s323 = smul.u32 2, %s22
      %v324 = vld [vmem:[%s292] sm:$0xff]
      %v325 = vld [vmem:[%s302] sm:$0xff]
      %v326 = vld [vmem:[%s2] sm:$0xff]
      %328 = vrot.lane.b32.xlu0 %v326, 124
      %v329 = vpop.permute.xlu0 %328
      %331 = vst [vmem:[#allocation1] ss:$2 sm:$0xff] %v325
      %v332 = vld.sshfl [vmem:[#allocation1] sm:$0xff pattern:$0x75316420]
      %v333 = vld.sshfl [vmem:[#allocation1 + $0x8] sm:$0xff pattern:$0x75316420]
      %vm334 = vcmask 31744
      %v335 = vsel %vm334, %v329, 0
      %vm337 = vcmask 1043456
      %v338 = vsel %vm337, %v332, 0
      %v340 = vsel %vm337, %v333, 0
      %342 = vmatpush.msra.mxu0 0.0
      %343 = vmatpush.msra.mxu0 0.0
      %344 = vmatpush.msra.mxu0 0.0
      %345 = vmatpush.msra.mxu0 0.0
      %346 = vmatpush.msra.mxu0 0.0
      %347 = vmatpush.msra.mxu0 0.0
      %348 = vmatpush.msra.mxu0 0.0
      %349 = vmatpush.msra.mxu0 0.0
      %350 = vmatpush.msra.mxu0 0.0
      %351 = vmatpush.msra.mxu0 0.0
      %352 = vmatpush.msra.mxu0 0.0
      %353 = vmatpush.msra.mxu0 0.0
      %354 = vmatpush.msra.mxu0 0.0
      %355 = vmatpush.msra.mxu0 0.0
      %356 = vmatpush.msra.mxu0 0.0
      %357 = vmatpush.msra.mxu0 %v338
      %358 = vmatmul.f32.gmra.mxu0 %v335
      %v359 = vpop.f32.mrf.mxu0
      %v360 = vadd.f32 0.0, %v359
      %361 = vdwg.mxu0
      %362 = vmatpush.msra.mxu0 0.0
      %363 = vmatpush.msra.mxu0 0.0
      %364 = vmatpush.msra.mxu0 0.0
      %365 = vmatpush.msra.mxu0 0.0
      %366 = vmatpush.msra.mxu0 0.0
      %367 = vmatpush.msra.mxu0 0.0
      %368 = vmatpush.msra.mxu0 0.0
      %369 = vmatpush.msra.mxu0 0.0
      %370 = vmatpush.msra.mxu0 0.0
      %371 = vmatpush.msra.mxu0 0.0
      %372 = vmatpush.msra.mxu0 0.0
      %373 = vmatpush.msra.mxu0 0.0
      %374 = vmatpush.msra.mxu0 0.0
      %375 = vmatpush.msra.mxu0 0.0
      %376 = vmatpush.msra.mxu0 0.0
      %377 = vmatpush.msra.mxu0 %v340
      %378 = vmatmul.f32.gmra.mxu0 %v335
      %v379 = vpop.f32.mrf.mxu0
      %v380 = vadd.f32 0.0, %v379
      %381 = vdwg.mxu0
      %383 = vst [vmem:[#allocation1] ss:$2 sm:$0xff] %v324
      %v384 = vld.sshfl [vmem:[#allocation1] sm:$0xff pattern:$0x75316420]
      %v385 = vld.sshfl [vmem:[#allocation1 + $0x8] sm:$0xff pattern:$0x75316420]
      %v386 = vsel %vm334, %v326, 0
      %v388 = vsel %vm337, %v384, 0
      %v390 = vsel %vm337, %v385, 0
      %392 = vmatpush.msra.mxu0 0.0
      %393 = vmatpush.msra.mxu0 0.0
      %394 = vmatpush.msra.mxu0 0.0
      %395 = vmatpush.msra.mxu0 0.0
      %396 = vmatpush.msra.mxu0 0.0
      %397 = vmatpush.msra.mxu0 0.0
      %398 = vmatpush.msra.mxu0 0.0
      %399 = vmatpush.msra.mxu0 0.0
      %400 = vmatpush.msra.mxu0 0.0
      %401 = vmatpush.msra.mxu0 0.0
      %402 = vmatpush.msra.mxu0 0.0
      %403 = vmatpush.msra.mxu0 0.0
      %404 = vmatpush.msra.mxu0 0.0
      %405 = vmatpush.msra.mxu0 0.0
      %406 = vmatpush.msra.mxu0 0.0
      %407 = vmatpush.msra.mxu0 %v388
      %408 = vmatmul.f32.gmra.mxu0 %v386
      %v409 = vpop.f32.mrf.mxu0
      %v410 = vadd.f32 %v360, %v409
      %411 = vdwg.mxu0
      %412 = vmatpush.msra.mxu0 0.0
      %413 = vmatpush.msra.mxu0 0.0
      %414 = vmatpush.msra.mxu0 0.0
      %415 = vmatpush.msra.mxu0 0.0
      %416 = vmatpush.msra.mxu0 0.0
      %417 = vmatpush.msra.mxu0 0.0
      %418 = vmatpush.msra.mxu0 0.0
      %419 = vmatpush.msra.mxu0 0.0
      %420 = vmatpush.msra.mxu0 0.0
      %421 = vmatpush.msra.mxu0 0.0
      %422 = vmatpush.msra.mxu0 0.0
      %423 = vmatpush.msra.mxu0 0.0
      %424 = vmatpush.msra.mxu0 0.0
      %425 = vmatpush.msra.mxu0 0.0
      %426 = vmatpush.msra.mxu0 0.0
      %427 = vmatpush.msra.mxu0 %v390
      %428 = vmatmul.f32.gmra.mxu0 %v386
      %v429 = vpop.f32.mrf.mxu0
      %v430 = vadd.f32 %v380, %v429
      %431 = vdwg.mxu0
      %v432 = vld [vmem:[%s3] sm:$0xff]
      %434 = vset.pattern.permute.xlu0 0
      %435 = vperm.xlu0 %434, %v432
      %v436 = vpop.permute.xlu0 %435
      %v438 = vadd.f32 %v410, %v436
      %v439 = vadd.f32 %v430, %v436
      %v442 = vrot.slane %v439, 4
      %v443 = vsel %vm337, %v438, %v442
      %vm445 = vcmask 130052
      %vm446 = vmor %vm445, %vm337
      %447 = vst.msk [vmem:[%s312] sm:$0xff] %vm446, %v443
      %448 = vst.sshfl [vmem:[#allocation1] sm:$0xff pattern:$0x75316420] %v438
      %449 = vst.sshfl [vmem:[#allocation1 + $0x8] sm:$0xff pattern:$0x75316420] %v439
      %s450 = scalar_lea.vmem [#allocation1], 1
      %v451 = vld [vmem:[%s450] ss:$2 sm:$0xff]
      %453 = vst.msk [vmem:[%s322] sm:$0xff] %vm446, %v451
      %s454 = smul.u32 2, %s22
      %p455 = scmp.lt.s32.totalorder %s21, 1
      %s456 = scalar_select %p455, %s21, 1
      %p457 = scmp.lt.s32.totalorder %s454, 1
      %s458 = scalar_select %p457, %s454, 1
      %s459 = smul.addr %s456, 2
      %s460 = sadd.s32 %s458, %s459
      %s461 = smul.addr %s460, 4
      %s462 = scalar_lea.vmem %s4, %s461
      %s463 = smul.u32 2, %s22
      %p464 = scmp.lt.s32.totalorder %s21, 1
      %s465 = scalar_select %p464, %s21, 1
      %p466 = scmp.lt.s32.totalorder %s463, 1
      %s467 = scalar_select %p466, %s463, 1
      %s468 = smul.addr %s465, 2
      %s469 = sadd.s32 %s467, %s468
      %s470 = smul.addr %s469, 4
      %s471 = scalar_lea.vmem %s5, %s470
      // Predicated region
      $region37: #{aff_block.6} parent=35 // pred_check
        %p472 = pneg %p147
      $region38: #{aff_block.6} parent=35 // pred_check_branch
        %474 = sbr.rel (%p472) target = $region40
      $region39: #{aff_block.6} parent=35 // pred_region
        %s475 = smul.u32 2, %s22
      $region40: #{aff_block.6} parent=35 // pred_fallthru
        _
      // Predicated region
      $region41: #{aff_block.6} parent=35 // pred_check
        %p476 = pneg %p175
      $region42: #{aff_block.6} parent=35 // pred_check_branch
        %478 = sbr.rel (%p476) target = $region44
      $region43: #{aff_block.6} parent=35 // pred_region
        %s479 = smul.u32 2, %s22
      $region44: #{aff_block.6} parent=35 // pred_fallthru
        _
    $region36: #{aff_block.6} parent=5 // pred_fallthru
      _
    %p480 = scmp.le.s32.totalorder 2, %s12
    // Predicated region
    $region45: #{aff_block.6} parent=5 // pred_check
      %p481 = pneg %p480
    $region46: #{aff_block.6} parent=5 // pred_check_branch
      %483 = sbr.rel (%p481) target = $region48
    $region47: #{aff_block.6} parent=5 // pred_region
      %s484 = ssub.s32 %s12, 2
      // Predicated region
      $region49: #{aff_block.6} parent=47 // pred_check
        %p485 = pneg %p153
      $region50: #{aff_block.6} parent=47 // pred_check_branch
        %487 = sbr.rel (%p485) target = $region52
      $region51: #{aff_block.6} parent=47 // pred_region
        %s488 = smul.u32 2, %s24
        %p489 = scmp.lt.s32.totalorder %s23, 1
        %s490 = scalar_select %p489, %s23, 1
        %p491 = scmp.lt.s32.totalorder %s488, 1
        %s492 = scalar_select %p491, %s488, 1
        %s493 = smul.addr %s490, 2
        %s494 = sadd.s32 %s492, %s493
        %s495 = smul.addr %s494, 4
        %s496 = scalar_lea.vmem %s4, %s495
      $region52: #{aff_block.6} parent=47 // pred_fallthru
        _
      // Predicated region
      $region53: #{aff_block.6} parent=47 // pred_check
        %p497 = pneg %p181
      $region54: #{aff_block.6} parent=47 // pred_check_branch
        %499 = sbr.rel (%p497) target = $region56
      $region55: #{aff_block.6} parent=47 // pred_region
        %s500 = smul.u32 2, %s24
        %p501 = scmp.lt.s32.totalorder %s23, 1
        %s502 = scalar_select %p501, %s23, 1
        %p503 = scmp.lt.s32.totalorder %s500, 1
        %s504 = scalar_select %p503, %s500, 1
        %s505 = smul.addr %s502, 2
        %s506 = sadd.s32 %s504, %s505
        %s507 = smul.addr %s506, 4
        %s508 = scalar_lea.vmem %s5, %s507
      $region56: #{aff_block.6} parent=47 // pred_fallthru
        _
    $region48: #{aff_block.6} parent=5 // pred_fallthru
      _
  $region6: #{aff_block.6} parent=0 // loop_footer
    %s16 = sadd.s32 1, %s12
  $region7: #{aff_block.6} parent=0 // loop_footer_branch
    %11 = sbr.rel target = $region3
  $region8: #{aff_block.6} parent=0 // loop_exit
    _

// kernel: aff_block.7
$region0: #{aff_block.7}
  #allocation0 [shape = 'u32[]', space=smem, size = 0x4, offset = 0x4, fixed_abs, tag = 'smem constant byte address 0x4 - core index']
  #allocation1 [shape = 'u32[72,128]{1,0:T(1,128)}', space=vmem, size = 0x9000, scoped, tag = 'internal scratch']
  %s0 = inlined_call_operand.vmem [shape: f32[2,4,256], index: 0, kind: input, shape index: {}]
  %s1 = inlined_call_operand.vmem [shape: f32[2,4,256], index: 1, kind: input, shape index: {}]
  %s2 = inlined_call_operand.vmem [shape: f32[2,4,256], index: 2, kind: input, shape index: {}]
  %s3 = inlined_call_operand.vmem [shape: f32[4,4], index: 3, kind: input, shape index: {}]
  %s4 = inlined_call_operand.vmem [shape: f32[4,1], index: 4, kind: input, shape index: {}]
  %s5 = inlined_call_operand.vmem [shape: f32[4,1], index: 5, kind: input, shape index: {}]
  %s6 = inlined_call_operand.vmem [shape: f32[4,1], index: 6, kind: input, shape index: {}]
  %s7 = inlined_call_operand.vmem [shape: f32[4,1], index: 7, kind: input, shape index: {}]
  %s8 = inlined_call_operand.vmem [shape: f32[8,4], index: 8, kind: input, shape index: {}]
  %s9 = inlined_call_operand.vmem [shape: f32[8,1], index: 9, kind: input, shape index: {}]
  %s10 = inlined_call_operand.vmem [shape: f32[4,4], index: 10, kind: input, shape index: {}]
  %s11 = inlined_call_operand.vmem [shape: f32[4,1], index: 11, kind: input, shape index: {}]
  %s12 = inlined_call_operand.vmem [shape: f32[4,1], index: 12, kind: input, shape index: {}]
  %s13 = inlined_call_operand.vmem [shape: f32[2,4,256], index: 13, kind: output, shape index: {}]
  %s14 = sld [smem:[#allocation0]]
  $region85: #{aff_block.7} parent=0
    _
  %s16 = ssub.s32 1, %s14
  %s17 = scalar_select 0, %s16, %s14
  loop: start=0, step=1, limit=4
  $region2: #{aff_block.7} parent=0 // loop_pre_header
    _
  $region3: #{aff_block.7} parent=0 // loop_header
    %s19 = sphi 0, %s23
    %p20 = scmp.ge.s32.totalorder %s19, 4
    %s26 = sphi 0, %s38
    %s27 = sphi 0, %s34
    %s28 = sphi 0, %s26
    %s29 = sphi 0, %s27
    %s30 = sphi 0, %s28
    %s31 = sphi 0, %s29
    %s43 = sphi 0, %s45
    %s46 = sphi 0, %s43
    %s47 = sphi 0, %s46
    %s63 = sphi 0, %s47
    %s71 = sphi 0, %s73
    %s74 = sphi 0, %s71
    %s75 = sphi 0, %s74
    %s91 = sphi 0, %s75
    %s99 = sphi 0, %s101
    %s102 = sphi 0, %s99
    %s103 = sphi 0, %s102
    %s119 = sphi 0, %s103
    %s123 = sphi 0, %s123
    %s125 = sphi 0, %s123
    %s126 = sphi 0, %s125
    %s140 = sphi 0, %s126
    %s144 = sphi 0, %s144
    %s146 = sphi 0, %s144
    %s147 = sphi 0, %s146
    %s161 = sphi 0, %s147
    %s165 = sphi 0, %s165
    %s167 = sphi 0, %s165
    %s168 = sphi 0, %s167
    %s182 = sphi 0, %s168
    %s186 = sphi 0, %s186
    %s188 = sphi 0, %s186
    %s189 = sphi 0, %s188
    %s203 = sphi 0, %s189
    %s207 = sphi 0, %s207
    %s209 = sphi 0, %s207
    %s210 = sphi 0, %s209
    %s224 = sphi 0, %s210
    %s228 = sphi 0, %s228
    %s230 = sphi 0, %s228
    %s231 = sphi 0, %s230
    %s245 = sphi 0, %s231
    %s249 = sphi 0, %s249
    %s251 = sphi 0, %s249
    %s252 = sphi 0, %s251
    %s266 = sphi 0, %s252
    %s270 = sphi 0, %s270
    %s272 = sphi 0, %s270
    %s273 = sphi 0, %s272
    %s287 = sphi 0, %s273
    %s291 = sphi 0, %s291
    %s293 = sphi 0, %s291
    %s294 = sphi 0, %s293
    %s308 = sphi 0, %s294
    %s312 = sphi 0, %s312
    %s314 = sphi 0, %s312
    %s315 = sphi 0, %s314
    %s329 = sphi 0, %s315
    %s337 = sphi 0, %s339
    %s340 = sphi 0, %s337
    %s341 = sphi 0, %s340
    %s357 = sphi 0, %s341
  $region4: #{aff_block.7} parent=0 // loop_header_branch
    %22 = sbr.rel (%p20) target = $region8
  $region5: #{aff_block.7} parent=0 // loop_body
    %s24 = ssub.s32 %s19, 1
    %s25 = ssub.s32 %s19, 2
    %s32 = sadd.s32 1, %s27
    %p33 = scmp.ge.s32.totalorder %s32, 1
    %s34 = scalar_select %p33, 0, %s32
    %s35 = sadd.s32 1, %s26
    %s36 = scalar_select %p33, %s35, %s26
    %p37 = scmp.ge.s32.totalorder %s36, 2
    %s38 = scalar_select %p37, 0, %s36
    %s39 = ssub.s32 %s26, %s38
    %s40 = ssub.s32 %s27, %s34
    %s41 = sor.u32 %s39, %s40
    %p42 = scmp.eq.s32.totalorder %s41, 0
    %s44 = sadd.s32 %s43, 1
    %s45 = scalar_select %p42, %s43, %s44
    %p48 = pneg %p42
    %p49 = scmp.eq.s32.totalorder %s19, 1
    %p50 = por %p48, %p49
    %p51 = scmp.ne.s32.totalorder %s43, %s46
    %p52 = scmp.eq.s32.totalorder %s19, 0
    %p53 = por %p51, %p52
    %p54 = scmp.ne.s32.totalorder %s43, %s46
    %p55 = scmp.eq.s32.totalorder %s24, 1
    %p56 = por %p54, %p55
    %p57 = scmp.ne.s32.totalorder %s46, %s47
    %p58 = scmp.eq.s32.totalorder %s24, 0
    %p59 = por %p57, %p58
    %p60 = scmp.ne.s32.totalorder %s46, %s47
    %p61 = scmp.eq.s32.totalorder %s25, 1
    %p62 = por %p60, %p61
    %p64 = scmp.ne.s32.totalorder %s47, %s63
    %p65 = scmp.eq.s32.totalorder %s25, 0
    %p66 = por %p64, %p65
    %s67 = ssub.s32 %s26, %s38
    %s68 = ssub.s32 %s27, %s34
    %s69 = sor.u32 %s67, %s68
    %p70 = scmp.eq.s32.totalorder %s69, 0
    %s72 = sadd.s32 %s71, 1
    %s73 = scalar_select %p70, %s71, %s72
    %p76 = pneg %p70
    %p77 = scmp.eq.s32.totalorder %s19, 1
    %p78 = por %p76, %p77
    %p79 = scmp.ne.s32.totalorder %s71, %s74
    %p80 = scmp.eq.s32.totalorder %s19, 0
    %p81 = por %p79, %p80
    %p82 = scmp.ne.s32.totalorder %s71, %s74
    %p83 = scmp.eq.s32.totalorder %s24, 1
    %p84 = por %p82, %p83
    %p85 = scmp.ne.s32.totalorder %s74, %s75
    %p86 = scmp.eq.s32.totalorder %s24, 0
    %p87 = por %p85, %p86
    %p88 = scmp.ne.s32.totalorder %s74, %s75
    %p89 = scmp.eq.s32.totalorder %s25, 1
    %p90 = por %p88, %p89
    %p92 = scmp.ne.s32.totalorder %s75, %s91
    %p93 = scmp.eq.s32.totalorder %s25, 0
    %p94 = por %p92, %p93
    %s95 = ssub.s32 %s26, %s38
    %s96 = ssub.s32 %s27, %s34
    %s97 = sor.u32 %s95, %s96
    %p98 = scmp.eq.s32.totalorder %s97, 0
    %s100 = sadd.s32 %s99, 1
    %s101 = scalar_select %p98, %s99, %s100
    %p104 = pneg %p98
    %p105 = scmp.eq.s32.totalorder %s19, 1
    %p106 = por %p104, %p105
    %p107 = scmp.ne.s32.totalorder %s99, %s102
    %p108 = scmp.eq.s32.totalorder %s19, 0
    %p109 = por %p107, %p108
    %p110 = scmp.ne.s32.totalorder %s99, %s102
    %p111 = scmp.eq.s32.totalorder %s24, 1
    %p112 = por %p110, %p111
    %p113 = scmp.ne.s32.totalorder %s102, %s103
    %p114 = scmp.eq.s32.totalorder %s24, 0
    %p115 = por %p113, %p114
    %p116 = scmp.ne.s32.totalorder %s102, %s103
    %p117 = scmp.eq.s32.totalorder %s25, 1
    %p118 = por %p116, %p117
    %p120 = scmp.ne.s32.totalorder %s103, %s119
    %p121 = scmp.eq.s32.totalorder %s25, 0
    %p122 = por %p120, %p121
    %s124 = sadd.s32 %s123, 1
    %p127 = scmp.eq.s32.totalorder %s19, 1
    %p128 = scmp.ne.s32.totalorder %s123, %s125
    %p129 = scmp.eq.s32.totalorder %s19, 0
    %p130 = por %p128, %p129
    %p131 = scmp.ne.s32.totalorder %s123, %s125
    %p132 = scmp.eq.s32.totalorder %s24, 1
    %p133 = por %p131, %p132
    %p134 = scmp.ne.s32.totalorder %s125, %s126
    %p135 = scmp.eq.s32.totalorder %s24, 0
    %p136 = por %p134, %p135
    %p137 = scmp.ne.s32.totalorder %s125, %s126
    %p138 = scmp.eq.s32.totalorder %s25, 1
    %p139 = por %p137, %p138
    %p141 = scmp.ne.s32.totalorder %s126, %s140
    %p142 = scmp.eq.s32.totalorder %s25, 0
    %p143 = por %p141, %p142
    %s145 = sadd.s32 %s144, 1
    %p148 = scmp.eq.s32.totalorder %s19, 1
    %p149 = scmp.ne.s32.totalorder %s144, %s146
    %p150 = scmp.eq.s32.totalorder %s19, 0
    %p151 = por %p149, %p150
    %p152 = scmp.ne.s32.totalorder %s144, %s146
    %p153 = scmp.eq.s32.totalorder %s24, 1
    %p154 = por %p152, %p153
    %p155 = scmp.ne.s32.totalorder %s146, %s147
    %p156 = scmp.eq.s32.totalorder %s24, 0
    %p157 = por %p155, %p156
    %p158 = scmp.ne.s32.totalorder %s146, %s147
    %p159 = scmp.eq.s32.totalorder %s25, 1
    %p160 = por %p158, %p159
    %p162 = scmp.ne.s32.totalorder %s147, %s161
    %p163 = scmp.eq.s32.totalorder %s25, 0
    %p164 = por %p162, %p163
    %s166 = sadd.s32 %s165, 1
    %p169 = scmp.eq.s32.totalorder %s19, 1
    %p170 = scmp.ne.s32.totalorder %s165, %s167
    %p171 = scmp.eq.s32.totalorder %s19, 0
    %p172 = por %p170, %p171
    %p173 = scmp.ne.s32.totalorder %s165, %s167
    %p174 = scmp.eq.s32.totalorder %s24, 1
    %p175 = por %p173, %p174
    %p176 = scmp.ne.s32.totalorder %s167, %s168
    %p177 = scmp.eq.s32.totalorder %s24, 0
    %p178 = por %p176, %p177
    %p179 = scmp.ne.s32.totalorder %s167, %s168
    %p180 = scmp.eq.s32.totalorder %s25, 1
    %p181 = por %p179, %p180
    %p183 = scmp.ne.s32.totalorder %s168, %s182
    %p184 = scmp.eq.s32.totalorder %s25, 0
    %p185 = por %p183, %p184
    %s187 = sadd.s32 %s186, 1
    %p190 = scmp.eq.s32.totalorder %s19, 1
    %p191 = scmp.ne.s32.totalorder %s186, %s188
    %p192 = scmp.eq.s32.totalorder %s19, 0
    %p193 = por %p191, %p192
    %p194 = scmp.ne.s32.totalorder %s186, %s188
    %p195 = scmp.eq.s32.totalorder %s24, 1
    %p196 = por %p194, %p195
    %p197 = scmp.ne.s32.totalorder %s188, %s189
    %p198 = scmp.eq.s32.totalorder %s24, 0
    %p199 = por %p197, %p198
    %p200 = scmp.ne.s32.totalorder %s188, %s189
    %p201 = scmp.eq.s32.totalorder %s25, 1
    %p202 = por %p200, %p201
    %p204 = scmp.ne.s32.totalorder %s189, %s203
    %p205 = scmp.eq.s32.totalorder %s25, 0
    %p206 = por %p204, %p205
    %s208 = sadd.s32 %s207, 1
    %p211 = scmp.eq.s32.totalorder %s19, 1
    %p212 = scmp.ne.s32.totalorder %s207, %s209
    %p213 = scmp.eq.s32.totalorder %s19, 0
    %p214 = por %p212, %p213
    %p215 = scmp.ne.s32.totalorder %s207, %s209
    %p216 = scmp.eq.s32.totalorder %s24, 1
    %p217 = por %p215, %p216
    %p218 = scmp.ne.s32.totalorder %s209, %s210
    %p219 = scmp.eq.s32.totalorder %s24, 0
    %p220 = por %p218, %p219
    %p221 = scmp.ne.s32.totalorder %s209, %s210
    %p222 = scmp.eq.s32.totalorder %s25, 1
    %p223 = por %p221, %p222
    %p225 = scmp.ne.s32.totalorder %s210, %s224
    %p226 = scmp.eq.s32.totalorder %s25, 0
    %p227 = por %p225, %p226
    %s229 = sadd.s32 %s228, 1
    %p232 = scmp.eq.s32.totalorder %s19, 1
    %p233 = scmp.ne.s32.totalorder %s228, %s230
    %p234 = scmp.eq.s32.totalorder %s19, 0
    %p235 = por %p233, %p234
    %p236 = scmp.ne.s32.totalorder %s228, %s230
    %p237 = scmp.eq.s32.totalorder %s24, 1
    %p238 = por %p236, %p237
    %p239 = scmp.ne.s32.totalorder %s230, %s231
    %p240 = scmp.eq.s32.totalorder %s24, 0
    %p241 = por %p239, %p240
    %p242 = scmp.ne.s32.totalorder %s230, %s231
    %p243 = scmp.eq.s32.totalorder %s25, 1
    %p244 = por %p242, %p243
    %p246 = scmp.ne.s32.totalorder %s231, %s245
    %p247 = scmp.eq.s32.totalorder %s25, 0
    %p248 = por %p246, %p247
    %s250 = sadd.s32 %s249, 1
    %p253 = scmp.eq.s32.totalorder %s19, 1
    %p254 = scmp.ne.s32.totalorder %s249, %s251
    %p255 = scmp.eq.s32.totalorder %s19, 0
    %p256 = por %p254, %p255
    %p257 = scmp.ne.s32.totalorder %s249, %s251
    %p258 = scmp.eq.s32.totalorder %s24, 1
    %p259 = por %p257, %p258
    %p260 = scmp.ne.s32.totalorder %s251, %s252
    %p261 = scmp.eq.s32.totalorder %s24, 0
    %p262 = por %p260, %p261
    %p263 = scmp.ne.s32.totalorder %s251, %s252
    %p264 = scmp.eq.s32.totalorder %s25, 1
    %p265 = por %p263, %p264
    %p267 = scmp.ne.s32.totalorder %s252, %s266
    %p268 = scmp.eq.s32.totalorder %s25, 0
    %p269 = por %p267, %p268
    %s271 = sadd.s32 %s270, 1
    %p274 = scmp.eq.s32.totalorder %s19, 1
    %p275 = scmp.ne.s32.totalorder %s270, %s272
    %p276 = scmp.eq.s32.totalorder %s19, 0
    %p277 = por %p275, %p276
    %p278 = scmp.ne.s32.totalorder %s270, %s272
    %p279 = scmp.eq.s32.totalorder %s24, 1
    %p280 = por %p278, %p279
    %p281 = scmp.ne.s32.totalorder %s272, %s273
    %p282 = scmp.eq.s32.totalorder %s24, 0
    %p283 = por %p281, %p282
    %p284 = scmp.ne.s32.totalorder %s272, %s273
    %p285 = scmp.eq.s32.totalorder %s25, 1
    %p286 = por %p284, %p285
    %p288 = scmp.ne.s32.totalorder %s273, %s287
    %p289 = scmp.eq.s32.totalorder %s25, 0
    %p290 = por %p288, %p289
    %s292 = sadd.s32 %s291, 1
    %p295 = scmp.eq.s32.totalorder %s19, 1
    %p296 = scmp.ne.s32.totalorder %s291, %s293
    %p297 = scmp.eq.s32.totalorder %s19, 0
    %p298 = por %p296, %p297
    %p299 = scmp.ne.s32.totalorder %s291, %s293
    %p300 = scmp.eq.s32.totalorder %s24, 1
    %p301 = por %p299, %p300
    %p302 = scmp.ne.s32.totalorder %s293, %s294
    %p303 = scmp.eq.s32.totalorder %s24, 0
    %p304 = por %p302, %p303
    %p305 = scmp.ne.s32.totalorder %s293, %s294
    %p306 = scmp.eq.s32.totalorder %s25, 1
    %p307 = por %p305, %p306
    %p309 = scmp.ne.s32.totalorder %s294, %s308
    %p310 = scmp.eq.s32.totalorder %s25, 0
    %p311 = por %p309, %p310
    %s313 = sadd.s32 %s312, 1
    %p316 = scmp.eq.s32.totalorder %s19, 1
    %p317 = scmp.ne.s32.totalorder %s312, %s314
    %p318 = scmp.eq.s32.totalorder %s19, 0
    %p319 = por %p317, %p318
    %p320 = scmp.ne.s32.totalorder %s312, %s314
    %p321 = scmp.eq.s32.totalorder %s24, 1
    %p322 = por %p320, %p321
    %p323 = scmp.ne.s32.totalorder %s314, %s315
    %p324 = scmp.eq.s32.totalorder %s24, 0
    %p325 = por %p323, %p324
    %p326 = scmp.ne.s32.totalorder %s314, %s315
    %p327 = scmp.eq.s32.totalorder %s25, 1
    %p328 = por %p326, %p327
    %p330 = scmp.ne.s32.totalorder %s315, %s329
    %p331 = scmp.eq.s32.totalorder %s25, 0
    %p332 = por %p330, %p331
    %s333 = ssub.s32 %s26, %s38
    %s334 = ssub.s32 %s27, %s34
    %s335 = sor.u32 %s333, %s334
    %p336 = scmp.eq.s32.totalorder %s335, 0
    %s338 = sadd.s32 %s337, 1
    %s339 = scalar_select %p336, %s337, %s338
    %p342 = pneg %p336
    %p343 = scmp.eq.s32.totalorder %s19, 1
    %p344 = por %p342, %p343
    %p345 = scmp.ne.s32.totalorder %s337, %s340
    %p346 = scmp.eq.s32.totalorder %s19, 0
    %p347 = por %p345, %p346
    %p348 = scmp.ne.s32.totalorder %s337, %s340
    %p349 = scmp.eq.s32.totalorder %s24, 1
    %p350 = por %p348, %p349
    %p351 = scmp.ne.s32.totalorder %s340, %s341
    %p352 = scmp.eq.s32.totalorder %s24, 0
    %p353 = por %p351, %p352
    %p354 = scmp.ne.s32.totalorder %s340, %s341
    %p355 = scmp.eq.s32.totalorder %s25, 1
    %p356 = por %p354, %p355
    %p358 = scmp.ne.s32.totalorder %s341, %s357
    %p359 = scmp.eq.s32.totalorder %s25, 0
    %p360 = por %p358, %p359
    %p361 = scmp.le.s32.totalorder 1, %s19
    %p362 = scmp.lt.s32.totalorder %s19, 3
    %p363 = pnand %p361, %p362
    %p364 = pneg %p363
    // Predicated region
    $region9: #{aff_block.7} parent=5 // pred_check
      _
    $region10: #{aff_block.7} parent=5 // pred_check_branch
      %366 = sbr.rel (%p363) target = $region12
    $region11: #{aff_block.7} parent=5 // pred_region
      %s367 = ssub.s32 %s19, 1
      // Predicated region
      $region13: #{aff_block.7} parent=11 // pred_check
        %p368 = pneg %p136
      $region14: #{aff_block.7} parent=11 // pred_check_branch
        %370 = sbr.rel (%p368) target = $region16
      $region15: #{aff_block.7} parent=11 // pred_region
        _
      $region16: #{aff_block.7} parent=11 // pred_fallthru
        _
      // Predicated region
      $region17: #{aff_block.7} parent=11 // pred_check
        %p371 = pneg %p157
      $region18: #{aff_block.7} parent=11 // pred_check_branch
        %373 = sbr.rel (%p371) target = $region20
      $region19: #{aff_block.7} parent=11 // pred_region
        _
      $region20: #{aff_block.7} parent=11 // pred_fallthru
        _
      // Predicated region
      $region21: #{aff_block.7} parent=11 // pred_check
        %p374 = pneg %p178
      $region22: #{aff_block.7} parent=11 // pred_check_branch
        %376 = sbr.rel (%p374) target = $region24
      $region23: #{aff_block.7} parent=11 // pred_region
        _
      $region24: #{aff_block.7} parent=11 // pred_fallthru
        _
      // Predicated region
      $region25: #{aff_block.7} parent=11 // pred_check
        %p377 = pneg %p199
      $region26: #{aff_block.7} parent=11 // pred_check_branch
        %379 = sbr.rel (%p377) target = $region28
      $region27: #{aff_block.7} parent=11 // pred_region
        _
      $region28: #{aff_block.7} parent=11 // pred_fallthru
        _
      // Predicated region
      $region29: #{aff_block.7} parent=11 // pred_check
        %p380 = pneg %p220
      $region30: #{aff_block.7} parent=11 // pred_check_branch
        %382 = sbr.rel (%p380) target = $region32
      $region31: #{aff_block.7} parent=11 // pred_region
        _
      $region32: #{aff_block.7} parent=11 // pred_fallthru
        _
      // Predicated region
      $region33: #{aff_block.7} parent=11 // pred_check
        %p383 = pneg %p241
      $region34: #{aff_block.7} parent=11 // pred_check_branch
        %385 = sbr.rel (%p383) target = $region36
      $region35: #{aff_block.7} parent=11 // pred_region
        _
      $region36: #{aff_block.7} parent=11 // pred_fallthru
        _
      // Predicated region
      $region37: #{aff_block.7} parent=11 // pred_check
        %p386 = pneg %p262
      $region38: #{aff_block.7} parent=11 // pred_check_branch
        %388 = sbr.rel (%p386) target = $region40
      $region39: #{aff_block.7} parent=11 // pred_region
        _
      $region40: #{aff_block.7} parent=11 // pred_fallthru
        _
      // Predicated region
      $region41: #{aff_block.7} parent=11 // pred_check
        %p389 = pneg %p283
      $region42: #{aff_block.7} parent=11 // pred_check_branch
        %391 = sbr.rel (%p389) target = $region44
      $region43: #{aff_block.7} parent=11 // pred_region
        _
      $region44: #{aff_block.7} parent=11 // pred_fallthru
        _
      // Predicated region
      $region45: #{aff_block.7} parent=11 // pred_check
        %p392 = pneg %p304
      $region46: #{aff_block.7} parent=11 // pred_check_branch
        %394 = sbr.rel (%p392) target = $region48
      $region47: #{aff_block.7} parent=11 // pred_region
        _
      $region48: #{aff_block.7} parent=11 // pred_fallthru
        _
      // Predicated region
      $region49: #{aff_block.7} parent=11 // pred_check
        %p395 = pneg %p325
      $region50: #{aff_block.7} parent=11 // pred_check_branch
        %397 = sbr.rel (%p395) target = $region52
      $region51: #{aff_block.7} parent=11 // pred_region
        _
      $region52: #{aff_block.7} parent=11 // pred_fallthru
        _
    $region12: #{aff_block.7} parent=5 // pred_fallthru
      _
    %p398 = scmp.lt.s32.totalorder %s19, 2
    // Predicated region
    $region53: #{aff_block.7} parent=5 // pred_check
      %p399 = pneg %p398
    $region54: #{aff_block.7} parent=5 // pred_check_branch
      %401 = sbr.rel (%p399) target = $region56
    $region55: #{aff_block.7} parent=5 // pred_region
      // Predicated region
      $region57: #{aff_block.7} parent=55 // pred_check
        %p402 = pneg %p53
      $region58: #{aff_block.7} parent=55 // pred_check_branch
        %404 = sbr.rel (%p402) target = $region60
      $region59: #{aff_block.7} parent=55 // pred_region
        %s405 = smul.u32 2, %s27
        %p406 = scmp.lt.s32.totalorder %s26, 1
        %s407 = scalar_select %p406, %s26, 1
        %p408 = scmp.lt.s32.totalorder %s405, 1
        %s409 = scalar_select %p408, %s405, 1
        %s410 = smul.addr %s407, 2
        %s411 = sadd.s32 %s409, %s410
        %s412 = smul.addr %s411, 4
        %s413 = scalar_lea.vmem %s0, %s412
        %s414 = smul.u32 2, %s27
      $region60: #{aff_block.7} parent=55 // pred_fallthru
        _
      // Predicated region
      $region61: #{aff_block.7} parent=55 // pred_check
        %p415 = pneg %p81
      $region62: #{aff_block.7} parent=55 // pred_check_branch
        %417 = sbr.rel (%p415) target = $region64
      $region63: #{aff_block.7} parent=55 // pred_region
        %s418 = smul.u32 2, %s27
        %p419 = scmp.lt.s32.totalorder %s26, 1
        %s420 = scalar_select %p419, %s26, 1
        %p421 = scmp.lt.s32.totalorder %s418, 1
        %s422 = scalar_select %p421, %s418, 1
        %s423 = smul.addr %s420, 2
        %s424 = sadd.s32 %s422, %s423
        %s425 = smul.addr %s424, 4
        %s426 = scalar_lea.vmem %s1, %s425
        %s427 = smul.u32 2, %s27
      $region64: #{aff_block.7} parent=55 // pred_fallthru
        _
      // Predicated region
      $region65: #{aff_block.7} parent=55 // pred_check
        %p428 = pneg %p109
      $region66: #{aff_block.7} parent=55 // pred_check_branch
        %430 = sbr.rel (%p428) target = $region68
      $region67: #{aff_block.7} parent=55 // pred_region
        %s431 = smul.u32 2, %s27
        %p432 = scmp.lt.s32.totalorder %s26, 1
        %s433 = scalar_select %p432, %s26, 1
        %p434 = scmp.lt.s32.totalorder %s431, 1
        %s435 = scalar_select %p434, %s431, 1
        %s436 = smul.addr %s433, 2
        %s437 = sadd.s32 %s435, %s436
        %s438 = smul.addr %s437, 4
        %s439 = scalar_lea.vmem %s2, %s438
        %s440 = smul.u32 2, %s27
      $region68: #{aff_block.7} parent=55 // pred_fallthru
        _
    $region56: #{aff_block.7} parent=5 // pred_fallthru
      _
    %p441 = scmp.le.s32.totalorder 1, %s19
    %p442 = scmp.lt.s32.totalorder %s19, 3
    %p443 = pnand %p441, %p442
    %p444 = pneg %p443
    // Predicated region
    $region69: #{aff_block.7} parent=5 // pred_check
      _
    $region70: #{aff_block.7} parent=5 // pred_check_branch
      %446 = sbr.rel (%p443) target = $region72
    $region71: #{aff_block.7} parent=5 // pred_region
      %s447 = ssub.s32 %s19, 1
      %s448 = smul.u32 2, %s29
      %p449 = scmp.lt.s32.totalorder %s28, 1
      %s450 = scalar_select %p449, %s28, 1
      %p451 = scmp.lt.s32.totalorder %s448, 1
      %s452 = scalar_select %p451, %s448, 1
      %s453 = smul.addr %s450, 2
      %s454 = sadd.s32 %s452, %s453
      %s455 = smul.addr %s454, 4
      %s456 = scalar_lea.vmem %s0, %s455
      %p457 = pneg %p59
      %p458 = pneg %p56
      %s459 = smul.u32 2, %s29
      %p460 = scmp.lt.s32.totalorder %s28, 1
      %s461 = scalar_select %p460, %s28, 1
      %p462 = scmp.lt.s32.totalorder %s459, 1
      %s463 = scalar_select %p462, %s459, 1
      %s464 = smul.addr %s461, 2
      %s465 = sadd.s32 %s463, %s464
      %s466 = smul.addr %s465, 4
      %s467 = scalar_lea.vmem %s1, %s466
      %p468 = pneg %p87
      %p469 = pneg %p84
      %s470 = smul.u32 2, %s29
      %p471 = scmp.lt.s32.totalorder %s28, 1
      %s472 = scalar_select %p471, %s28, 1
      %p473 = scmp.lt.s32.totalorder %s470, 1
      %s474 = scalar_select %p473, %s470, 1
      %s475 = smul.addr %s472, 2
      %s476 = sadd.s32 %s474, %s475
      %s477 = smul.addr %s476, 4
      %s478 = scalar_lea.vmem %s2, %s477
      %p479 = pneg %p115
      %p480 = pneg %p112
      %p481 = pneg %p136
      %p482 = pneg %p133
      %p483 = pneg %p157
      %p484 = pneg %p154
      %p485 = pneg %p178
      %p486 = pneg %p175
      %p487 = pneg %p199
      %p488 = pneg %p196
      %p489 = pneg %p220
      %p490 = pneg %p217
      %p491 = pneg %p241
      %p492 = pneg %p238
      %p493 = pneg %p262
      %p494 = pneg %p259
      %p495 = pneg %p283
      %p496 = pneg %p280
      %p497 = pneg %p304
      %p498 = pneg %p301
      %p499 = pneg %p325
      %p500 = pneg %p322
      %p501 = pneg %p353
      %p502 = pneg %p350
      %s503 = smul.u32 2, %s29
      %p504 = scmp.lt.s32.totalorder %s28, 1
      %s505 = scalar_select %p504, %s28, 1
      %p506 = scmp.lt.s32.totalorder %s503, 1
      %s507 = scalar_select %p506, %s503, 1
      %s508 = smul.addr %s505, 2
      %s509 = sadd.s32 %s507, %s508
      %s510 = smul.addr %s509, 4
      %s511 = scalar_lea.vmem %s13, %s510
      %s512 = smul.u32 2, %s29
      %p513 = scmp.lt.s32.totalorder %s28, 1
      %s514 = scalar_select %p513, %s28, 1
      %p515 = scmp.lt.s32.totalorder %s512, 1
      %s516 = scalar_select %p515, %s512, 1
      %s517 = smul.addr %s514, 2
      %s518 = sadd.s32 %s516, %s517
      %s519 = smul.addr %s518, 4
      %s520 = scalar_lea.vmem %s0, %s519
      %s521 = smul.u32 2, %s29
      %s522 = smul.u32 2, %s29
      %p523 = scmp.lt.s32.totalorder %s28, 1
      %s524 = scalar_select %p523, %s28, 1
      %p525 = scmp.lt.s32.totalorder %s522, 1
      %s526 = scalar_select %p525, %s522, 1
      %s527 = smul.addr %s524, 2
      %s528 = sadd.s32 %s526, %s527
      %s529 = smul.addr %s528, 4
      %s530 = scalar_lea.vmem %s1, %s529
      %s531 = smul.u32 2, %s29
      %s532 = smul.u32 2, %s29
      %p533 = scmp.lt.s32.totalorder %s28, 1
      %s534 = scalar_select %p533, %s28, 1
      %p535 = scmp.lt.s32.totalorder %s532, 1
      %s536 = scalar_select %p535, %s532, 1
      %s537 = smul.addr %s534, 2
      %s538 = sadd.s32 %s536, %s537
      %s539 = smul.addr %s538, 4
      %s540 = scalar_lea.vmem %s2, %s539
      %s541 = smul.u32 2, %s29
      %s542 = smul.u32 2, %s29
      %p543 = scmp.lt.s32.totalorder %s28, 1
      %s544 = scalar_select %p543, %s28, 1
      %p545 = scmp.lt.s32.totalorder %s542, 1
      %s546 = scalar_select %p545, %s542, 1
      %s547 = smul.addr %s544, 2
      %s548 = sadd.s32 %s546, %s547
      %s549 = smul.addr %s548, 4
      %s550 = scalar_lea.vmem %s13, %s549
      %s551 = smul.u32 2, %s29
      %v552 = vld [vmem:[%s520] sm:$0xff]
      %v553 = vld [vmem:[%s530] sm:$0xff]
      %v554 = vadd.f32 %v552, %v553
      %v555 = vld [vmem:[%s540] sm:$0xff]
      %v556 = vld [vmem:[%s3] sm:$0xf]
      %v557 = vld [vmem:[%s4] sm:$0xf]
      %559 = vset.pattern.permute.xlu0 0
      %560 = vperm.xlu0 %559, %v557
      %v561 = vpop.permute.xlu0 %560
      %564 = vst [vmem:[#allocation1] ss:$2 sm:$0xff] %v554
      %v565 = vld.sshfl [vmem:[#allocation1] sm:$0xff pattern:$0x75316420]
      %v566 = vld.sshfl [vmem:[#allocation1 + $0x8] sm:$0xff pattern:$0x75316420]
      %vm567 = vcmask 31744
      %v569 = vsel %vm567, %v556, 0
      %vm571 = vcmask 1043456
      %v572 = vsel %vm571, %v565, 0
      %v574 = vsel %vm571, %v566, 0
      %576 = vmatpush.msra.mxu0 0.0
      %577 = vmatpush.msra.mxu0 0.0
      %578 = vmatpush.msra.mxu0 0.0
      %579 = vmatpush.msra.mxu0 0.0
      %580 = vmatpush.msra.mxu0 0.0
      %581 = vmatpush.msra.mxu0 0.0
      %582 = vmatpush.msra.mxu0 0.0
      %583 = vmatpush.msra.mxu0 0.0
      %584 = vmatpush.msra.mxu0 0.0
      %585 = vmatpush.msra.mxu0 0.0
      %586 = vmatpush.msra.mxu0 0.0
      %587 = vmatpush.msra.mxu0 0.0
      %588 = vmatpush.msra.mxu0 0.0
      %589 = vmatpush.msra.mxu0 0.0
      %590 = vmatpush.msra.mxu0 0.0
      %591 = vmatpush.msra.mxu0 %v572
      %592 = vmatmul.f32.gmra.mxu0 %v569
      %v593 = vpop.f32.mrf.mxu0
      %v594 = vadd.f32 %v561, %v593
      %595 = vdwg.mxu0
      %596 = vmatpush.msra.mxu0 0.0
      %597 = vmatpush.msra.mxu0 0.0
      %598 = vmatpush.msra.mxu0 0.0
      %599 = vmatpush.msra.mxu0 0.0
      %600 = vmatpush.msra.mxu0 0.0
      %601 = vmatpush.msra.mxu0 0.0
      %602 = vmatpush.msra.mxu0 0.0
      %603 = vmatpush.msra.mxu0 0.0
      %604 = vmatpush.msra.mxu0 0.0
      %605 = vmatpush.msra.mxu0 0.0
      %606 = vmatpush.msra.mxu0 0.0
      %607 = vmatpush.msra.mxu0 0.0
      %608 = vmatpush.msra.mxu0 0.0
      %609 = vmatpush.msra.mxu0 0.0
      %610 = vmatpush.msra.mxu0 0.0
      %611 = vmatpush.msra.mxu0 %v574
      %612 = vmatmul.f32.gmra.mxu0 %v569
      %v613 = vpop.f32.mrf.mxu0
      %v614 = vadd.f32 %v561, %v613
      %615 = vdwg.mxu0
      %v616 = vld [vmem:[%s5] sm:$0xf]
      %618 = vset.pattern.permute.xlu0 0
      %619 = vperm.xlu0 %618, %v616
      %v620 = vpop.permute.xlu0 %619
      %v622 = vmul.f32 %v594, %v620
      %v623 = vmul.f32 %v614, %v620
      %v626 = vrot.slane %v623, 4
      %v627 = vsel %vm571, %v622, %v626
      %v629 = vadd.f32 %v555, %v627
      %631 = vst [vmem:[#allocation1] ss:$2 sm:$0xff] %v629
      %v632 = vld.sshfl [vmem:[#allocation1] sm:$0xff pattern:$0x75316420]
      %v633 = vld.sshfl [vmem:[#allocation1 + $0x8] sm:$0xff pattern:$0x75316420]
      %v636 = vsel %vm571, %v632, 0.0
      %v637 = vrot.slane %v636, 4
      %v638 = vadd.f32 %v636, %v637
      %v639 = vrot.slane %v638, 2
      %v640 = vadd.f32 %v638, %v639
      %v641 = vrot.slane %v640, 1
      %v642 = vadd.f32 %v640, %v641
      %v643 = vsel %vm571, %v633, 0.0
      %v644 = vrot.slane %v643, 4
      %v645 = vadd.f32 %v643, %v644
      %v646 = vrot.slane %v645, 2
      %v647 = vadd.f32 %v645, %v646
      %v648 = vrot.slane %v647, 1
      %v649 = vadd.f32 %v647, %v648
      %v650 = vrcp.pop 4.0
      %v651 = vmul.f32 4.0, %v650
      %v652 = vsub.f32 1.0, %v651
      %v653 = vmul.f32 %v650, %v652
      %v654 = vadd.f32 %v650, %v653
      %vm655 = vweird.f32 %v650
      %v656 = vsel %vm655, %v650, %v654
      %v657 = vmul.f32 %v642, %v656
      %v658 = vmul.f32 %v649, %v656
      %v661 = vrot.slane %v658, 4
      %v662 = vsel %vm571, %v657, %v661
      %v664 = vsub.f32 %v629, %v662
      %v665 = vmul.f32 %v664, %v664
      %667 = vst [vmem:[#allocation1] ss:$2 sm:$0xff] %v665
      %v668 = vld.sshfl [vmem:[#allocation1] sm:$0xff pattern:$0x75316420]
      %v669 = vld.sshfl [vmem:[#allocation1 + $0x8] sm:$0xff pattern:$0x75316420]
      %v672 = vsel %vm571, %v668, 0.0
      %v673 = vrot.slane %v672, 4
      %v674 = vadd.f32 %v672, %v673
      %v675 = vrot.slane %v674, 2
      %v676 = vadd.f32 %v674, %v675
      %v677 = vrot.slane %v676, 1
      %v678 = vadd.f32 %v676, %v677
      %v679 = vsel %vm571, %v669, 0.0
      %v680 = vrot.slane %v679, 4
      %v681 = vadd.f32 %v679, %v680
      %v682 = vrot.slane %v681, 2
      %v683 = vadd.f32 %v681, %v682
      %v684 = vrot.slane %v683, 1
      %v685 = vadd.f32 %v683, %v684
      %v686 = vmul.f32 %v678, %v656
      %v687 = vmul.f32 %v685, %v656
      %v688 = vadd.f32 %v686, 1e-06
      %v689 = vadd.f32 %v687, 1e-06
      %v690 = vrsqrt.pop %v688
      %v691 = vmul.f32 %v690, %v688
      %v692 = vmul.f32 %v691, %v690
      %v693 = vmul.f32 0.5, %v692
      %v694 = vsub.f32 1.5, %v693
      %v695 = vmul.f32 %v690, %v694
      %vm696 = vweird.f32 %v688
      %vm697 = vweird.f32 %v690
      %vm698 = vmor %vm696, %vm697
      %v699 = vsel %vm698, %v690, %v695
      %v700 = vrsqrt.pop %v689
      %v701 = vmul.f32 %v700, %v689
      %v702 = vmul.f32 %v701, %v700
      %v703 = vmul.f32 0.5, %v702
      %v704 = vsub.f32 1.5, %v703
      %v705 = vmul.f32 %v700, %v704
      %vm706 = vweird.f32 %v689
      %vm707 = vweird.f32 %v700
      %vm708 = vmor %vm706, %vm707
      %v709 = vsel %vm708, %v700, %v705
      %v712 = vrot.slane %v709, 4
      %v713 = vsel %vm571, %v699, %v712
      %v715 = vmul.f32 %v664, %v713
      %v716 = vld [vmem:[%s6] sm:$0xf]
      %718 = vset.pattern.permute.xlu0 0
      %719 = vperm.xlu0 %718, %v716
      %v720 = vpop.permute.xlu0 %719
      %v722 = vunpack.c.l.s4 839922192
      %v723 = vunpack.c.0.s8 %v722
      %v724 = vperm.slane %v720, %v723
      %v726 = vmul.f32 %v715, %v724
      %v727 = vld [vmem:[%s7] sm:$0xf]
      %729 = vset.pattern.permute.xlu0 0
      %730 = vperm.xlu0 %729, %v727
      %v731 = vpop.permute.xlu0 %730
      %v733 = vunpack.c.l.s4 839922192
      %v734 = vunpack.c.0.s8 %v733
      %v735 = vperm.slane %v731, %v734
      %v737 = vadd.f32 %v726, %v735
      %v738 = vld [vmem:[%s8] sm:$0xff]
      %v739 = vld [vmem:[%s9] sm:$0xff]
      %741 = vset.pattern.permute.xlu0 0
      %742 = vperm.xlu0 %741, %v739
      %v743 = vpop.permute.xlu0 %742
      %746 = vst [vmem:[#allocation1] ss:$2 sm:$0xff] %v737
      %v747 = vld.sshfl [vmem:[#allocation1] sm:$0xff pattern:$0x75316420]
      %v748 = vld.sshfl [vmem:[#allocation1 + $0x8] sm:$0xff pattern:$0x75316420]
      %v750 = vsel %vm567, %v738, 0
      %v752 = vsel %vm571, %v747, 0
      %v754 = vsel %vm571, %v748, 0
      %756 = vmatpush.msra.mxu0 0.0
      %757 = vmatpush.msra.mxu0 0.0
      %758 = vmatpush.msra.mxu0 0.0
      %759 = vmatpush.msra.mxu0 0.0
      %760 = vmatpush.msra.mxu0 0.0
      %761 = vmatpush.msra.mxu0 0.0
      %762 = vmatpush.msra.mxu0 0.0
      %763 = vmatpush.msra.mxu0 0.0
      %764 = vmatpush.msra.mxu0 0.0
      %765 = vmatpush.msra.mxu0 0.0
      %766 = vmatpush.msra.mxu0 0.0
      %767 = vmatpush.msra.mxu0 0.0
      %768 = vmatpush.msra.mxu0 0.0
      %769 = vmatpush.msra.mxu0 0.0
      %770 = vmatpush.msra.mxu0 0.0
      %771 = vmatpush.msra.mxu0 %v752
      %772 = vmatmul.f32.gmra.mxu0 %v750
      %v773 = vpop.f32.mrf.mxu0
      %v774 = vadd.f32 %v743, %v773
      %775 = vdwg.mxu0
      %776 = vmatpush.msra.mxu0 0.0
      %777 = vmatpush.msra.mxu0 0.0
      %778 = vmatpush.msra.mxu0 0.0
      %779 = vmatpush.msra.mxu0 0.0
      %780 = vmatpush.msra.mxu0 0.0
      %781 = vmatpush.msra.mxu0 0.0
      %782 = vmatpush.msra.mxu0 0.0
      %783 = vmatpush.msra.mxu0 0.0
      %784 = vmatpush.msra.mxu0 0.0
      %785 = vmatpush.msra.mxu0 0.0
      %786 = vmatpush.msra.mxu0 0.0
      %787 = vmatpush.msra.mxu0 0.0
      %788 = vmatpush.msra.mxu0 0.0
      %789 = vmatpush.msra.mxu0 0.0
      %790 = vmatpush.msra.mxu0 0.0
      %791 = vmatpush.msra.mxu0 %v754
      %792 = vmatmul.f32.gmra.mxu0 %v750
      %v793 = vpop.f32.mrf.mxu0
      %v794 = vadd.f32 %v743, %v793
      %795 = vdwg.mxu0
      %v798 = vrot.slane %v774, 4
      %v799 = vrot.slane %v794, 4
      %v802 = vmul.f32 %v774, %v798
      %v803 = vmul.f32 %v794, %v799
      %v804 = vld [vmem:[%s10] sm:$0xf]
      %v805 = vld [vmem:[%s11] sm:$0xf]
      %807 = vset.pattern.permute.xlu0 0
      %808 = vperm.xlu0 %807, %v805
      %v809 = vpop.permute.xlu0 %808
      %v812 = vsel %vm567, %v804, 0
      %v815 = vsel %vm571, %v802, 0
      %v818 = vsel %vm571, %v803, 0
      %820 = vmatpush.msra.mxu0 0.0
      %821 = vmatpush.msra.mxu0 0.0
      %822 = vmatpush.msra.mxu0 0.0
      %823 = vmatpush.msra.mxu0 0.0
      %824 = vmatpush.msra.mxu0 0.0
      %825 = vmatpush.msra.mxu0 0.0
      %826 = vmatpush.msra.mxu0 0.0
      %827 = vmatpush.msra.mxu0 0.0
      %828 = vmatpush.msra.mxu0 0.0
      %829 = vmatpush.msra.mxu0 0.0
      %830 = vmatpush.msra.mxu0 0.0
      %831 = vmatpush.msra.mxu0 0.0
      %832 = vmatpush.msra.mxu0 0.0
      %833 = vmatpush.msra.mxu0 0.0
      %834 = vmatpush.msra.mxu0 0.0
      %835 = vmatpush.msra.mxu0 %v815
      %836 = vmatmul.f32.gmra.mxu0 %v812
      %v837 = vpop.f32.mrf.mxu0
      %v838 = vadd.f32 %v809, %v837
      %839 = vdwg.mxu0
      %840 = vmatpush.msra.mxu0 0.0
      %841 = vmatpush.msra.mxu0 0.0
      %842 = vmatpush.msra.mxu0 0.0
      %843 = vmatpush.msra.mxu0 0.0
      %844 = vmatpush.msra.mxu0 0.0
      %845 = vmatpush.msra.mxu0 0.0
      %846 = vmatpush.msra.mxu0 0.0
      %847 = vmatpush.msra.mxu0 0.0
      %848 = vmatpush.msra.mxu0 0.0
      %849 = vmatpush.msra.mxu0 0.0
      %850 = vmatpush.msra.mxu0 0.0
      %851 = vmatpush.msra.mxu0 0.0
      %852 = vmatpush.msra.mxu0 0.0
      %853 = vmatpush.msra.mxu0 0.0
      %854 = vmatpush.msra.mxu0 0.0
      %855 = vmatpush.msra.mxu0 %v818
      %856 = vmatmul.f32.gmra.mxu0 %v812
      %v857 = vpop.f32.mrf.mxu0
      %v858 = vadd.f32 %v809, %v857
      %859 = vdwg.mxu0
      %v860 = vld [vmem:[%s12] sm:$0xf]
      %862 = vset.pattern.permute.xlu0 0
      %863 = vperm.xlu0 %862, %v860
      %v864 = vpop.permute.xlu0 %863
      %v866 = vmul.f32 %v838, %v864
      %v867 = vmul.f32 %v858, %v864
      %v870 = vrot.slane %v867, 4
      %v871 = vsel %vm571, %v866, %v870
      %v873 = vadd.f32 %v629, %v871
      %874 = vst [vmem:[%s550] sm:$0xff] %v873
      %s875 = smul.u32 2, %s29
      %p876 = scmp.lt.s32.totalorder %s28, 1
      %s877 = scalar_select %p876, %s28, 1
      %p878 = scmp.lt.s32.totalorder %s875, 1
      %s879 = scalar_select %p878, %s875, 1
      %s880 = smul.addr %s877, 2
      %s881 = sadd.s32 %s879, %s880
      %s882 = smul.addr %s881, 4
      %s883 = scalar_lea.vmem %s13, %s882
      // Predicated region
      $region73: #{aff_block.7} parent=71 // pred_check
        %p884 = pneg %p350
      $region74: #{aff_block.7} parent=71 // pred_check_branch
        %886 = sbr.rel (%p884) target = $region76
      $region75: #{aff_block.7} parent=71 // pred_region
        %s887 = smul.u32 2, %s29
      $region76: #{aff_block.7} parent=71 // pred_fallthru
        _
    $region72: #{aff_block.7} parent=5 // pred_fallthru
      _
    %p888 = scmp.le.s32.totalorder 2, %s19
    // Predicated region
    $region77: #{aff_block.7} parent=5 // pred_check
      %p889 = pneg %p888
    $region78: #{aff_block.7} parent=5 // pred_check_branch
      %891 = sbr.rel (%p889) target = $region80
    $region79: #{aff_block.7} parent=5 // pred_region
      %s892 = ssub.s32 %s19, 2
      // Predicated region
      $region81: #{aff_block.7} parent=79 // pred_check
        %p893 = pneg %p356
      $region82: #{aff_block.7} parent=79 // pred_check_branch
        %895 = sbr.rel (%p893) target = $region84
      $region83: #{aff_block.7} parent=79 // pred_region
        %s896 = smul.u32 2, %s31
        %p897 = scmp.lt.s32.totalorder %s30, 1
        %s898 = scalar_select %p897, %s30, 1
        %p899 = scmp.lt.s32.totalorder %s896, 1
        %s900 = scalar_select %p899, %s896, 1
        %s901 = smul.addr %s898, 2
        %s902 = sadd.s32 %s900, %s901
        %s903 = smul.addr %s902, 4
        %s904 = scalar_lea.vmem %s13, %s903
      $region84: #{aff_block.7} parent=79 // pred_fallthru
        _
    $region80: #{aff_block.7} parent=5 // pred_fallthru
      _
  $region6: #{aff_block.7} parent=0 // loop_footer
    %s23 = sadd.s32 1, %s19
  $region7: #{aff_block.7} parent=0 // loop_footer_branch
    %18 = sbr.rel target = $region3
  $region8: #{aff_block.7} parent=0 // loop_exit
    _

</llo_original>
